<compile_context>
chip_gen: v7x
topology: tpu7x:2x2x1
jax: 0.10.0
libtpu: 0.0.40
codegen_flags: <defaults>
</compile_context>

<pallas_src>
import functools

import jax
import jax.numpy as jnp
from jax.experimental import pallas as pl
from jax.experimental.pallas import tpu as pltpu

LANE = 128  # lane width of a TPU vreg


# ----------------------------------------------------------------------------
# Kernel
# ----------------------------------------------------------------------------
def _layernorm(x, g, b, eps=1e-5):
    mu = jnp.mean(x, axis=-1, keepdims=True)
    xc = x - mu
    var = jnp.mean(xc * xc, axis=-1, keepdims=True)
    return xc * jax.lax.rsqrt(var + eps) * g + b


def _transformer_kernel(num_layers, d_model, dff,
                        x_ref, we_ref, bemb_ref,
                        wattn_ref, w1_ref, w2_ref, vec_ref,
                        wfc_ref, bfc_ref, out_ref):
    # embedding + (folded) embedding bias + positional encoding
    h = (jnp.dot(x_ref[...], we_ref[...], preferred_element_type=jnp.float32)
         + bemb_ref[...])

    # encoder layers (post-norm, ReLU FFN — PyTorch TransformerEncoderLayer
    # defaults).  Fully unrolled Python loop (static trip count).
    for l in range(num_layers):
        vec = vec_ref[l]                     # (8, LANE) lane-dense bias slab
        b_attn = vec[0:1, 0:d_model]
        g1 = vec[1:2, 0:d_model]
        t1 = vec[2:3, 0:d_model]
        f1 = vec[3:4, 0:dff]
        f2 = vec[4:5, 0:d_model]
        g2 = vec[5:6, 0:d_model]
        t2 = vec[6:7, 0:d_model]

        # seq_len == 1: attention == h @ (Wv@Wo) + (bv@Wo + bo), folded on host.
        attn = (jnp.dot(h, wattn_ref[l], preferred_element_type=jnp.float32)
                + b_attn)
        h = _layernorm(h + attn, g1, t1)

        ff = jnp.maximum(
            jnp.dot(h, w1_ref[l], preferred_element_type=jnp.float32) + f1, 0.0)
        ff = jnp.dot(ff, w2_ref[l], preferred_element_type=jnp.float32) + f2
        h = _layernorm(h + ff, g2, t2)

    # lane-dense classifier (zero-padded to 128 output columns)
    out_ref[...] = (jnp.dot(h, wfc_ref[...], preferred_element_type=jnp.float32)
                    + bfc_ref[...])


# ----------------------------------------------------------------------------
# Host-side folding / packing
# ----------------------------------------------------------------------------
def _pad_last(a, width):
    return jnp.pad(a, [(0, 0)] * (a.ndim - 1) + [(0, width - a.shape[-1])])


def pack_params(p, num_layers):
    """Fold attention / biases and pack tiny per-layer vectors lane-densely."""
    d_model = p["we"].shape[1]
    dff = p["w1"].shape[-1]
    assert d_model <= LANE and dff <= LANE, "packing assumes d_model, dff <= 128"

    # seq_len == 1  =>  attention collapses to a single affine map.
    w_attn = jnp.einsum("lij,ljk->lik", p["wv"], p["wo"],
                        precision="highest")                           # (L, d, d)
    b_attn = (jnp.einsum("lij,ljk->lik", p["bv"], p["wo"],
                         precision="highest") + p["bo"])               # (L, 1, d)

    # embedding bias + positional encoding -> one bias row
    b_emb = p["be"] + p["pos"]                                         # (1, d)

    # pack all per-layer vectors into one lane-dense (L, 8, 128) slab
    rows = [b_attn, p["g1"], p["t1"], p["f1"], p["f2"], p["g2"], p["t2"],
            jnp.zeros((num_layers, 1, LANE), jnp.float32)]
    vec = jnp.concatenate([_pad_last(r, LANE) for r in rows], axis=1)  # (L,8,128)

    # lane-dense classifier (zero-pad output width to 128)
    wfc = _pad_last(p["wfc"], LANE)
    bfc = _pad_last(p["bfc"], LANE)

    return dict(we=p["we"], bemb=b_emb, wattn=w_attn, w1=p["w1"], w2=p["w2"],
                vec=vec, wfc=wfc, bfc=bfc)


# ----------------------------------------------------------------------------
# Wrapper
# ----------------------------------------------------------------------------
def transformer_forward(x, packed, num_layers, output_size, tile_b=128):
    batch, input_size = x.shape
    d_model = packed["we"].shape[1]
    dff = packed["w1"].shape[-1]
    L = num_layers

    # Pick a tile that is a multiple of 8 (sublane) and pad batch up to it.
    tile_b = min(tile_b, max(8, ((batch + 7) // 8) * 8))
    pad_b = (-batch) % tile_b
    if pad_b:
        x = jnp.pad(x, ((0, pad_b), (0, 0)))
    padded_batch = batch + pad_b
    grid = (padded_batch // tile_b,)

    in_specs = [
        pl.BlockSpec((tile_b, input_size), lambda i: (i, 0)),      # x (streamed)
        pl.BlockSpec((input_size, d_model), lambda i: (0, 0)),     # we
        pl.BlockSpec((1, d_model), lambda i: (0, 0)),              # folded bias
        pl.BlockSpec((L, d_model, d_model), lambda i: (0, 0, 0)),  # W_attn stack
        pl.BlockSpec((L, d_model, dff), lambda i: (0, 0, 0)),      # W1 stack
        pl.BlockSpec((L, dff, d_model), lambda i: (0, 0, 0)),      # W2 stack
        pl.BlockSpec((L, 8, LANE), lambda i: (0, 0, 0)),           # vec slab
        pl.BlockSpec((d_model, LANE), lambda i: (0, 0)),           # wfc (padded)
        pl.BlockSpec((1, LANE), lambda i: (0, 0)),                 # bfc (padded)
    ]
    out_specs = pl.BlockSpec((tile_b, LANE), lambda i: (i, 0))
    out_shape = jax.ShapeDtypeStruct((padded_batch, LANE), jnp.float32)

    out = pl.pallas_call(
        functools.partial(_transformer_kernel, num_layers, d_model, dff),
        grid=grid,
        in_specs=in_specs,
        out_specs=out_specs,
        out_shape=out_shape,
        compiler_params=pltpu.CompilerParams(
            dimension_semantics=("parallel",)),  # shard batch tiles across TCs
    )(x, packed["we"], packed["bemb"], packed["wattn"], packed["w1"],
      packed["w2"], packed["vec"], packed["wfc"], packed["bfc"])

    # strip batch padding and the lane padding down to the real output width
    return out[:batch, :output_size]


# ----------------------------------------------------------------------------
# Pure-JAX reference (full multi-head attention, including Q/K + softmax)
# ----------------------------------------------------------------------------
def reference_forward(x, p, num_layers, nhead):
    d_model = p["we"].shape[1]
    hd = d_model // nhead
    B = x.shape[0]

    h = x @ p["we"] + p["be"] + p["pos"]
    for l in range(num_layers):
        q = h @ p["wq"][l] + p["bq"][l]
        k = h @ p["wk"][l] + p["bk"][l]
        v = h @ p["wv"][l] + p["bv"][l]
        qh = q.reshape(B, nhead, hd)
        kh = k.reshape(B, nhead, hd)
        vh = v.reshape(B, nhead, hd)
        s = jnp.sum(qh * kh, axis=-1, keepdims=True) / jnp.sqrt(float(hd))
        w = jax.nn.softmax(s, axis=-1)  # single key -> ones
        ctx = (w * vh).reshape(B, d_model)
        attn = ctx @ p["wo"][l] + p["bo"][l]
        h = _layernorm(h + attn, p["g1"][l], p["t1"][l])
        ff = jnp.maximum(h @ p["w1"][l] + p["f1"][l], 0.0) @ p["w2"][l] + p["f2"][l]
        h = _layernorm(h + ff, p["g2"][l], p["t2"][l])
    return h @ p["wfc"] + p["bfc"]


# ----------------------------------------------------------------------------
# Deterministic parameter init
# ----------------------------------------------------------------------------
def init_params(key, input_size, d_model, num_layers, dff, output_size):
    n_keys = 5 + num_layers * 12
    ks = list(jax.random.split(key, n_keys))
    ki = iter(ks)

    def nrm(shape, scale=0.05):
        return scale * jax.random.normal(next(ki), shape, dtype=jnp.float32)

    p = {
        "we": nrm((input_size, d_model)),
        "be": nrm((1, d_model)),
        "pos": nrm((1, d_model)),
        "wfc": nrm((d_model, output_size)),
        "bfc": nrm((1, output_size)),
    }

    per_layer = {k: [] for k in
                 ["wq", "bq", "wk", "bk", "wv", "bv", "wo", "bo",
                  "g1", "t1", "w1", "f1", "w2", "f2", "g2", "t2"]}
    for _ in range(num_layers):
        per_layer["wq"].append(nrm((d_model, d_model)))
        per_layer["bq"].append(nrm((1, d_model)))
        per_layer["wk"].append(nrm((d_model, d_model)))
        per_layer["bk"].append(nrm((1, d_model)))
        per_layer["wv"].append(nrm((d_model, d_model)))
        per_layer["bv"].append(nrm((1, d_model)))
        per_layer["wo"].append(nrm((d_model, d_model)))
        per_layer["bo"].append(nrm((1, d_model)))
        per_layer["g1"].append(jnp.ones((1, d_model), jnp.float32))
        per_layer["t1"].append(jnp.zeros((1, d_model), jnp.float32))
        per_layer["w1"].append(nrm((d_model, dff)))
        per_layer["f1"].append(nrm((1, dff)))
        per_layer["w2"].append(nrm((dff, d_model)))
        per_layer["f2"].append(nrm((1, d_model)))
        per_layer["g2"].append(jnp.ones((1, d_model), jnp.float32))
        per_layer["t2"].append(jnp.zeros((1, d_model), jnp.float32))

    for k, vals in per_layer.items():
        p[k] = jnp.stack(vals, axis=0)  # (L, 1, d) or (L, in, out)
    return p


# ----------------------------------------------------------------------------
if __name__ == "__main__":
    # TransformerModel(input_size=16, d_model=32, nhead=4,
    #                  num_encoder_layers=2, dim_feedforward=64, output_size=5)
    BATCH, INPUT_SIZE, D_MODEL = 256, 16, 32
    NHEAD, NUM_LAYERS, DFF, OUTPUT_SIZE = 4, 2, 64, 5
    TILE_B = 128  # batch tile per grid step; grid=(2,) marked "parallel"

    key = jax.random.PRNGKey(0)
    kx, kp = jax.random.split(key)
    x = jax.random.normal(kx, (BATCH, INPUT_SIZE), dtype=jnp.float32)
    params = init_params(kp, INPUT_SIZE, D_MODEL, NUM_LAYERS, DFF, OUTPUT_SIZE)

    # TODO(synk): Dropout(p=0.1) is identity here (inference-mode forward only).
    packed = pack_params(params, NUM_LAYERS)
    out = transformer_forward(x, packed, NUM_LAYERS, OUTPUT_SIZE, tile_b=TILE_B)
    out = jax.block_until_ready(out)

    ref = reference_forward(x, params, NUM_LAYERS, NHEAD)
    assert out.shape == (BATCH, OUTPUT_SIZE)
    max_err = float(jnp.max(jnp.abs(out - ref)))
    assert jnp.allclose(out, ref, rtol=2e-3, atol=2e-3), (
        f"max abs err = {max_err}")

    print("KERNEL_OK")
</pallas_src>

<mosaic_0001>
module attributes {stable_mosaic.version = 11 : i64} {
  func.func @_transformer_kernel(%arg0: i32, %arg1: memref<128x16xf32, #tpu.memory_space<vmem>>, %arg2: memref<16x32xf32, #tpu.memory_space<vmem>>, %arg3: memref<1x32xf32, #tpu.memory_space<vmem>>, %arg4: memref<2x32x32xf32, #tpu.memory_space<vmem>>, %arg5: memref<2x32x64xf32, #tpu.memory_space<vmem>>, %arg6: memref<2x64x32xf32, #tpu.memory_space<vmem>>, %arg7: memref<2x8x128xf32, #tpu.memory_space<vmem>>, %arg8: memref<32x128xf32, #tpu.memory_space<vmem>>, %arg9: memref<1x128xf32, #tpu.memory_space<vmem>>, %arg10: memref<128x128xf32, #tpu.memory_space<vmem>>) attributes {dimension_semantics = [#tpu.dimension_semantics<parallel>], iteration_bounds = array<i64: 2>, scalar_prefetch = 0 : i64, scratch_operands = 0 : i64, tpu.core_type = #tpu.core_type<tc>, window_params = [{transform_indices = @transform_0, window_bounds = array<i64: 128, 16>}, {pipeline_mode = #tpu.pipeline_mode<synchronous>, transform_indices = @transform_1, window_bounds = array<i64: 16, 32>}, {pipeline_mode = #tpu.pipeline_mode<synchronous>, transform_indices = @transform_2, window_bounds = array<i64: 1, 32>}, {pipeline_mode = #tpu.pipeline_mode<synchronous>, transform_indices = @transform_3, window_bounds = array<i64: 2, 32, 32>}, {pipeline_mode = #tpu.pipeline_mode<synchronous>, transform_indices = @transform_4, window_bounds = array<i64: 2, 32, 64>}, {pipeline_mode = #tpu.pipeline_mode<synchronous>, transform_indices = @transform_5, window_bounds = array<i64: 2, 64, 32>}, {pipeline_mode = #tpu.pipeline_mode<synchronous>, transform_indices = @transform_6, window_bounds = array<i64: 2, 8, 128>}, {pipeline_mode = #tpu.pipeline_mode<synchronous>, transform_indices = @transform_7, window_bounds = array<i64: 32, 128>}, {pipeline_mode = #tpu.pipeline_mode<synchronous>, transform_indices = @transform_8, window_bounds = array<i64: 1, 128>}, {transform_indices = @transform_9, window_bounds = array<i64: 128, 128>}]} {
    %c0 = arith.constant 0 : index
    %c0_0 = arith.constant 0 : index
    %0 = vector.load %arg1[%c0, %c0_0] : memref<128x16xf32, #tpu.memory_space<vmem>>, vector<128x16xf32>
    %c0_1 = arith.constant 0 : index
    %c0_2 = arith.constant 0 : index
    %1 = vector.load %arg2[%c0_1, %c0_2] : memref<16x32xf32, #tpu.memory_space<vmem>>, vector<16x32xf32>
    %cst = arith.constant dense<0.000000e+00> : vector<128x32xf32>
    %2 = tpu.matmul %0, %1, %cst {dimension_numbers = #tpu.dot_dimension_numbers<[1], [0], [0], [1], [0, 0, 1, 1], [], []>} : vector<128x16xf32>, vector<16x32xf32>, vector<128x32xf32> -> vector<128x32xf32>
    %c0_3 = arith.constant 0 : index
    %c0_4 = arith.constant 0 : index
    %3 = vector.load %arg3[%c0_3, %c0_4] : memref<1x32xf32, #tpu.memory_space<vmem>>, vector<1x32xf32>
    %4 = vector.broadcast %3 : vector<1x32xf32> to vector<128x32xf32>
    %5 = arith.addf %2, %4 : vector<128x32xf32>
    %c0_5 = arith.constant 0 : index
    %c0_6 = arith.constant 0 : index
    %c0_7 = arith.constant 0 : index
    %6 = vector.load %arg7[%c0_5, %c0_6, %c0_7] : memref<2x8x128xf32, #tpu.memory_space<vmem>>, vector<1x8x128xf32>
    %7 = vector.shape_cast %6 : vector<1x8x128xf32> to vector<8x128xf32>
    %8 = vector.extract_strided_slice %7 {offsets = [0, 0], sizes = [1, 32], strides = [1, 1]} : vector<8x128xf32> to vector<1x32xf32>
    %9 = vector.extract_strided_slice %7 {offsets = [1, 0], sizes = [1, 32], strides = [1, 1]} : vector<8x128xf32> to vector<1x32xf32>
    %10 = vector.extract_strided_slice %7 {offsets = [2, 0], sizes = [1, 32], strides = [1, 1]} : vector<8x128xf32> to vector<1x32xf32>
    %11 = vector.extract_strided_slice %7 {offsets = [3, 0], sizes = [1, 64], strides = [1, 1]} : vector<8x128xf32> to vector<1x64xf32>
    %12 = vector.extract_strided_slice %7 {offsets = [4, 0], sizes = [1, 32], strides = [1, 1]} : vector<8x128xf32> to vector<1x32xf32>
    %13 = vector.extract_strided_slice %7 {offsets = [5, 0], sizes = [1, 32], strides = [1, 1]} : vector<8x128xf32> to vector<1x32xf32>
    %14 = vector.extract_strided_slice %7 {offsets = [6, 0], sizes = [1, 32], strides = [1, 1]} : vector<8x128xf32> to vector<1x32xf32>
    %c0_8 = arith.constant 0 : index
    %c0_9 = arith.constant 0 : index
    %c0_10 = arith.constant 0 : index
    %15 = vector.load %arg4[%c0_8, %c0_9, %c0_10] : memref<2x32x32xf32, #tpu.memory_space<vmem>>, vector<1x32x32xf32>
    %16 = vector.shape_cast %15 : vector<1x32x32xf32> to vector<32x32xf32>
    %cst_11 = arith.constant dense<0.000000e+00> : vector<128x32xf32>
    %17 = tpu.matmul %5, %16, %cst_11 {dimension_numbers = #tpu.dot_dimension_numbers<[1], [0], [0], [1], [0, 0, 1, 1], [], []>} : vector<128x32xf32>, vector<32x32xf32>, vector<128x32xf32> -> vector<128x32xf32>
    %18 = vector.broadcast %8 : vector<1x32xf32> to vector<128x32xf32>
    %19 = arith.addf %17, %18 : vector<128x32xf32>
    %20 = arith.addf %5, %19 : vector<128x32xf32>
    %cst_12 = arith.constant dense<0.000000e+00> : vector<128xf32>
    %21 = vector.multi_reduction <add>, %20, %cst_12 [1] : vector<128x32xf32> to vector<128xf32>
    %22 = vector.shape_cast %21 : vector<128xf32> to vector<128x1xf32>
    %cst_13 = arith.constant 3.200000e+01 : f32
    %23 = vector.broadcast %cst_13 : f32 to vector<128x1xf32>
    %24 = arith.divf %22, %23 : vector<128x1xf32>
    %25 = vector.broadcast %24 : vector<128x1xf32> to vector<128x32xf32>
    %26 = arith.subf %20, %25 : vector<128x32xf32>
    %27 = arith.mulf %26, %26 : vector<128x32xf32>
    %cst_14 = arith.constant dense<0.000000e+00> : vector<128xf32>
    %28 = vector.multi_reduction <add>, %27, %cst_14 [1] : vector<128x32xf32> to vector<128xf32>
    %29 = vector.shape_cast %28 : vector<128xf32> to vector<128x1xf32>
    %cst_15 = arith.constant 3.200000e+01 : f32
    %30 = vector.broadcast %cst_15 : f32 to vector<128x1xf32>
    %31 = arith.divf %29, %30 : vector<128x1xf32>
    %cst_16 = arith.constant 9.99999974E-6 : f32
    %32 = vector.broadcast %cst_16 : f32 to vector<128x1xf32>
    %33 = arith.addf %31, %32 : vector<128x1xf32>
    %34 = math.rsqrt %33 : vector<128x1xf32>
    %35 = vector.broadcast %34 : vector<128x1xf32> to vector<128x32xf32>
    %36 = arith.mulf %26, %35 : vector<128x32xf32>
    %37 = vector.broadcast %9 : vector<1x32xf32> to vector<128x32xf32>
    %38 = arith.mulf %36, %37 : vector<128x32xf32>
    %39 = vector.broadcast %10 : vector<1x32xf32> to vector<128x32xf32>
    %40 = arith.addf %38, %39 : vector<128x32xf32>
    %c0_17 = arith.constant 0 : index
    %c0_18 = arith.constant 0 : index
    %c0_19 = arith.constant 0 : index
    %41 = vector.load %arg5[%c0_17, %c0_18, %c0_19] : memref<2x32x64xf32, #tpu.memory_space<vmem>>, vector<1x32x64xf32>
    %42 = vector.shape_cast %41 : vector<1x32x64xf32> to vector<32x64xf32>
    %cst_20 = arith.constant dense<0.000000e+00> : vector<128x64xf32>
    %43 = tpu.matmul %40, %42, %cst_20 {dimension_numbers = #tpu.dot_dimension_numbers<[1], [0], [0], [1], [0, 0, 1, 1], [], []>} : vector<128x32xf32>, vector<32x64xf32>, vector<128x64xf32> -> vector<128x64xf32>
    %44 = vector.broadcast %11 : vector<1x64xf32> to vector<128x64xf32>
    %45 = arith.addf %43, %44 : vector<128x64xf32>
    %cst_21 = arith.constant 0.000000e+00 : f32
    %46 = vector.broadcast %cst_21 : f32 to vector<128x64xf32>
    %47 = arith.maximumf %45, %46 : vector<128x64xf32>
    %c0_22 = arith.constant 0 : index
    %c0_23 = arith.constant 0 : index
    %c0_24 = arith.constant 0 : index
    %48 = vector.load %arg6[%c0_22, %c0_23, %c0_24] : memref<2x64x32xf32, #tpu.memory_space<vmem>>, vector<1x64x32xf32>
    %49 = vector.shape_cast %48 : vector<1x64x32xf32> to vector<64x32xf32>
    %cst_25 = arith.constant dense<0.000000e+00> : vector<128x32xf32>
    %50 = tpu.matmul %47, %49, %cst_25 {dimension_numbers = #tpu.dot_dimension_numbers<[1], [0], [0], [1], [0, 0, 1, 1], [], []>} : vector<128x64xf32>, vector<64x32xf32>, vector<128x32xf32> -> vector<128x32xf32>
    %51 = vector.broadcast %12 : vector<1x32xf32> to vector<128x32xf32>
    %52 = arith.addf %50, %51 : vector<128x32xf32>
    %53 = arith.addf %40, %52 : vector<128x32xf32>
    %cst_26 = arith.constant dense<0.000000e+00> : vector<128xf32>
    %54 = vector.multi_reduction <add>, %53, %cst_26 [1] : vector<128x32xf32> to vector<128xf32>
    %55 = vector.shape_cast %54 : vector<128xf32> to vector<128x1xf32>
    %cst_27 = arith.constant 3.200000e+01 : f32
    %56 = vector.broadcast %cst_27 : f32 to vector<128x1xf32>
    %57 = arith.divf %55, %56 : vector<128x1xf32>
    %58 = vector.broadcast %57 : vector<128x1xf32> to vector<128x32xf32>
    %59 = arith.subf %53, %58 : vector<128x32xf32>
    %60 = arith.mulf %59, %59 : vector<128x32xf32>
    %cst_28 = arith.constant dense<0.000000e+00> : vector<128xf32>
    %61 = vector.multi_reduction <add>, %60, %cst_28 [1] : vector<128x32xf32> to vector<128xf32>
    %62 = vector.shape_cast %61 : vector<128xf32> to vector<128x1xf32>
    %cst_29 = arith.constant 3.200000e+01 : f32
    %63 = vector.broadcast %cst_29 : f32 to vector<128x1xf32>
    %64 = arith.divf %62, %63 : vector<128x1xf32>
    %cst_30 = arith.constant 9.99999974E-6 : f32
    %65 = vector.broadcast %cst_30 : f32 to vector<128x1xf32>
    %66 = arith.addf %64, %65 : vector<128x1xf32>
    %67 = math.rsqrt %66 : vector<128x1xf32>
    %68 = vector.broadcast %67 : vector<128x1xf32> to vector<128x32xf32>
    %69 = arith.mulf %59, %68 : vector<128x32xf32>
    %70 = vector.broadcast %13 : vector<1x32xf32> to vector<128x32xf32>
    %71 = arith.mulf %69, %70 : vector<128x32xf32>
    %72 = vector.broadcast %14 : vector<1x32xf32> to vector<128x32xf32>
    %73 = arith.addf %71, %72 : vector<128x32xf32>
    %c1 = arith.constant 1 : index
    %c0_31 = arith.constant 0 : index
    %c0_32 = arith.constant 0 : index
    %74 = vector.load %arg7[%c1, %c0_31, %c0_32] : memref<2x8x128xf32, #tpu.memory_space<vmem>>, vector<1x8x128xf32>
    %75 = vector.shape_cast %74 : vector<1x8x128xf32> to vector<8x128xf32>
    %76 = vector.extract_strided_slice %75 {offsets = [0, 0], sizes = [1, 32], strides = [1, 1]} : vector<8x128xf32> to vector<1x32xf32>
    %77 = vector.extract_strided_slice %75 {offsets = [1, 0], sizes = [1, 32], strides = [1, 1]} : vector<8x128xf32> to vector<1x32xf32>
    %78 = vector.extract_strided_slice %75 {offsets = [2, 0], sizes = [1, 32], strides = [1, 1]} : vector<8x128xf32> to vector<1x32xf32>
    %79 = vector.extract_strided_slice %75 {offsets = [3, 0], sizes = [1, 64], strides = [1, 1]} : vector<8x128xf32> to vector<1x64xf32>
    %80 = vector.extract_strided_slice %75 {offsets = [4, 0], sizes = [1, 32], strides = [1, 1]} : vector<8x128xf32> to vector<1x32xf32>
    %81 = vector.extract_strided_slice %75 {offsets = [5, 0], sizes = [1, 32], strides = [1, 1]} : vector<8x128xf32> to vector<1x32xf32>
    %82 = vector.extract_strided_slice %75 {offsets = [6, 0], sizes = [1, 32], strides = [1, 1]} : vector<8x128xf32> to vector<1x32xf32>
    %c1_33 = arith.constant 1 : index
    %c0_34 = arith.constant 0 : index
    %c0_35 = arith.constant 0 : index
    %83 = vector.load %arg4[%c1_33, %c0_34, %c0_35] : memref<2x32x32xf32, #tpu.memory_space<vmem>>, vector<1x32x32xf32>
    %84 = vector.shape_cast %83 : vector<1x32x32xf32> to vector<32x32xf32>
    %cst_36 = arith.constant dense<0.000000e+00> : vector<128x32xf32>
    %85 = tpu.matmul %73, %84, %cst_36 {dimension_numbers = #tpu.dot_dimension_numbers<[1], [0], [0], [1], [0, 0, 1, 1], [], []>} : vector<128x32xf32>, vector<32x32xf32>, vector<128x32xf32> -> vector<128x32xf32>
    %86 = vector.broadcast %76 : vector<1x32xf32> to vector<128x32xf32>
    %87 = arith.addf %85, %86 : vector<128x32xf32>
    %88 = arith.addf %73, %87 : vector<128x32xf32>
    %cst_37 = arith.constant dense<0.000000e+00> : vector<128xf32>
    %89 = vector.multi_reduction <add>, %88, %cst_37 [1] : vector<128x32xf32> to vector<128xf32>
    %90 = vector.shape_cast %89 : vector<128xf32> to vector<128x1xf32>
    %cst_38 = arith.constant 3.200000e+01 : f32
    %91 = vector.broadcast %cst_38 : f32 to vector<128x1xf32>
    %92 = arith.divf %90, %91 : vector<128x1xf32>
    %93 = vector.broadcast %92 : vector<128x1xf32> to vector<128x32xf32>
    %94 = arith.subf %88, %93 : vector<128x32xf32>
    %95 = arith.mulf %94, %94 : vector<128x32xf32>
    %cst_39 = arith.constant dense<0.000000e+00> : vector<128xf32>
    %96 = vector.multi_reduction <add>, %95, %cst_39 [1] : vector<128x32xf32> to vector<128xf32>
    %97 = vector.shape_cast %96 : vector<128xf32> to vector<128x1xf32>
    %cst_40 = arith.constant 3.200000e+01 : f32
    %98 = vector.broadcast %cst_40 : f32 to vector<128x1xf32>
    %99 = arith.divf %97, %98 : vector<128x1xf32>
    %cst_41 = arith.constant 9.99999974E-6 : f32
    %100 = vector.broadcast %cst_41 : f32 to vector<128x1xf32>
    %101 = arith.addf %99, %100 : vector<128x1xf32>
    %102 = math.rsqrt %101 : vector<128x1xf32>
    %103 = vector.broadcast %102 : vector<128x1xf32> to vector<128x32xf32>
    %104 = arith.mulf %94, %103 : vector<128x32xf32>
    %105 = vector.broadcast %77 : vector<1x32xf32> to vector<128x32xf32>
    %106 = arith.mulf %104, %105 : vector<128x32xf32>
    %107 = vector.broadcast %78 : vector<1x32xf32> to vector<128x32xf32>
    %108 = arith.addf %106, %107 : vector<128x32xf32>
    %c1_42 = arith.constant 1 : index
    %c0_43 = arith.constant 0 : index
    %c0_44 = arith.constant 0 : index
    %109 = vector.load %arg5[%c1_42, %c0_43, %c0_44] : memref<2x32x64xf32, #tpu.memory_space<vmem>>, vector<1x32x64xf32>
    %110 = vector.shape_cast %109 : vector<1x32x64xf32> to vector<32x64xf32>
    %cst_45 = arith.constant dense<0.000000e+00> : vector<128x64xf32>
    %111 = tpu.matmul %108, %110, %cst_45 {dimension_numbers = #tpu.dot_dimension_numbers<[1], [0], [0], [1], [0, 0, 1, 1], [], []>} : vector<128x32xf32>, vector<32x64xf32>, vector<128x64xf32> -> vector<128x64xf32>
    %112 = vector.broadcast %79 : vector<1x64xf32> to vector<128x64xf32>
    %113 = arith.addf %111, %112 : vector<128x64xf32>
    %cst_46 = arith.constant 0.000000e+00 : f32
    %114 = vector.broadcast %cst_46 : f32 to vector<128x64xf32>
    %115 = arith.maximumf %113, %114 : vector<128x64xf32>
    %c1_47 = arith.constant 1 : index
    %c0_48 = arith.constant 0 : index
    %c0_49 = arith.constant 0 : index
    %116 = vector.load %arg6[%c1_47, %c0_48, %c0_49] : memref<2x64x32xf32, #tpu.memory_space<vmem>>, vector<1x64x32xf32>
    %117 = vector.shape_cast %116 : vector<1x64x32xf32> to vector<64x32xf32>
    %cst_50 = arith.constant dense<0.000000e+00> : vector<128x32xf32>
    %118 = tpu.matmul %115, %117, %cst_50 {dimension_numbers = #tpu.dot_dimension_numbers<[1], [0], [0], [1], [0, 0, 1, 1], [], []>} : vector<128x64xf32>, vector<64x32xf32>, vector<128x32xf32> -> vector<128x32xf32>
    %119 = vector.broadcast %80 : vector<1x32xf32> to vector<128x32xf32>
    %120 = arith.addf %118, %119 : vector<128x32xf32>
    %121 = arith.addf %108, %120 : vector<128x32xf32>
    %cst_51 = arith.constant dense<0.000000e+00> : vector<128xf32>
    %122 = vector.multi_reduction <add>, %121, %cst_51 [1] : vector<128x32xf32> to vector<128xf32>
    %123 = vector.shape_cast %122 : vector<128xf32> to vector<128x1xf32>
    %cst_52 = arith.constant 3.200000e+01 : f32
    %124 = vector.broadcast %cst_52 : f32 to vector<128x1xf32>
    %125 = arith.divf %123, %124 : vector<128x1xf32>
    %126 = vector.broadcast %125 : vector<128x1xf32> to vector<128x32xf32>
    %127 = arith.subf %121, %126 : vector<128x32xf32>
    %128 = arith.mulf %127, %127 : vector<128x32xf32>
    %cst_53 = arith.constant dense<0.000000e+00> : vector<128xf32>
    %129 = vector.multi_reduction <add>, %128, %cst_53 [1] : vector<128x32xf32> to vector<128xf32>
    %130 = vector.shape_cast %129 : vector<128xf32> to vector<128x1xf32>
    %cst_54 = arith.constant 3.200000e+01 : f32
    %131 = vector.broadcast %cst_54 : f32 to vector<128x1xf32>
    %132 = arith.divf %130, %131 : vector<128x1xf32>
    %cst_55 = arith.constant 9.99999974E-6 : f32
    %133 = vector.broadcast %cst_55 : f32 to vector<128x1xf32>
    %134 = arith.addf %132, %133 : vector<128x1xf32>
    %135 = math.rsqrt %134 : vector<128x1xf32>
    %136 = vector.broadcast %135 : vector<128x1xf32> to vector<128x32xf32>
    %137 = arith.mulf %127, %136 : vector<128x32xf32>
    %138 = vector.broadcast %81 : vector<1x32xf32> to vector<128x32xf32>
    %139 = arith.mulf %137, %138 : vector<128x32xf32>
    %140 = vector.broadcast %82 : vector<1x32xf32> to vector<128x32xf32>
    %141 = arith.addf %139, %140 : vector<128x32xf32>
    %c0_56 = arith.constant 0 : index
    %c0_57 = arith.constant 0 : index
    %142 = vector.load %arg8[%c0_56, %c0_57] : memref<32x128xf32, #tpu.memory_space<vmem>>, vector<32x128xf32>
    %cst_58 = arith.constant dense<0.000000e+00> : vector<128x128xf32>
    %143 = tpu.matmul %141, %142, %cst_58 {dimension_numbers = #tpu.dot_dimension_numbers<[1], [0], [0], [1], [0, 0, 1, 1], [], []>} : vector<128x32xf32>, vector<32x128xf32>, vector<128x128xf32> -> vector<128x128xf32>
    %c0_59 = arith.constant 0 : index
    %c0_60 = arith.constant 0 : index
    %144 = vector.load %arg9[%c0_59, %c0_60] : memref<1x128xf32, #tpu.memory_space<vmem>>, vector<1x128xf32>
    %145 = vector.broadcast %144 : vector<1x128xf32> to vector<128x128xf32>
    %146 = arith.addf %143, %145 : vector<128x128xf32>
    %c0_61 = arith.constant 0 : index
    %c0_62 = arith.constant 0 : index
    %147 = vector.load %arg10[%c0_61, %c0_62] : memref<128x128xf32, #tpu.memory_space<vmem>>, vector<128x128xf32>
    tpu.vector_store %arg10[%c0_61, %c0_62], %146 {strides = array<i32>} : memref<128x128xf32, #tpu.memory_space<vmem>>, vector<128x128xf32>,
    return
  }
  func.func @transform_0(%arg0: i32) -> (i32, i32) {
    %c0_i32 = arith.constant 0 : i32
    %c0_i32_0 = arith.constant 0 : i32
    return %arg0, %c0_i32 : i32, i32
  }
  func.func @transform_1(%arg0: i32) -> (i32, i32) {
    %c0_i32 = arith.constant 0 : i32
    %c0_i32_0 = arith.constant 0 : i32
    %c0_i32_1 = arith.constant 0 : i32
    return %c0_i32, %c0_i32_0 : i32, i32
  }
  func.func @transform_2(%arg0: i32) -> (i32, i32) {
    %c0_i32 = arith.constant 0 : i32
    %c0_i32_0 = arith.constant 0 : i32
    %c0_i32_1 = arith.constant 0 : i32
    return %c0_i32, %c0_i32_0 : i32, i32
  }
  func.func @transform_3(%arg0: i32) -> (i32, i32, i32) {
    %c0_i32 = arith.constant 0 : i32
    %c0_i32_0 = arith.constant 0 : i32
    %c0_i32_1 = arith.constant 0 : i32
    %c0_i32_2 = arith.constant 0 : i32
    return %c0_i32, %c0_i32_0, %c0_i32_1 : i32, i32, i32
  }
  func.func @transform_4(%arg0: i32) -> (i32, i32, i32) {
    %c0_i32 = arith.constant 0 : i32
    %c0_i32_0 = arith.constant 0 : i32
    %c0_i32_1 = arith.constant 0 : i32
    %c0_i32_2 = arith.constant 0 : i32
    return %c0_i32, %c0_i32_0, %c0_i32_1 : i32, i32, i32
  }
  func.func @transform_5(%arg0: i32) -> (i32, i32, i32) {
    %c0_i32 = arith.constant 0 : i32
    %c0_i32_0 = arith.constant 0 : i32
    %c0_i32_1 = arith.constant 0 : i32
    %c0_i32_2 = arith.constant 0 : i32
    return %c0_i32, %c0_i32_0, %c0_i32_1 : i32, i32, i32
  }
  func.func @transform_6(%arg0: i32) -> (i32, i32, i32) {
    %c0_i32 = arith.constant 0 : i32
    %c0_i32_0 = arith.constant 0 : i32
    %c0_i32_1 = arith.constant 0 : i32
    %c0_i32_2 = arith.constant 0 : i32
    return %c0_i32, %c0_i32_0, %c0_i32_1 : i32, i32, i32
  }
  func.func @transform_7(%arg0: i32) -> (i32, i32) {
    %c0_i32 = arith.constant 0 : i32
    %c0_i32_0 = arith.constant 0 : i32
    %c0_i32_1 = arith.constant 0 : i32
    return %c0_i32, %c0_i32_0 : i32, i32
  }
  func.func @transform_8(%arg0: i32) -> (i32, i32) {
    %c0_i32 = arith.constant 0 : i32
    %c0_i32_0 = arith.constant 0 : i32
    %c0_i32_1 = arith.constant 0 : i32
    return %c0_i32, %c0_i32_0 : i32, i32
  }
  func.func @transform_9(%arg0: i32) -> (i32, i32) {
    %c0_i32 = arith.constant 0 : i32
    %c0_i32_0 = arith.constant 0 : i32
    return %arg0, %c0_i32 : i32, i32
  }
}

</mosaic_0001>

<llo_original>
// kernel: tpu_custom_call.1
$region0: #{tpu_custom_call.1}
  #allocation0 [shape = 'u32[]', space=smem, size = 0x4, offset = 0x4, fixed_abs, tag = 'smem constant byte address 0x4 - core index']
  #allocation1 [shape = 'u32[144,128]{1,0:T(1,128)}', space=vmem, size = 0x12000, scoped, tag = 'internal scratch']
  %s0 = inlined_call_operand.vmem [shape: f32[256,16], index: 0, kind: input, shape index: {}]
  %s1 = inlined_call_operand.vmem [shape: f32[16,32], index: 1, kind: input, shape index: {}]
  %s2 = inlined_call_operand.vmem [shape: f32[1,32], index: 2, kind: input, shape index: {}]
  %s3 = inlined_call_operand.vmem [shape: f32[2,32,32], index: 3, kind: input, shape index: {}]
  %s4 = inlined_call_operand.vmem [shape: f32[2,32,64], index: 4, kind: input, shape index: {}]
  %s5 = inlined_call_operand.vmem [shape: f32[2,64,32], index: 5, kind: input, shape index: {}]
  %s6 = inlined_call_operand.vmem [shape: f32[2,8,128], index: 6, kind: input, shape index: {}]
  %s7 = inlined_call_operand.vmem [shape: f32[32,128], index: 7, kind: input, shape index: {}]
  %s8 = inlined_call_operand.vmem [shape: f32[1,128], index: 8, kind: input, shape index: {}]
  %s9 = inlined_call_operand.hbm [shape: f32[256,128], index: 9, kind: output, shape index: {}]
  %s10 = sld [smem:[#allocation0]]
  $region69: #{tpu_custom_call.1} parent=0
    _
  %s12 = ssub.s32 1, %s10
  %s13 = scalar_select 0, %s12, %s10
  $region1: #{tpu_custom_call.1} parent=0
    #allocation2 [shape = 'u8[131072]{0}', space=vmem, size = 0x20000, scoped, tag = 'output window, operand 0']
    #allocation3 [shape = 's32[2]{0}', space=sflag, size = 0x8, scoped, tag = 'scoped memory for tpu_custom_call.1']
    %14 = vsyncpa [#allocation3], 0
    %s15 = scalar_lea.sflag [#allocation3], 1
    %16 = vsyncpa %s15, 0
    loop: start=0, step=1, limit=4
    $region2: #{tpu_custom_call.1} parent=1 // loop_pre_header
      _
    $region3: #{tpu_custom_call.1} parent=1 // loop_header
      %s18 = sphi 0, %s22
      %p19 = scmp.ge.s32.totalorder %s18, 4
      %s28 = sphi 0, %s30
      %s31 = sphi 0, %s28
      %s32 = sphi 0, %s31
      %s48 = sphi 0, %s32
      %s52 = sphi 0, %s52
      %s54 = sphi 0, %s52
      %s55 = sphi 0, %s54
      %s69 = sphi 0, %s55
      %s73 = sphi 0, %s73
      %s75 = sphi 0, %s73
      %s76 = sphi 0, %s75
      %s90 = sphi 0, %s76
      %s94 = sphi 0, %s94
      %s96 = sphi 0, %s94
      %s97 = sphi 0, %s96
      %s111 = sphi 0, %s97
      %s115 = sphi 0, %s115
      %s117 = sphi 0, %s115
      %s118 = sphi 0, %s117
      %s132 = sphi 0, %s118
      %s136 = sphi 0, %s136
      %s138 = sphi 0, %s136
      %s139 = sphi 0, %s138
      %s153 = sphi 0, %s139
      %s157 = sphi 0, %s157
      %s159 = sphi 0, %s157
      %s160 = sphi 0, %s159
      %s174 = sphi 0, %s160
      %s178 = sphi 0, %s178
      %s180 = sphi 0, %s178
      %s181 = sphi 0, %s180
      %s195 = sphi 0, %s181
      %s199 = sphi 0, %s199
      %s201 = sphi 0, %s199
      %s202 = sphi 0, %s201
      %s216 = sphi 0, %s202
      %s222 = sphi 0, %s224
      %s225 = sphi 0, %s222
      %s226 = sphi 0, %s225
      %s242 = sphi 0, %s226
    $region4: #{tpu_custom_call.1} parent=1 // loop_header_branch
      %21 = sbr.rel (%p19) target = $region8
    $region5: #{tpu_custom_call.1} parent=1 // loop_body
      %s23 = ssub.s32 %s18, 1
      %s24 = ssub.s32 %s18, 2
      %s25 = sadd.s32 %s18, 1
      %s26 = ssub.s32 %s18, %s25
      %p27 = scmp.eq.s32.totalorder %s26, 0
      %s29 = sadd.s32 %s28, 1
      %s30 = scalar_select %p27, %s28, %s29
      %p33 = pneg %p27
      %p34 = scmp.eq.s32.totalorder %s18, 1
      %p35 = por %p33, %p34
      %p36 = scmp.ne.s32.totalorder %s28, %s31
      %p37 = scmp.eq.s32.totalorder %s18, 0
      %p38 = por %p36, %p37
      %p39 = scmp.ne.s32.totalorder %s28, %s31
      %p40 = scmp.eq.s32.totalorder %s23, 1
      %p41 = por %p39, %p40
      %p42 = scmp.ne.s32.totalorder %s31, %s32
      %p43 = scmp.eq.s32.totalorder %s23, 0
      %p44 = por %p42, %p43
      %p45 = scmp.ne.s32.totalorder %s31, %s32
      %p46 = scmp.eq.s32.totalorder %s24, 1
      %p47 = por %p45, %p46
      %p49 = scmp.ne.s32.totalorder %s32, %s48
      %p50 = scmp.eq.s32.totalorder %s24, 0
      %p51 = por %p49, %p50
      %s53 = sadd.s32 %s52, 1
      %p56 = scmp.eq.s32.totalorder %s18, 1
      %p57 = scmp.ne.s32.totalorder %s52, %s54
      %p58 = scmp.eq.s32.totalorder %s18, 0
      %p59 = por %p57, %p58
      %p60 = scmp.ne.s32.totalorder %s52, %s54
      %p61 = scmp.eq.s32.totalorder %s23, 1
      %p62 = por %p60, %p61
      %p63 = scmp.ne.s32.totalorder %s54, %s55
      %p64 = scmp.eq.s32.totalorder %s23, 0
      %p65 = por %p63, %p64
      %p66 = scmp.ne.s32.totalorder %s54, %s55
      %p67 = scmp.eq.s32.totalorder %s24, 1
      %p68 = por %p66, %p67
      %p70 = scmp.ne.s32.totalorder %s55, %s69
      %p71 = scmp.eq.s32.totalorder %s24, 0
      %p72 = por %p70, %p71
      %s74 = sadd.s32 %s73, 1
      %p77 = scmp.eq.s32.totalorder %s18, 1
      %p78 = scmp.ne.s32.totalorder %s73, %s75
      %p79 = scmp.eq.s32.totalorder %s18, 0
      %p80 = por %p78, %p79
      %p81 = scmp.ne.s32.totalorder %s73, %s75
      %p82 = scmp.eq.s32.totalorder %s23, 1
      %p83 = por %p81, %p82
      %p84 = scmp.ne.s32.totalorder %s75, %s76
      %p85 = scmp.eq.s32.totalorder %s23, 0
      %p86 = por %p84, %p85
      %p87 = scmp.ne.s32.totalorder %s75, %s76
      %p88 = scmp.eq.s32.totalorder %s24, 1
      %p89 = por %p87, %p88
      %p91 = scmp.ne.s32.totalorder %s76, %s90
      %p92 = scmp.eq.s32.totalorder %s24, 0
      %p93 = por %p91, %p92
      %s95 = sadd.s32 %s94, 1
      %p98 = scmp.eq.s32.totalorder %s18, 1
      %p99 = scmp.ne.s32.totalorder %s94, %s96
      %p100 = scmp.eq.s32.totalorder %s18, 0
      %p101 = por %p99, %p100
      %p102 = scmp.ne.s32.totalorder %s94, %s96
      %p103 = scmp.eq.s32.totalorder %s23, 1
      %p104 = por %p102, %p103
      %p105 = scmp.ne.s32.totalorder %s96, %s97
      %p106 = scmp.eq.s32.totalorder %s23, 0
      %p107 = por %p105, %p106
      %p108 = scmp.ne.s32.totalorder %s96, %s97
      %p109 = scmp.eq.s32.totalorder %s24, 1
      %p110 = por %p108, %p109
      %p112 = scmp.ne.s32.totalorder %s97, %s111
      %p113 = scmp.eq.s32.totalorder %s24, 0
      %p114 = por %p112, %p113
      %s116 = sadd.s32 %s115, 1
      %p119 = scmp.eq.s32.totalorder %s18, 1
      %p120 = scmp.ne.s32.totalorder %s115, %s117
      %p121 = scmp.eq.s32.totalorder %s18, 0
      %p122 = por %p120, %p121
      %p123 = scmp.ne.s32.totalorder %s115, %s117
      %p124 = scmp.eq.s32.totalorder %s23, 1
      %p125 = por %p123, %p124
      %p126 = scmp.ne.s32.totalorder %s117, %s118
      %p127 = scmp.eq.s32.totalorder %s23, 0
      %p128 = por %p126, %p127
      %p129 = scmp.ne.s32.totalorder %s117, %s118
      %p130 = scmp.eq.s32.totalorder %s24, 1
      %p131 = por %p129, %p130
      %p133 = scmp.ne.s32.totalorder %s118, %s132
      %p134 = scmp.eq.s32.totalorder %s24, 0
      %p135 = por %p133, %p134
      %s137 = sadd.s32 %s136, 1
      %p140 = scmp.eq.s32.totalorder %s18, 1
      %p141 = scmp.ne.s32.totalorder %s136, %s138
      %p142 = scmp.eq.s32.totalorder %s18, 0
      %p143 = por %p141, %p142
      %p144 = scmp.ne.s32.totalorder %s136, %s138
      %p145 = scmp.eq.s32.totalorder %s23, 1
      %p146 = por %p144, %p145
      %p147 = scmp.ne.s32.totalorder %s138, %s139
      %p148 = scmp.eq.s32.totalorder %s23, 0
      %p149 = por %p147, %p148
      %p150 = scmp.ne.s32.totalorder %s138, %s139
      %p151 = scmp.eq.s32.totalorder %s24, 1
      %p152 = por %p150, %p151
      %p154 = scmp.ne.s32.totalorder %s139, %s153
      %p155 = scmp.eq.s32.totalorder %s24, 0
      %p156 = por %p154, %p155
      %s158 = sadd.s32 %s157, 1
      %p161 = scmp.eq.s32.totalorder %s18, 1
      %p162 = scmp.ne.s32.totalorder %s157, %s159
      %p163 = scmp.eq.s32.totalorder %s18, 0
      %p164 = por %p162, %p163
      %p165 = scmp.ne.s32.totalorder %s157, %s159
      %p166 = scmp.eq.s32.totalorder %s23, 1
      %p167 = por %p165, %p166
      %p168 = scmp.ne.s32.totalorder %s159, %s160
      %p169 = scmp.eq.s32.totalorder %s23, 0
      %p170 = por %p168, %p169
      %p171 = scmp.ne.s32.totalorder %s159, %s160
      %p172 = scmp.eq.s32.totalorder %s24, 1
      %p173 = por %p171, %p172
      %p175 = scmp.ne.s32.totalorder %s160, %s174
      %p176 = scmp.eq.s32.totalorder %s24, 0
      %p177 = por %p175, %p176
      %s179 = sadd.s32 %s178, 1
      %p182 = scmp.eq.s32.totalorder %s18, 1
      %p183 = scmp.ne.s32.totalorder %s178, %s180
      %p184 = scmp.eq.s32.totalorder %s18, 0
      %p185 = por %p183, %p184
      %p186 = scmp.ne.s32.totalorder %s178, %s180
      %p187 = scmp.eq.s32.totalorder %s23, 1
      %p188 = por %p186, %p187
      %p189 = scmp.ne.s32.totalorder %s180, %s181
      %p190 = scmp.eq.s32.totalorder %s23, 0
      %p191 = por %p189, %p190
      %p192 = scmp.ne.s32.totalorder %s180, %s181
      %p193 = scmp.eq.s32.totalorder %s24, 1
      %p194 = por %p192, %p193
      %p196 = scmp.ne.s32.totalorder %s181, %s195
      %p197 = scmp.eq.s32.totalorder %s24, 0
      %p198 = por %p196, %p197
      %s200 = sadd.s32 %s199, 1
      %p203 = scmp.eq.s32.totalorder %s18, 1
      %p204 = scmp.ne.s32.totalorder %s199, %s201
      %p205 = scmp.eq.s32.totalorder %s18, 0
      %p206 = por %p204, %p205
      %p207 = scmp.ne.s32.totalorder %s199, %s201
      %p208 = scmp.eq.s32.totalorder %s23, 1
      %p209 = por %p207, %p208
      %p210 = scmp.ne.s32.totalorder %s201, %s202
      %p211 = scmp.eq.s32.totalorder %s23, 0
      %p212 = por %p210, %p211
      %p213 = scmp.ne.s32.totalorder %s201, %s202
      %p214 = scmp.eq.s32.totalorder %s24, 1
      %p215 = por %p213, %p214
      %p217 = scmp.ne.s32.totalorder %s202, %s216
      %p218 = scmp.eq.s32.totalorder %s24, 0
      %p219 = por %p217, %p218
      %s220 = ssub.s32 %s18, %s25
      %p221 = scmp.eq.s32.totalorder %s220, 0
      %s223 = sadd.s32 %s222, 1
      %s224 = scalar_select %p221, %s222, %s223
      %p227 = pneg %p221
      %p228 = scmp.eq.s32.totalorder %s18, 1
      %p229 = por %p227, %p228
      %p230 = scmp.ne.s32.totalorder %s222, %s225
      %p231 = scmp.eq.s32.totalorder %s18, 0
      %p232 = por %p230, %p231
      %p233 = scmp.ne.s32.totalorder %s222, %s225
      %p234 = scmp.eq.s32.totalorder %s23, 1
      %p235 = por %p233, %p234
      %p236 = scmp.ne.s32.totalorder %s225, %s226
      %p237 = scmp.eq.s32.totalorder %s23, 0
      %p238 = por %p236, %p237
      %p239 = scmp.ne.s32.totalorder %s225, %s226
      %p240 = scmp.eq.s32.totalorder %s24, 1
      %p241 = por %p239, %p240
      %p243 = scmp.ne.s32.totalorder %s226, %s242
      %p244 = scmp.eq.s32.totalorder %s24, 0
      %p245 = por %p243, %p244
      %p246 = scmp.le.s32.totalorder 1, %s18
      %p247 = scmp.lt.s32.totalorder %s18, 3
      %p248 = pnand %p246, %p247
      %p249 = pneg %p248
      // Predicated region
      $region9: #{tpu_custom_call.1} parent=5 // pred_check
        _
      $region10: #{tpu_custom_call.1} parent=5 // pred_check_branch
        %251 = sbr.rel (%p248) target = $region12
      $region11: #{tpu_custom_call.1} parent=5 // pred_region
        %s252 = ssub.s32 %s18, 1
        // Predicated region
        $region13: #{tpu_custom_call.1} parent=11 // pred_check
          %p253 = pneg %p65
        $region14: #{tpu_custom_call.1} parent=11 // pred_check_branch
          %255 = sbr.rel (%p253) target = $region16
        $region15: #{tpu_custom_call.1} parent=11 // pred_region
          _
        $region16: #{tpu_custom_call.1} parent=11 // pred_fallthru
          _
        // Predicated region
        $region17: #{tpu_custom_call.1} parent=11 // pred_check
          %p256 = pneg %p86
        $region18: #{tpu_custom_call.1} parent=11 // pred_check_branch
          %258 = sbr.rel (%p256) target = $region20
        $region19: #{tpu_custom_call.1} parent=11 // pred_region
          _
        $region20: #{tpu_custom_call.1} parent=11 // pred_fallthru
          _
        // Predicated region
        $region21: #{tpu_custom_call.1} parent=11 // pred_check
          %p259 = pneg %p107
        $region22: #{tpu_custom_call.1} parent=11 // pred_check_branch
          %261 = sbr.rel (%p259) target = $region24
        $region23: #{tpu_custom_call.1} parent=11 // pred_region
          _
        $region24: #{tpu_custom_call.1} parent=11 // pred_fallthru
          _
        // Predicated region
        $region25: #{tpu_custom_call.1} parent=11 // pred_check
          %p262 = pneg %p128
        $region26: #{tpu_custom_call.1} parent=11 // pred_check_branch
          %264 = sbr.rel (%p262) target = $region28
        $region27: #{tpu_custom_call.1} parent=11 // pred_region
          _
        $region28: #{tpu_custom_call.1} parent=11 // pred_fallthru
          _
        // Predicated region
        $region29: #{tpu_custom_call.1} parent=11 // pred_check
          %p265 = pneg %p149
        $region30: #{tpu_custom_call.1} parent=11 // pred_check_branch
          %267 = sbr.rel (%p265) target = $region32
        $region31: #{tpu_custom_call.1} parent=11 // pred_region
          _
        $region32: #{tpu_custom_call.1} parent=11 // pred_fallthru
          _
        // Predicated region
        $region33: #{tpu_custom_call.1} parent=11 // pred_check
          %p268 = pneg %p170
        $region34: #{tpu_custom_call.1} parent=11 // pred_check_branch
          %270 = sbr.rel (%p268) target = $region36
        $region35: #{tpu_custom_call.1} parent=11 // pred_region
          _
        $region36: #{tpu_custom_call.1} parent=11 // pred_fallthru
          _
        // Predicated region
        $region37: #{tpu_custom_call.1} parent=11 // pred_check
          %p271 = pneg %p191
        $region38: #{tpu_custom_call.1} parent=11 // pred_check_branch
          %273 = sbr.rel (%p271) target = $region40
        $region39: #{tpu_custom_call.1} parent=11 // pred_region
          _
        $region40: #{tpu_custom_call.1} parent=11 // pred_fallthru
          _
        // Predicated region
        $region41: #{tpu_custom_call.1} parent=11 // pred_check
          %p274 = pneg %p212
        $region42: #{tpu_custom_call.1} parent=11 // pred_check_branch
          %276 = sbr.rel (%p274) target = $region44
        $region43: #{tpu_custom_call.1} parent=11 // pred_region
          _
        $region44: #{tpu_custom_call.1} parent=11 // pred_fallthru
          _
      $region12: #{tpu_custom_call.1} parent=5 // pred_fallthru
        _
      %p277 = scmp.lt.s32.totalorder %s18, 2
      // Predicated region
      $region45: #{tpu_custom_call.1} parent=5 // pred_check
        %p278 = pneg %p277
      $region46: #{tpu_custom_call.1} parent=5 // pred_check_branch
        %280 = sbr.rel (%p278) target = $region48
      $region47: #{tpu_custom_call.1} parent=5 // pred_region
        // Predicated region
        $region49: #{tpu_custom_call.1} parent=47 // pred_check
          %p281 = pneg %p38
        $region50: #{tpu_custom_call.1} parent=47 // pred_check_branch
          %283 = sbr.rel (%p281) target = $region52
        $region51: #{tpu_custom_call.1} parent=47 // pred_region
          %s284 = smul.u32 16, %s18
          %p285 = scmp.lt.s32.totalorder %s284, 31
          %s286 = scalar_select %p285, %s284, 31
          %s287 = smul.addr %s286, 8
          %s288 = scalar_lea.vmem %s0, %s287
          %s289 = smul.u32 16, %s18
        $region52: #{tpu_custom_call.1} parent=47 // pred_fallthru
          _
      $region48: #{tpu_custom_call.1} parent=5 // pred_fallthru
        _
      %p290 = scmp.le.s32.totalorder 1, %s18
      %p291 = scmp.lt.s32.totalorder %s18, 3
      %p292 = pnand %p290, %p291
      %p293 = pneg %p292
      // Predicated region
      $region53: #{tpu_custom_call.1} parent=5 // pred_check
        _
      $region54: #{tpu_custom_call.1} parent=5 // pred_check_branch
        %295 = sbr.rel (%p292) target = $region56
      $region55: #{tpu_custom_call.1} parent=5 // pred_region
        %s296 = ssub.s32 %s18, 1
        %s297 = smul.u32 16, %s23
        %p298 = scmp.lt.s32.totalorder %s297, 31
        %s299 = scalar_select %p298, %s297, 31
        %s300 = smul.addr %s299, 8
        %s301 = scalar_lea.vmem %s0, %s300
        %p302 = pneg %p44
        %p303 = pneg %p41
        %p304 = pneg %p65
        %p305 = pneg %p62
        %p306 = pneg %p86
        %p307 = pneg %p83
        %p308 = pneg %p107
        %p309 = pneg %p104
        %p310 = pneg %p128
        %p311 = pneg %p125
        %p312 = pneg %p149
        %p313 = pneg %p146
        %p314 = pneg %p170
        %p315 = pneg %p167
        %p316 = pneg %p191
        %p317 = pneg %p188
        %p318 = pneg %p212
        %p319 = pneg %p209
        %p320 = pneg %p238
        %p321 = pneg %p235
        %s322 = sand.u32 %s225, 1
        %s323 = scalar_lea.sflag [#allocation3], %s322
        %s324 = sand.u32 %s225, 1
        %s325 = smul.addr %s324, 128
        %s326 = scalar_lea.vmem [#allocation2], %s325
        %s327 = smul.u32 16, %s23
        %p328 = scmp.lt.s32.totalorder %s327, 31
        %s329 = scalar_select %p328, %s327, 31
        %s330 = smul.addr %s329, 8
        %s331 = scalar_lea.vmem %s0, %s330
        %s332 = smul.u32 16, %s23
        %s333 = smul.u32 16, %s23
        %v334 = vld [vmem:[%s331] sm:$0xff]
        %v335 = vld [vmem:[%s331 + $0x8] sm:$0xff]
        %v336 = vld [vmem:[%s331 + $0x10] sm:$0xff]
        %v337 = vld [vmem:[%s331 + $0x18] sm:$0xff]
        %v338 = vld [vmem:[%s331 + $0x20] sm:$0xff]
        %v339 = vld [vmem:[%s331 + $0x28] sm:$0xff]
        %v340 = vld [vmem:[%s331 + $0x30] sm:$0xff]
        %v341 = vld [vmem:[%s331 + $0x38] sm:$0xff]
        %v342 = vld [vmem:[%s331 + $0x40] sm:$0xff]
        %v343 = vld [vmem:[%s331 + $0x48] sm:$0xff]
        %v344 = vld [vmem:[%s331 + $0x50] sm:$0xff]
        %v345 = vld [vmem:[%s331 + $0x58] sm:$0xff]
        %v346 = vld [vmem:[%s331 + $0x60] sm:$0xff]
        %v347 = vld [vmem:[%s331 + $0x68] sm:$0xff]
        %v348 = vld [vmem:[%s331 + $0x70] sm:$0xff]
        %v349 = vld [vmem:[%s331 + $0x78] sm:$0xff]
        %v350 = vld [vmem:[%s1] sm:$0xff]
        %v351 = vld [vmem:[%s1 + $0x8] sm:$0xff]
        %v352 = vld [vmem:[%s2] sm:$0x1]
        %v354 = vlaneseq
        %v355 = vshrl.u32 %v354, 7
        %v356 = vsub.s32 0, %v355
        %v357 = vrot.slane %v352, %v356
        %vm359 = vcmask 130048
        %v361 = vsel %vm359, %v334, 0
        %v364 = vsel %vm359, %v335, 0
        %v367 = vsel %vm359, %v336, 0
        %v370 = vsel %vm359, %v337, 0
        %v373 = vsel %vm359, %v338, 0
        %v376 = vsel %vm359, %v339, 0
        %v379 = vsel %vm359, %v340, 0
        %v382 = vsel %vm359, %v341, 0
        %v385 = vsel %vm359, %v342, 0
        %v388 = vsel %vm359, %v343, 0
        %v391 = vsel %vm359, %v344, 0
        %v394 = vsel %vm359, %v345, 0
        %v397 = vsel %vm359, %v346, 0
        %v400 = vsel %vm359, %v347, 0
        %v403 = vsel %vm359, %v348, 0
        %v406 = vsel %vm359, %v349, 0
        %408 = vmatprep.subr.mxu0 0.0
        %409 = vmatpush1.msra.mxu0 %v350
        %410 = vmatprep.subr.mxu0 0.0
        %411 = vmatpush1.msra.mxu0 %v351
        %412 = vmatprep.subr.mxu0 0.0
        %413 = vmatpush1.msra.mxu0 0.0
        %414 = vmatprep.subr.mxu0 0.0
        %415 = vmatpush1.msra.mxu0 0.0
        %416 = vmatprep.subr.mxu0 0.0
        %417 = vmatpush1.msra.mxu0 0.0
        %418 = vmatprep.subr.mxu0 0.0
        %419 = vmatpush1.msra.mxu0 0.0
        %420 = vmatprep.subr.mxu0 0.0
        %421 = vmatpush1.msra.mxu0 0.0
        %422 = vmatprep.subr.mxu0 0.0
        %423 = vmatpush1.msra.mxu0 0.0
        %424 = vmatprep.subr.mxu0 0.0
        %425 = vmatpush1.msra.mxu0 0.0
        %426 = vmatprep.subr.mxu0 0.0
        %427 = vmatpush1.msra.mxu0 0.0
        %428 = vmatprep.subr.mxu0 0.0
        %429 = vmatpush1.msra.mxu0 0.0
        %430 = vmatprep.subr.mxu0 0.0
        %431 = vmatpush1.msra.mxu0 0.0
        %432 = vmatprep.subr.mxu0 0.0
        %433 = vmatpush1.msra.mxu0 0.0
        %434 = vmatprep.subr.mxu0 0.0
        %435 = vmatpush1.msra.mxu0 0.0
        %436 = vmatprep.subr.mxu0 0.0
        %437 = vmatpush1.msra.mxu0 0.0
        %438 = vmatprep.subr.mxu0 0.0
        %439 = vmatpush1.msra.mxu0 0.0
        %440 = vmatprep.subr.mxu0 0.0
        %441 = vmatpush1.msra.mxu0 0.0
        %442 = vmatprep.subr.mxu0 0.0
        %443 = vmatpush1.msra.mxu0 0.0
        %444 = vmatprep.subr.mxu0 0.0
        %445 = vmatpush1.msra.mxu0 0.0
        %446 = vmatprep.subr.mxu0 0.0
        %447 = vmatpush1.msra.mxu0 0.0
        %448 = vmatprep.subr.mxu0 0.0
        %449 = vmatpush1.msra.mxu0 0.0
        %450 = vmatprep.subr.mxu0 0.0
        %451 = vmatpush1.msra.mxu0 0.0
        %452 = vmatprep.subr.mxu0 0.0
        %453 = vmatpush1.msra.mxu0 0.0
        %454 = vmatprep.subr.mxu0 0.0
        %455 = vmatpush1.msra.mxu0 0.0
        %456 = vmatprep.subr.mxu0 0.0
        %457 = vmatpush1.msra.mxu0 0.0
        %458 = vmatprep.subr.mxu0 0.0
        %459 = vmatpush1.msra.mxu0 0.0
        %460 = vmatprep.subr.mxu0 0.0
        %461 = vmatpush1.msra.mxu0 0.0
        %462 = vmatprep.subr.mxu0 0.0
        %463 = vmatpush1.msra.mxu0 0.0
        %464 = vmatprep.subr.mxu0 0.0
        %465 = vmatpush1.msra.mxu0 0.0
        %466 = vmatprep.subr.mxu0 0.0
        %467 = vmatpush1.msra.mxu0 0.0
        %468 = vmatprep.subr.mxu0 0.0
        %469 = vmatpush1.msra.mxu0 0.0
        %470 = vmatprep.subr.mxu0 0.0
        %471 = vmatpush1.msra.mxu0 0.0
        %472 = vmatprep.mubr.f32.mxu0 0.0
        %473 = vmatmul.mubr.f32.gmra.mrb[0].mxu0 %v361
        %v474 = vpop.f32.mrb[0].mxu0
        %v475 = vadd.f32 %v357, %v474
        %v476 = vpop.f32.mrb[0].mxu0
        %477 = vmatprep.mubr.f32.mxu0 0.0
        %478 = vmatmul.mubr.f32.gmra.mrb[0].mxu0 %v364
        %v479 = vpop.f32.mrb[0].mxu0
        %v480 = vadd.f32 %v357, %v479
        %v481 = vpop.f32.mrb[0].mxu0
        %482 = vmatprep.mubr.f32.mxu0 0.0
        %483 = vmatmul.mubr.f32.gmra.mrb[0].mxu0 %v367
        %v484 = vpop.f32.mrb[0].mxu0
        %v485 = vadd.f32 %v357, %v484
        %v486 = vpop.f32.mrb[0].mxu0
        %487 = vmatprep.mubr.f32.mxu0 0.0
        %488 = vmatmul.mubr.f32.gmra.mrb[0].mxu0 %v370
        %v489 = vpop.f32.mrb[0].mxu0
        %v490 = vadd.f32 %v357, %v489
        %v491 = vpop.f32.mrb[0].mxu0
        %492 = vmatprep.mubr.f32.mxu0 0.0
        %493 = vmatmul.mubr.f32.gmra.mrb[0].mxu0 %v373
        %v494 = vpop.f32.mrb[0].mxu0
        %v495 = vadd.f32 %v357, %v494
        %v496 = vpop.f32.mrb[0].mxu0
        %497 = vmatprep.mubr.f32.mxu0 0.0
        %498 = vmatmul.mubr.f32.gmra.mrb[0].mxu0 %v376
        %v499 = vpop.f32.mrb[0].mxu0
        %v500 = vadd.f32 %v357, %v499
        %v501 = vpop.f32.mrb[0].mxu0
        %502 = vmatprep.mubr.f32.mxu0 0.0
        %503 = vmatmul.mubr.f32.gmra.mrb[0].mxu0 %v379
        %v504 = vpop.f32.mrb[0].mxu0
        %v505 = vadd.f32 %v357, %v504
        %v506 = vpop.f32.mrb[0].mxu0
        %507 = vmatprep.mubr.f32.mxu0 0.0
        %508 = vmatmul.mubr.f32.gmra.mrb[0].mxu0 %v382
        %v509 = vpop.f32.mrb[0].mxu0
        %v510 = vadd.f32 %v357, %v509
        %v511 = vpop.f32.mrb[0].mxu0
        %512 = vmatprep.mubr.f32.mxu0 0.0
        %513 = vmatmul.mubr.f32.gmra.mrb[0].mxu0 %v385
        %v514 = vpop.f32.mrb[0].mxu0
        %v515 = vadd.f32 %v357, %v514
        %v516 = vpop.f32.mrb[0].mxu0
        %517 = vmatprep.mubr.f32.mxu0 0.0
        %518 = vmatmul.mubr.f32.gmra.mrb[0].mxu0 %v388
        %v519 = vpop.f32.mrb[0].mxu0
        %v520 = vadd.f32 %v357, %v519
        %v521 = vpop.f32.mrb[0].mxu0
        %522 = vmatprep.mubr.f32.mxu0 0.0
        %523 = vmatmul.mubr.f32.gmra.mrb[0].mxu0 %v391
        %v524 = vpop.f32.mrb[0].mxu0
        %v525 = vadd.f32 %v357, %v524
        %v526 = vpop.f32.mrb[0].mxu0
        %527 = vmatprep.mubr.f32.mxu0 0.0
        %528 = vmatmul.mubr.f32.gmra.mrb[0].mxu0 %v394
        %v529 = vpop.f32.mrb[0].mxu0
        %v530 = vadd.f32 %v357, %v529
        %v531 = vpop.f32.mrb[0].mxu0
        %532 = vmatprep.mubr.f32.mxu0 0.0
        %533 = vmatmul.mubr.f32.gmra.mrb[0].mxu0 %v397
        %v534 = vpop.f32.mrb[0].mxu0
        %v535 = vadd.f32 %v357, %v534
        %v536 = vpop.f32.mrb[0].mxu0
        %537 = vmatprep.mubr.f32.mxu0 0.0
        %538 = vmatmul.mubr.f32.gmra.mrb[0].mxu0 %v400
        %v539 = vpop.f32.mrb[0].mxu0
        %v540 = vadd.f32 %v357, %v539
        %v541 = vpop.f32.mrb[0].mxu0
        %542 = vmatprep.mubr.f32.mxu0 0.0
        %543 = vmatmul.mubr.f32.gmra.mrb[0].mxu0 %v403
        %v544 = vpop.f32.mrb[0].mxu0
        %v545 = vadd.f32 %v357, %v544
        %v546 = vpop.f32.mrb[0].mxu0
        %547 = vmatprep.mubr.f32.mxu0 0.0
        %548 = vmatmul.mubr.f32.gmra.mrb[0].mxu0 %v406
        %v549 = vpop.f32.mrb[0].mxu0
        %v550 = vadd.f32 %v357, %v549
        %v551 = vpop.f32.mrb[0].mxu0
        %552 = vdwg.mxu0
        %v553 = vld [vmem:[%s6] sm:$0xff]
        %v554 = vld [vmem:[%s3] sm:$0xff]
        %v555 = vld [vmem:[%s3 + $0x8] sm:$0xff]
        %v556 = vld [vmem:[%s3 + $0x10] sm:$0xff]
        %v557 = vld [vmem:[%s3 + $0x18] sm:$0xff]
        %v558 = vlaneseq
        %v559 = vshrl.u32 %v558, 7
        %v560 = vsub.s32 0, %v559
        %v561 = vrot.slane %v553, %v560
        %vm562 = vcmask 261120
        %v564 = vsel %vm562, %v475, 0
        %v567 = vsel %vm562, %v480, 0
        %v570 = vsel %vm562, %v485, 0
        %v573 = vsel %vm562, %v490, 0
        %v576 = vsel %vm562, %v495, 0
        %v579 = vsel %vm562, %v500, 0
        %v582 = vsel %vm562, %v505, 0
        %v585 = vsel %vm562, %v510, 0
        %v588 = vsel %vm562, %v515, 0
        %v591 = vsel %vm562, %v520, 0
        %v594 = vsel %vm562, %v525, 0
        %v597 = vsel %vm562, %v530, 0
        %v600 = vsel %vm562, %v535, 0
        %v603 = vsel %vm562, %v540, 0
        %v606 = vsel %vm562, %v545, 0
        %v609 = vsel %vm562, %v550, 0
        %611 = vmatprep.subr.mxu0 0.0
        %612 = vmatpush1.msra.mxu0 %v554
        %613 = vmatprep.subr.mxu0 0.0
        %614 = vmatpush1.msra.mxu0 %v555
        %615 = vmatprep.subr.mxu0 0.0
        %616 = vmatpush1.msra.mxu0 %v556
        %617 = vmatprep.subr.mxu0 0.0
        %618 = vmatpush1.msra.mxu0 %v557
        %619 = vmatprep.subr.mxu0 0.0
        %620 = vmatpush1.msra.mxu0 0.0
        %621 = vmatprep.subr.mxu0 0.0
        %622 = vmatpush1.msra.mxu0 0.0
        %623 = vmatprep.subr.mxu0 0.0
        %624 = vmatpush1.msra.mxu0 0.0
        %625 = vmatprep.subr.mxu0 0.0
        %626 = vmatpush1.msra.mxu0 0.0
        %627 = vmatprep.subr.mxu0 0.0
        %628 = vmatpush1.msra.mxu0 0.0
        %629 = vmatprep.subr.mxu0 0.0
        %630 = vmatpush1.msra.mxu0 0.0
        %631 = vmatprep.subr.mxu0 0.0
        %632 = vmatpush1.msra.mxu0 0.0
        %633 = vmatprep.subr.mxu0 0.0
        %634 = vmatpush1.msra.mxu0 0.0
        %635 = vmatprep.subr.mxu0 0.0
        %636 = vmatpush1.msra.mxu0 0.0
        %637 = vmatprep.subr.mxu0 0.0
        %638 = vmatpush1.msra.mxu0 0.0
        %639 = vmatprep.subr.mxu0 0.0
        %640 = vmatpush1.msra.mxu0 0.0
        %641 = vmatprep.subr.mxu0 0.0
        %642 = vmatpush1.msra.mxu0 0.0
        %643 = vmatprep.subr.mxu0 0.0
        %644 = vmatpush1.msra.mxu0 0.0
        %645 = vmatprep.subr.mxu0 0.0
        %646 = vmatpush1.msra.mxu0 0.0
        %647 = vmatprep.subr.mxu0 0.0
        %648 = vmatpush1.msra.mxu0 0.0
        %649 = vmatprep.subr.mxu0 0.0
        %650 = vmatpush1.msra.mxu0 0.0
        %651 = vmatprep.subr.mxu0 0.0
        %652 = vmatpush1.msra.mxu0 0.0
        %653 = vmatprep.subr.mxu0 0.0
        %654 = vmatpush1.msra.mxu0 0.0
        %655 = vmatprep.subr.mxu0 0.0
        %656 = vmatpush1.msra.mxu0 0.0
        %657 = vmatprep.subr.mxu0 0.0
        %658 = vmatpush1.msra.mxu0 0.0
        %659 = vmatprep.subr.mxu0 0.0
        %660 = vmatpush1.msra.mxu0 0.0
        %661 = vmatprep.subr.mxu0 0.0
        %662 = vmatpush1.msra.mxu0 0.0
        %663 = vmatprep.subr.mxu0 0.0
        %664 = vmatpush1.msra.mxu0 0.0
        %665 = vmatprep.subr.mxu0 0.0
        %666 = vmatpush1.msra.mxu0 0.0
        %667 = vmatprep.subr.mxu0 0.0
        %668 = vmatpush1.msra.mxu0 0.0
        %669 = vmatprep.subr.mxu0 0.0
        %670 = vmatpush1.msra.mxu0 0.0
        %671 = vmatprep.subr.mxu0 0.0
        %672 = vmatpush1.msra.mxu0 0.0
        %673 = vmatprep.subr.mxu0 0.0
        %674 = vmatpush1.msra.mxu0 0.0
        %675 = vmatprep.mubr.f32.mxu0 0.0
        %676 = vmatmul.mubr.f32.gmra.mrb[0].mxu0 %v564
        %v677 = vpop.f32.mrb[0].mxu0
        %v678 = vadd.f32 %v561, %v677
        %v679 = vpop.f32.mrb[0].mxu0
        %680 = vmatprep.mubr.f32.mxu0 0.0
        %681 = vmatmul.mubr.f32.gmra.mrb[0].mxu0 %v567
        %v682 = vpop.f32.mrb[0].mxu0
        %v683 = vadd.f32 %v561, %v682
        %v684 = vpop.f32.mrb[0].mxu0
        %685 = vmatprep.mubr.f32.mxu0 0.0
        %686 = vmatmul.mubr.f32.gmra.mrb[0].mxu0 %v570
        %v687 = vpop.f32.mrb[0].mxu0
        %v688 = vadd.f32 %v561, %v687
        %v689 = vpop.f32.mrb[0].mxu0
        %690 = vmatprep.mubr.f32.mxu0 0.0
        %691 = vmatmul.mubr.f32.gmra.mrb[0].mxu0 %v573
        %v692 = vpop.f32.mrb[0].mxu0
        %v693 = vadd.f32 %v561, %v692
        %v694 = vpop.f32.mrb[0].mxu0
        %695 = vmatprep.mubr.f32.mxu0 0.0
        %696 = vmatmul.mubr.f32.gmra.mrb[0].mxu0 %v576
        %v697 = vpop.f32.mrb[0].mxu0
        %v698 = vadd.f32 %v561, %v697
        %v699 = vpop.f32.mrb[0].mxu0
        %700 = vmatprep.mubr.f32.mxu0 0.0
        %701 = vmatmul.mubr.f32.gmra.mrb[0].mxu0 %v579
        %v702 = vpop.f32.mrb[0].mxu0
        %v703 = vadd.f32 %v561, %v702
        %v704 = vpop.f32.mrb[0].mxu0
        %705 = vmatprep.mubr.f32.mxu0 0.0
        %706 = vmatmul.mubr.f32.gmra.mrb[0].mxu0 %v582
        %v707 = vpop.f32.mrb[0].mxu0
        %v708 = vadd.f32 %v561, %v707
        %v709 = vpop.f32.mrb[0].mxu0
        %710 = vmatprep.mubr.f32.mxu0 0.0
        %711 = vmatmul.mubr.f32.gmra.mrb[0].mxu0 %v585
        %v712 = vpop.f32.mrb[0].mxu0
        %v713 = vadd.f32 %v561, %v712
        %v714 = vpop.f32.mrb[0].mxu0
        %715 = vmatprep.mubr.f32.mxu0 0.0
        %716 = vmatmul.mubr.f32.gmra.mrb[0].mxu0 %v588
        %v717 = vpop.f32.mrb[0].mxu0
        %v718 = vadd.f32 %v561, %v717
        %v719 = vpop.f32.mrb[0].mxu0
        %720 = vmatprep.mubr.f32.mxu0 0.0
        %721 = vmatmul.mubr.f32.gmra.mrb[0].mxu0 %v591
        %v722 = vpop.f32.mrb[0].mxu0
        %v723 = vadd.f32 %v561, %v722
        %v724 = vpop.f32.mrb[0].mxu0
        %725 = vmatprep.mubr.f32.mxu0 0.0
        %726 = vmatmul.mubr.f32.gmra.mrb[0].mxu0 %v594
        %v727 = vpop.f32.mrb[0].mxu0
        %v728 = vadd.f32 %v561, %v727
        %v729 = vpop.f32.mrb[0].mxu0
        %730 = vmatprep.mubr.f32.mxu0 0.0
        %731 = vmatmul.mubr.f32.gmra.mrb[0].mxu0 %v597
        %v732 = vpop.f32.mrb[0].mxu0
        %v733 = vadd.f32 %v561, %v732
        %v734 = vpop.f32.mrb[0].mxu0
        %735 = vmatprep.mubr.f32.mxu0 0.0
        %736 = vmatmul.mubr.f32.gmra.mrb[0].mxu0 %v600
        %v737 = vpop.f32.mrb[0].mxu0
        %v738 = vadd.f32 %v561, %v737
        %v739 = vpop.f32.mrb[0].mxu0
        %740 = vmatprep.mubr.f32.mxu0 0.0
        %741 = vmatmul.mubr.f32.gmra.mrb[0].mxu0 %v603
        %v742 = vpop.f32.mrb[0].mxu0
        %v743 = vadd.f32 %v561, %v742
        %v744 = vpop.f32.mrb[0].mxu0
        %745 = vmatprep.mubr.f32.mxu0 0.0
        %746 = vmatmul.mubr.f32.gmra.mrb[0].mxu0 %v606
        %v747 = vpop.f32.mrb[0].mxu0
        %v748 = vadd.f32 %v561, %v747
        %v749 = vpop.f32.mrb[0].mxu0
        %750 = vmatprep.mubr.f32.mxu0 0.0
        %751 = vmatmul.mubr.f32.gmra.mrb[0].mxu0 %v609
        %v752 = vpop.f32.mrb[0].mxu0
        %v753 = vadd.f32 %v561, %v752
        %v754 = vpop.f32.mrb[0].mxu0
        %755 = vdwg.mxu0
        %v756 = vadd.f32 %v475, %v678
        %v757 = vadd.f32 %v480, %v683
        %v758 = vadd.f32 %v485, %v688
        %v759 = vadd.f32 %v490, %v693
        %v760 = vadd.f32 %v495, %v698
        %v761 = vadd.f32 %v500, %v703
        %v762 = vadd.f32 %v505, %v708
        %v763 = vadd.f32 %v510, %v713
        %v764 = vadd.f32 %v515, %v718
        %v765 = vadd.f32 %v520, %v723
        %v766 = vadd.f32 %v525, %v728
        %v767 = vadd.f32 %v530, %v733
        %v768 = vadd.f32 %v535, %v738
        %v769 = vadd.f32 %v540, %v743
        %v770 = vadd.f32 %v545, %v748
        %v771 = vadd.f32 %v550, %v753
        %v772 = vsel %vm562, %v756, 0.0
        %773 = vadd.xlane.f32.xlu0 %v772
        %v774 = vpop.xlane.xlu0 %773
        %v775 = vsel %vm562, %v757, 0.0
        %776 = vadd.xlane.f32.xlu0 %v775
        %v777 = vpop.xlane.xlu0 %776
        %v778 = vsel %vm562, %v758, 0.0
        %779 = vadd.xlane.f32.xlu0 %v778
        %v780 = vpop.xlane.xlu0 %779
        %v781 = vsel %vm562, %v759, 0.0
        %782 = vadd.xlane.f32.xlu0 %v781
        %v783 = vpop.xlane.xlu0 %782
        %v784 = vsel %vm562, %v760, 0.0
        %785 = vadd.xlane.f32.xlu0 %v784
        %v786 = vpop.xlane.xlu0 %785
        %v787 = vsel %vm562, %v761, 0.0
        %788 = vadd.xlane.f32.xlu0 %v787
        %v789 = vpop.xlane.xlu0 %788
        %v790 = vsel %vm562, %v762, 0.0
        %791 = vadd.xlane.f32.xlu0 %v790
        %v792 = vpop.xlane.xlu0 %791
        %v793 = vsel %vm562, %v763, 0.0
        %794 = vadd.xlane.f32.xlu0 %v793
        %v795 = vpop.xlane.xlu0 %794
        %v796 = vsel %vm562, %v764, 0.0
        %797 = vadd.xlane.f32.xlu0 %v796
        %v798 = vpop.xlane.xlu0 %797
        %v799 = vsel %vm562, %v765, 0.0
        %800 = vadd.xlane.f32.xlu0 %v799
        %v801 = vpop.xlane.xlu0 %800
        %v802 = vsel %vm562, %v766, 0.0
        %803 = vadd.xlane.f32.xlu0 %v802
        %v804 = vpop.xlane.xlu0 %803
        %v805 = vsel %vm562, %v767, 0.0
        %806 = vadd.xlane.f32.xlu0 %v805
        %v807 = vpop.xlane.xlu0 %806
        %v808 = vsel %vm562, %v768, 0.0
        %809 = vadd.xlane.f32.xlu0 %v808
        %v810 = vpop.xlane.xlu0 %809
        %v811 = vsel %vm562, %v769, 0.0
        %812 = vadd.xlane.f32.xlu0 %v811
        %v813 = vpop.xlane.xlu0 %812
        %v814 = vsel %vm562, %v770, 0.0
        %815 = vadd.xlane.f32.xlu0 %v814
        %v816 = vpop.xlane.xlu0 %815
        %v817 = vsel %vm562, %v771, 0.0
        %818 = vadd.xlane.f32.xlu0 %v817
        %v819 = vpop.xlane.xlu0 %818
        %v820 = vrcp.pop 32.0
        %v821 = vmul.f32 %v774, %v820
        %v822 = vmul.f32 %v777, %v820
        %v823 = vmul.f32 %v780, %v820
        %v824 = vmul.f32 %v783, %v820
        %v825 = vmul.f32 %v786, %v820
        %v826 = vmul.f32 %v789, %v820
        %v827 = vmul.f32 %v792, %v820
        %v828 = vmul.f32 %v795, %v820
        %v829 = vmul.f32 %v798, %v820
        %v830 = vmul.f32 %v801, %v820
        %v831 = vmul.f32 %v804, %v820
        %v832 = vmul.f32 %v807, %v820
        %v833 = vmul.f32 %v810, %v820
        %v834 = vmul.f32 %v813, %v820
        %v835 = vmul.f32 %v816, %v820
        %v836 = vmul.f32 %v819, %v820
        %v837 = vsub.f32 %v756, %v821
        %v838 = vsub.f32 %v757, %v822
        %v839 = vsub.f32 %v758, %v823
        %v840 = vsub.f32 %v759, %v824
        %v841 = vsub.f32 %v760, %v825
        %v842 = vsub.f32 %v761, %v826
        %v843 = vsub.f32 %v762, %v827
        %v844 = vsub.f32 %v763, %v828
        %v845 = vsub.f32 %v764, %v829
        %v846 = vsub.f32 %v765, %v830
        %v847 = vsub.f32 %v766, %v831
        %v848 = vsub.f32 %v767, %v832
        %v849 = vsub.f32 %v768, %v833
        %v850 = vsub.f32 %v769, %v834
        %v851 = vsub.f32 %v770, %v835
        %v852 = vsub.f32 %v771, %v836
        %v853 = vmul.f32 %v837, %v837
        %v854 = vmul.f32 %v838, %v838
        %v855 = vmul.f32 %v839, %v839
        %v856 = vmul.f32 %v840, %v840
        %v857 = vmul.f32 %v841, %v841
        %v858 = vmul.f32 %v842, %v842
        %v859 = vmul.f32 %v843, %v843
        %v860 = vmul.f32 %v844, %v844
        %v861 = vmul.f32 %v845, %v845
        %v862 = vmul.f32 %v846, %v846
        %v863 = vmul.f32 %v847, %v847
        %v864 = vmul.f32 %v848, %v848
        %v865 = vmul.f32 %v849, %v849
        %v866 = vmul.f32 %v850, %v850
        %v867 = vmul.f32 %v851, %v851
        %v868 = vmul.f32 %v852, %v852
        %v869 = vsel %vm562, %v853, 0.0
        %870 = vadd.xlane.f32.xlu0 %v869
        %v871 = vpop.xlane.xlu0 %870
        %v872 = vsel %vm562, %v854, 0.0
        %873 = vadd.xlane.f32.xlu0 %v872
        %v874 = vpop.xlane.xlu0 %873
        %v875 = vsel %vm562, %v855, 0.0
        %876 = vadd.xlane.f32.xlu0 %v875
        %v877 = vpop.xlane.xlu0 %876
        %v878 = vsel %vm562, %v856, 0.0
        %879 = vadd.xlane.f32.xlu0 %v878
        %v880 = vpop.xlane.xlu0 %879
        %v881 = vsel %vm562, %v857, 0.0
        %882 = vadd.xlane.f32.xlu0 %v881
        %v883 = vpop.xlane.xlu0 %882
        %v884 = vsel %vm562, %v858, 0.0
        %885 = vadd.xlane.f32.xlu0 %v884
        %v886 = vpop.xlane.xlu0 %885
        %v887 = vsel %vm562, %v859, 0.0
        %888 = vadd.xlane.f32.xlu0 %v887
        %v889 = vpop.xlane.xlu0 %888
        %v890 = vsel %vm562, %v860, 0.0
        %891 = vadd.xlane.f32.xlu0 %v890
        %v892 = vpop.xlane.xlu0 %891
        %v893 = vsel %vm562, %v861, 0.0
        %894 = vadd.xlane.f32.xlu0 %v893
        %v895 = vpop.xlane.xlu0 %894
        %v896 = vsel %vm562, %v862, 0.0
        %897 = vadd.xlane.f32.xlu0 %v896
        %v898 = vpop.xlane.xlu0 %897
        %v899 = vsel %vm562, %v863, 0.0
        %900 = vadd.xlane.f32.xlu0 %v899
        %v901 = vpop.xlane.xlu0 %900
        %v902 = vsel %vm562, %v864, 0.0
        %903 = vadd.xlane.f32.xlu0 %v902
        %v904 = vpop.xlane.xlu0 %903
        %v905 = vsel %vm562, %v865, 0.0
        %906 = vadd.xlane.f32.xlu0 %v905
        %v907 = vpop.xlane.xlu0 %906
        %v908 = vsel %vm562, %v866, 0.0
        %909 = vadd.xlane.f32.xlu0 %v908
        %v910 = vpop.xlane.xlu0 %909
        %v911 = vsel %vm562, %v867, 0.0
        %912 = vadd.xlane.f32.xlu0 %v911
        %v913 = vpop.xlane.xlu0 %912
        %v914 = vsel %vm562, %v868, 0.0
        %915 = vadd.xlane.f32.xlu0 %v914
        %v916 = vpop.xlane.xlu0 %915
        %v917 = vmul.f32 %v871, %v820
        %v918 = vmul.f32 %v874, %v820
        %v919 = vmul.f32 %v877, %v820
        %v920 = vmul.f32 %v880, %v820
        %v921 = vmul.f32 %v883, %v820
        %v922 = vmul.f32 %v886, %v820
        %v923 = vmul.f32 %v889, %v820
        %v924 = vmul.f32 %v892, %v820
        %v925 = vmul.f32 %v895, %v820
        %v926 = vmul.f32 %v898, %v820
        %v927 = vmul.f32 %v901, %v820
        %v928 = vmul.f32 %v904, %v820
        %v929 = vmul.f32 %v907, %v820
        %v930 = vmul.f32 %v910, %v820
        %v931 = vmul.f32 %v913, %v820
        %v932 = vmul.f32 %v916, %v820
        %v933 = vadd.f32 %v917, 1e-05
        %v934 = vadd.f32 %v918, 1e-05
        %v935 = vadd.f32 %v919, 1e-05
        %v936 = vadd.f32 %v920, 1e-05
        %v937 = vadd.f32 %v921, 1e-05
        %v938 = vadd.f32 %v922, 1e-05
        %v939 = vadd.f32 %v923, 1e-05
        %v940 = vadd.f32 %v924, 1e-05
        %v941 = vadd.f32 %v925, 1e-05
        %v942 = vadd.f32 %v926, 1e-05
        %v943 = vadd.f32 %v927, 1e-05
        %v944 = vadd.f32 %v928, 1e-05
        %v945 = vadd.f32 %v929, 1e-05
        %v946 = vadd.f32 %v930, 1e-05
        %v947 = vadd.f32 %v931, 1e-05
        %v948 = vadd.f32 %v932, 1e-05
        %v949 = vrsqrt.pop %v933
        %v950 = vrsqrt.pop %v934
        %v951 = vrsqrt.pop %v935
        %v952 = vrsqrt.pop %v936
        %v953 = vrsqrt.pop %v937
        %v954 = vrsqrt.pop %v938
        %v955 = vrsqrt.pop %v939
        %v956 = vrsqrt.pop %v940
        %v957 = vrsqrt.pop %v941
        %v958 = vrsqrt.pop %v942
        %v959 = vrsqrt.pop %v943
        %v960 = vrsqrt.pop %v944
        %v961 = vrsqrt.pop %v945
        %v962 = vrsqrt.pop %v946
        %v963 = vrsqrt.pop %v947
        %v964 = vrsqrt.pop %v948
        %v965 = vmul.f32 %v837, %v949
        %v966 = vmul.f32 %v838, %v950
        %v967 = vmul.f32 %v839, %v951
        %v968 = vmul.f32 %v840, %v952
        %v969 = vmul.f32 %v841, %v953
        %v970 = vmul.f32 %v842, %v954
        %v971 = vmul.f32 %v843, %v955
        %v972 = vmul.f32 %v844, %v956
        %v973 = vmul.f32 %v845, %v957
        %v974 = vmul.f32 %v846, %v958
        %v975 = vmul.f32 %v847, %v959
        %v976 = vmul.f32 %v848, %v960
        %v977 = vmul.f32 %v849, %v961
        %v978 = vmul.f32 %v850, %v962
        %v979 = vmul.f32 %v851, %v963
        %v980 = vmul.f32 %v852, %v964
        %v981 = vlaneseq
        %v982 = vshrl.u32 %v981, 7
        %v983 = vsub.s32 1, %v982
        %v984 = vrot.slane %v553, %v983
        %v985 = vmul.f32 %v965, %v984
        %v986 = vmul.f32 %v966, %v984
        %v987 = vmul.f32 %v967, %v984
        %v988 = vmul.f32 %v968, %v984
        %v989 = vmul.f32 %v969, %v984
        %v990 = vmul.f32 %v970, %v984
        %v991 = vmul.f32 %v971, %v984
        %v992 = vmul.f32 %v972, %v984
        %v993 = vmul.f32 %v973, %v984
        %v994 = vmul.f32 %v974, %v984
        %v995 = vmul.f32 %v975, %v984
        %v996 = vmul.f32 %v976, %v984
        %v997 = vmul.f32 %v977, %v984
        %v998 = vmul.f32 %v978, %v984
        %v999 = vmul.f32 %v979, %v984
        %v1000 = vmul.f32 %v980, %v984
        %v1001 = vlaneseq
        %v1002 = vshrl.u32 %v1001, 7
        %v1003 = vsub.s32 2, %v1002
        %v1004 = vrot.slane %v553, %v1003
        %v1005 = vadd.f32 %v985, %v1004
        %v1006 = vadd.f32 %v986, %v1004
        %v1007 = vadd.f32 %v987, %v1004
        %v1008 = vadd.f32 %v988, %v1004
        %v1009 = vadd.f32 %v989, %v1004
        %v1010 = vadd.f32 %v990, %v1004
        %v1011 = vadd.f32 %v991, %v1004
        %v1012 = vadd.f32 %v992, %v1004
        %v1013 = vadd.f32 %v993, %v1004
        %v1014 = vadd.f32 %v994, %v1004
        %v1015 = vadd.f32 %v995, %v1004
        %v1016 = vadd.f32 %v996, %v1004
        %v1017 = vadd.f32 %v997, %v1004
        %v1018 = vadd.f32 %v998, %v1004
        %v1019 = vadd.f32 %v999, %v1004
        %v1020 = vadd.f32 %v1000, %v1004
        %v1021 = vld [vmem:[%s4] sm:$0xff]
        %v1022 = vld [vmem:[%s4 + $0x8] sm:$0xff]
        %v1023 = vld [vmem:[%s4 + $0x10] sm:$0xff]
        %v1024 = vld [vmem:[%s4 + $0x18] sm:$0xff]
        %v1025 = vlaneseq
        %v1026 = vshrl.u32 %v1025, 7
        %v1027 = vsub.s32 3, %v1026
        %v1028 = vrot.slane %v553, %v1027
        %v1030 = vsel %vm562, %v1005, 0
        %v1033 = vsel %vm562, %v1006, 0
        %v1036 = vsel %vm562, %v1007, 0
        %v1039 = vsel %vm562, %v1008, 0
        %v1042 = vsel %vm562, %v1009, 0
        %v1045 = vsel %vm562, %v1010, 0
        %v1048 = vsel %vm562, %v1011, 0
        %v1051 = vsel %vm562, %v1012, 0
        %v1054 = vsel %vm562, %v1013, 0
        %v1057 = vsel %vm562, %v1014, 0
        %v1060 = vsel %vm562, %v1015, 0
        %v1063 = vsel %vm562, %v1016, 0
        %v1066 = vsel %vm562, %v1017, 0
        %v1069 = vsel %vm562, %v1018, 0
        %v1072 = vsel %vm562, %v1019, 0
        %v1075 = vsel %vm562, %v1020, 0
        %1077 = vmatprep.subr.mxu0 0.0
        %1078 = vmatpush1.msra.mxu0 %v1021
        %1079 = vmatprep.subr.mxu0 0.0
        %1080 = vmatpush1.msra.mxu0 %v1022
        %1081 = vmatprep.subr.mxu0 0.0
        %1082 = vmatpush1.msra.mxu0 %v1023
        %1083 = vmatprep.subr.mxu0 0.0
        %1084 = vmatpush1.msra.mxu0 %v1024
        %1085 = vmatprep.subr.mxu0 0.0
        %1086 = vmatpush1.msra.mxu0 0.0
        %1087 = vmatprep.subr.mxu0 0.0
        %1088 = vmatpush1.msra.mxu0 0.0
        %1089 = vmatprep.subr.mxu0 0.0
        %1090 = vmatpush1.msra.mxu0 0.0
        %1091 = vmatprep.subr.mxu0 0.0
        %1092 = vmatpush1.msra.mxu0 0.0
        %1093 = vmatprep.subr.mxu0 0.0
        %1094 = vmatpush1.msra.mxu0 0.0
        %1095 = vmatprep.subr.mxu0 0.0
        %1096 = vmatpush1.msra.mxu0 0.0
        %1097 = vmatprep.subr.mxu0 0.0
        %1098 = vmatpush1.msra.mxu0 0.0
        %1099 = vmatprep.subr.mxu0 0.0
        %1100 = vmatpush1.msra.mxu0 0.0
        %1101 = vmatprep.subr.mxu0 0.0
        %1102 = vmatpush1.msra.mxu0 0.0
        %1103 = vmatprep.subr.mxu0 0.0
        %1104 = vmatpush1.msra.mxu0 0.0
        %1105 = vmatprep.subr.mxu0 0.0
        %1106 = vmatpush1.msra.mxu0 0.0
        %1107 = vmatprep.subr.mxu0 0.0
        %1108 = vmatpush1.msra.mxu0 0.0
        %1109 = vmatprep.subr.mxu0 0.0
        %1110 = vmatpush1.msra.mxu0 0.0
        %1111 = vmatprep.subr.mxu0 0.0
        %1112 = vmatpush1.msra.mxu0 0.0
        %1113 = vmatprep.subr.mxu0 0.0
        %1114 = vmatpush1.msra.mxu0 0.0
        %1115 = vmatprep.subr.mxu0 0.0
        %1116 = vmatpush1.msra.mxu0 0.0
        %1117 = vmatprep.subr.mxu0 0.0
        %1118 = vmatpush1.msra.mxu0 0.0
        %1119 = vmatprep.subr.mxu0 0.0
        %1120 = vmatpush1.msra.mxu0 0.0
        %1121 = vmatprep.subr.mxu0 0.0
        %1122 = vmatpush1.msra.mxu0 0.0
        %1123 = vmatprep.subr.mxu0 0.0
        %1124 = vmatpush1.msra.mxu0 0.0
        %1125 = vmatprep.subr.mxu0 0.0
        %1126 = vmatpush1.msra.mxu0 0.0
        %1127 = vmatprep.subr.mxu0 0.0
        %1128 = vmatpush1.msra.mxu0 0.0
        %1129 = vmatprep.subr.mxu0 0.0
        %1130 = vmatpush1.msra.mxu0 0.0
        %1131 = vmatprep.subr.mxu0 0.0
        %1132 = vmatpush1.msra.mxu0 0.0
        %1133 = vmatprep.subr.mxu0 0.0
        %1134 = vmatpush1.msra.mxu0 0.0
        %1135 = vmatprep.subr.mxu0 0.0
        %1136 = vmatpush1.msra.mxu0 0.0
        %1137 = vmatprep.subr.mxu0 0.0
        %1138 = vmatpush1.msra.mxu0 0.0
        %1139 = vmatprep.subr.mxu0 0.0
        %1140 = vmatpush1.msra.mxu0 0.0
        %1141 = vmatprep.mubr.f32.mxu0 0.0
        %1142 = vmatmul.mubr.f32.gmra.mrb[0].mxu0 %v1030
        %v1143 = vpop.f32.mrb[0].mxu0
        %v1144 = vadd.f32 %v1028, %v1143
        %v1145 = vpop.f32.mrb[0].mxu0
        %1146 = vmatprep.mubr.f32.mxu0 0.0
        %1147 = vmatmul.mubr.f32.gmra.mrb[0].mxu0 %v1033
        %v1148 = vpop.f32.mrb[0].mxu0
        %v1149 = vadd.f32 %v1028, %v1148
        %v1150 = vpop.f32.mrb[0].mxu0
        %1151 = vmatprep.mubr.f32.mxu0 0.0
        %1152 = vmatmul.mubr.f32.gmra.mrb[0].mxu0 %v1036
        %v1153 = vpop.f32.mrb[0].mxu0
        %v1154 = vadd.f32 %v1028, %v1153
        %v1155 = vpop.f32.mrb[0].mxu0
        %1156 = vmatprep.mubr.f32.mxu0 0.0
        %1157 = vmatmul.mubr.f32.gmra.mrb[0].mxu0 %v1039
        %v1158 = vpop.f32.mrb[0].mxu0
        %v1159 = vadd.f32 %v1028, %v1158
        %v1160 = vpop.f32.mrb[0].mxu0
        %1161 = vmatprep.mubr.f32.mxu0 0.0
        %1162 = vmatmul.mubr.f32.gmra.mrb[0].mxu0 %v1042
        %v1163 = vpop.f32.mrb[0].mxu0
        %v1164 = vadd.f32 %v1028, %v1163
        %v1165 = vpop.f32.mrb[0].mxu0
        %1166 = vmatprep.mubr.f32.mxu0 0.0
        %1167 = vmatmul.mubr.f32.gmra.mrb[0].mxu0 %v1045
        %v1168 = vpop.f32.mrb[0].mxu0
        %v1169 = vadd.f32 %v1028, %v1168
        %v1170 = vpop.f32.mrb[0].mxu0
        %1171 = vmatprep.mubr.f32.mxu0 0.0
        %1172 = vmatmul.mubr.f32.gmra.mrb[0].mxu0 %v1048
        %v1173 = vpop.f32.mrb[0].mxu0
        %v1174 = vadd.f32 %v1028, %v1173
        %v1175 = vpop.f32.mrb[0].mxu0
        %1176 = vmatprep.mubr.f32.mxu0 0.0
        %1177 = vmatmul.mubr.f32.gmra.mrb[0].mxu0 %v1051
        %v1178 = vpop.f32.mrb[0].mxu0
        %v1179 = vadd.f32 %v1028, %v1178
        %v1180 = vpop.f32.mrb[0].mxu0
        %1181 = vmatprep.mubr.f32.mxu0 0.0
        %1182 = vmatmul.mubr.f32.gmra.mrb[0].mxu0 %v1054
        %v1183 = vpop.f32.mrb[0].mxu0
        %v1184 = vadd.f32 %v1028, %v1183
        %v1185 = vpop.f32.mrb[0].mxu0
        %1186 = vmatprep.mubr.f32.mxu0 0.0
        %1187 = vmatmul.mubr.f32.gmra.mrb[0].mxu0 %v1057
        %v1188 = vpop.f32.mrb[0].mxu0
        %v1189 = vadd.f32 %v1028, %v1188
        %v1190 = vpop.f32.mrb[0].mxu0
        %1191 = vmatprep.mubr.f32.mxu0 0.0
        %1192 = vmatmul.mubr.f32.gmra.mrb[0].mxu0 %v1060
        %v1193 = vpop.f32.mrb[0].mxu0
        %v1194 = vadd.f32 %v1028, %v1193
        %v1195 = vpop.f32.mrb[0].mxu0
        %1196 = vmatprep.mubr.f32.mxu0 0.0
        %1197 = vmatmul.mubr.f32.gmra.mrb[0].mxu0 %v1063
        %v1198 = vpop.f32.mrb[0].mxu0
        %v1199 = vadd.f32 %v1028, %v1198
        %v1200 = vpop.f32.mrb[0].mxu0
        %1201 = vmatprep.mubr.f32.mxu0 0.0
        %1202 = vmatmul.mubr.f32.gmra.mrb[0].mxu0 %v1066
        %v1203 = vpop.f32.mrb[0].mxu0
        %v1204 = vadd.f32 %v1028, %v1203
        %v1205 = vpop.f32.mrb[0].mxu0
        %1206 = vmatprep.mubr.f32.mxu0 0.0
        %1207 = vmatmul.mubr.f32.gmra.mrb[0].mxu0 %v1069
        %v1208 = vpop.f32.mrb[0].mxu0
        %v1209 = vadd.f32 %v1028, %v1208
        %v1210 = vpop.f32.mrb[0].mxu0
        %1211 = vmatprep.mubr.f32.mxu0 0.0
        %1212 = vmatmul.mubr.f32.gmra.mrb[0].mxu0 %v1072
        %v1213 = vpop.f32.mrb[0].mxu0
        %v1214 = vadd.f32 %v1028, %v1213
        %v1215 = vpop.f32.mrb[0].mxu0
        %1216 = vmatprep.mubr.f32.mxu0 0.0
        %1217 = vmatmul.mubr.f32.gmra.mrb[0].mxu0 %v1075
        %v1218 = vpop.f32.mrb[0].mxu0
        %v1219 = vadd.f32 %v1028, %v1218
        %v1220 = vpop.f32.mrb[0].mxu0
        %1221 = vdwg.mxu0
        %v1222 = vmax.f32 %v1144, 0.0
        %v1223 = vmax.f32 %v1149, 0.0
        %v1224 = vmax.f32 %v1154, 0.0
        %v1225 = vmax.f32 %v1159, 0.0
        %v1226 = vmax.f32 %v1164, 0.0
        %v1227 = vmax.f32 %v1169, 0.0
        %v1228 = vmax.f32 %v1174, 0.0
        %v1229 = vmax.f32 %v1179, 0.0
        %v1230 = vmax.f32 %v1184, 0.0
        %v1231 = vmax.f32 %v1189, 0.0
        %v1232 = vmax.f32 %v1194, 0.0
        %v1233 = vmax.f32 %v1199, 0.0
        %v1234 = vmax.f32 %v1204, 0.0
        %v1235 = vmax.f32 %v1209, 0.0
        %v1236 = vmax.f32 %v1214, 0.0
        %v1237 = vmax.f32 %v1219, 0.0
        %v1238 = vld [vmem:[%s5] sm:$0xff]
        %v1239 = vld [vmem:[%s5 + $0x8] sm:$0xff]
        %v1240 = vld [vmem:[%s5 + $0x10] sm:$0xff]
        %v1241 = vld [vmem:[%s5 + $0x18] sm:$0xff]
        %v1242 = vld [vmem:[%s5 + $0x20] sm:$0xff]
        %v1243 = vld [vmem:[%s5 + $0x28] sm:$0xff]
        %v1244 = vld [vmem:[%s5 + $0x30] sm:$0xff]
        %v1245 = vld [vmem:[%s5 + $0x38] sm:$0xff]
        %v1246 = vlaneseq
        %v1247 = vshrl.u32 %v1246, 7
        %v1248 = vsub.s32 4, %v1247
        %v1249 = vrot.slane %v553, %v1248
        %vm1250 = vcmask 523264
        %v1252 = vsel %vm1250, %v1222, 0
        %v1255 = vsel %vm1250, %v1223, 0
        %v1258 = vsel %vm1250, %v1224, 0
        %v1261 = vsel %vm1250, %v1225, 0
        %v1264 = vsel %vm1250, %v1226, 0
        %v1267 = vsel %vm1250, %v1227, 0
        %v1270 = vsel %vm1250, %v1228, 0
        %v1273 = vsel %vm1250, %v1229, 0
        %v1276 = vsel %vm1250, %v1230, 0
        %v1279 = vsel %vm1250, %v1231, 0
        %v1282 = vsel %vm1250, %v1232, 0
        %v1285 = vsel %vm1250, %v1233, 0
        %v1288 = vsel %vm1250, %v1234, 0
        %v1291 = vsel %vm1250, %v1235, 0
        %v1294 = vsel %vm1250, %v1236, 0
        %v1297 = vsel %vm1250, %v1237, 0
        %1299 = vmatprep.subr.mxu0 0.0
        %1300 = vmatpush1.msra.mxu0 %v1238
        %1301 = vmatprep.subr.mxu0 0.0
        %1302 = vmatpush1.msra.mxu0 %v1239
        %1303 = vmatprep.subr.mxu0 0.0
        %1304 = vmatpush1.msra.mxu0 %v1240
        %1305 = vmatprep.subr.mxu0 0.0
        %1306 = vmatpush1.msra.mxu0 %v1241
        %1307 = vmatprep.subr.mxu0 0.0
        %1308 = vmatpush1.msra.mxu0 %v1242
        %1309 = vmatprep.subr.mxu0 0.0
        %1310 = vmatpush1.msra.mxu0 %v1243
        %1311 = vmatprep.subr.mxu0 0.0
        %1312 = vmatpush1.msra.mxu0 %v1244
        %1313 = vmatprep.subr.mxu0 0.0
        %1314 = vmatpush1.msra.mxu0 %v1245
        %1315 = vmatprep.subr.mxu0 0.0
        %1316 = vmatpush1.msra.mxu0 0.0
        %1317 = vmatprep.subr.mxu0 0.0
        %1318 = vmatpush1.msra.mxu0 0.0
        %1319 = vmatprep.subr.mxu0 0.0
        %1320 = vmatpush1.msra.mxu0 0.0
        %1321 = vmatprep.subr.mxu0 0.0
        %1322 = vmatpush1.msra.mxu0 0.0
        %1323 = vmatprep.subr.mxu0 0.0
        %1324 = vmatpush1.msra.mxu0 0.0
        %1325 = vmatprep.subr.mxu0 0.0
        %1326 = vmatpush1.msra.mxu0 0.0
        %1327 = vmatprep.subr.mxu0 0.0
        %1328 = vmatpush1.msra.mxu0 0.0
        %1329 = vmatprep.subr.mxu0 0.0
        %1330 = vmatpush1.msra.mxu0 0.0
        %1331 = vmatprep.subr.mxu0 0.0
        %1332 = vmatpush1.msra.mxu0 0.0
        %1333 = vmatprep.subr.mxu0 0.0
        %1334 = vmatpush1.msra.mxu0 0.0
        %1335 = vmatprep.subr.mxu0 0.0
        %1336 = vmatpush1.msra.mxu0 0.0
        %1337 = vmatprep.subr.mxu0 0.0
        %1338 = vmatpush1.msra.mxu0 0.0
        %1339 = vmatprep.subr.mxu0 0.0
        %1340 = vmatpush1.msra.mxu0 0.0
        %1341 = vmatprep.subr.mxu0 0.0
        %1342 = vmatpush1.msra.mxu0 0.0
        %1343 = vmatprep.subr.mxu0 0.0
        %1344 = vmatpush1.msra.mxu0 0.0
        %1345 = vmatprep.subr.mxu0 0.0
        %1346 = vmatpush1.msra.mxu0 0.0
        %1347 = vmatprep.subr.mxu0 0.0
        %1348 = vmatpush1.msra.mxu0 0.0
        %1349 = vmatprep.subr.mxu0 0.0
        %1350 = vmatpush1.msra.mxu0 0.0
        %1351 = vmatprep.subr.mxu0 0.0
        %1352 = vmatpush1.msra.mxu0 0.0
        %1353 = vmatprep.subr.mxu0 0.0
        %1354 = vmatpush1.msra.mxu0 0.0
        %1355 = vmatprep.subr.mxu0 0.0
        %1356 = vmatpush1.msra.mxu0 0.0
        %1357 = vmatprep.subr.mxu0 0.0
        %1358 = vmatpush1.msra.mxu0 0.0
        %1359 = vmatprep.subr.mxu0 0.0
        %1360 = vmatpush1.msra.mxu0 0.0
        %1361 = vmatprep.subr.mxu0 0.0
        %1362 = vmatpush1.msra.mxu0 0.0
        %1363 = vmatprep.mubr.f32.mxu0 0.0
        %1364 = vmatmul.mubr.f32.gmra.mrb[0].mxu0 %v1252
        %v1365 = vpop.f32.mrb[0].mxu0
        %v1366 = vadd.f32 %v1249, %v1365
        %v1367 = vpop.f32.mrb[0].mxu0
        %1368 = vmatprep.mubr.f32.mxu0 0.0
        %1369 = vmatmul.mubr.f32.gmra.mrb[0].mxu0 %v1255
        %v1370 = vpop.f32.mrb[0].mxu0
        %v1371 = vadd.f32 %v1249, %v1370
        %v1372 = vpop.f32.mrb[0].mxu0
        %1373 = vmatprep.mubr.f32.mxu0 0.0
        %1374 = vmatmul.mubr.f32.gmra.mrb[0].mxu0 %v1258
        %v1375 = vpop.f32.mrb[0].mxu0
        %v1376 = vadd.f32 %v1249, %v1375
        %v1377 = vpop.f32.mrb[0].mxu0
        %1378 = vmatprep.mubr.f32.mxu0 0.0
        %1379 = vmatmul.mubr.f32.gmra.mrb[0].mxu0 %v1261
        %v1380 = vpop.f32.mrb[0].mxu0
        %v1381 = vadd.f32 %v1249, %v1380
        %v1382 = vpop.f32.mrb[0].mxu0
        %1383 = vmatprep.mubr.f32.mxu0 0.0
        %1384 = vmatmul.mubr.f32.gmra.mrb[0].mxu0 %v1264
        %v1385 = vpop.f32.mrb[0].mxu0
        %v1386 = vadd.f32 %v1249, %v1385
        %v1387 = vpop.f32.mrb[0].mxu0
        %1388 = vmatprep.mubr.f32.mxu0 0.0
        %1389 = vmatmul.mubr.f32.gmra.mrb[0].mxu0 %v1267
        %v1390 = vpop.f32.mrb[0].mxu0
        %v1391 = vadd.f32 %v1249, %v1390
        %v1392 = vpop.f32.mrb[0].mxu0
        %1393 = vmatprep.mubr.f32.mxu0 0.0
        %1394 = vmatmul.mubr.f32.gmra.mrb[0].mxu0 %v1270
        %v1395 = vpop.f32.mrb[0].mxu0
        %v1396 = vadd.f32 %v1249, %v1395
        %v1397 = vpop.f32.mrb[0].mxu0
        %1398 = vmatprep.mubr.f32.mxu0 0.0
        %1399 = vmatmul.mubr.f32.gmra.mrb[0].mxu0 %v1273
        %v1400 = vpop.f32.mrb[0].mxu0
        %v1401 = vadd.f32 %v1249, %v1400
        %v1402 = vpop.f32.mrb[0].mxu0
        %1403 = vmatprep.mubr.f32.mxu0 0.0
        %1404 = vmatmul.mubr.f32.gmra.mrb[0].mxu0 %v1276
        %v1405 = vpop.f32.mrb[0].mxu0
        %v1406 = vadd.f32 %v1249, %v1405
        %v1407 = vpop.f32.mrb[0].mxu0
        %1408 = vmatprep.mubr.f32.mxu0 0.0
        %1409 = vmatmul.mubr.f32.gmra.mrb[0].mxu0 %v1279
        %v1410 = vpop.f32.mrb[0].mxu0
        %v1411 = vadd.f32 %v1249, %v1410
        %v1412 = vpop.f32.mrb[0].mxu0
        %1413 = vmatprep.mubr.f32.mxu0 0.0
        %1414 = vmatmul.mubr.f32.gmra.mrb[0].mxu0 %v1282
        %v1415 = vpop.f32.mrb[0].mxu0
        %v1416 = vadd.f32 %v1249, %v1415
        %v1417 = vpop.f32.mrb[0].mxu0
        %1418 = vmatprep.mubr.f32.mxu0 0.0
        %1419 = vmatmul.mubr.f32.gmra.mrb[0].mxu0 %v1285
        %v1420 = vpop.f32.mrb[0].mxu0
        %v1421 = vadd.f32 %v1249, %v1420
        %v1422 = vpop.f32.mrb[0].mxu0
        %1423 = vmatprep.mubr.f32.mxu0 0.0
        %1424 = vmatmul.mubr.f32.gmra.mrb[0].mxu0 %v1288
        %v1425 = vpop.f32.mrb[0].mxu0
        %v1426 = vadd.f32 %v1249, %v1425
        %v1427 = vpop.f32.mrb[0].mxu0
        %1428 = vmatprep.mubr.f32.mxu0 0.0
        %1429 = vmatmul.mubr.f32.gmra.mrb[0].mxu0 %v1291
        %v1430 = vpop.f32.mrb[0].mxu0
        %v1431 = vadd.f32 %v1249, %v1430
        %v1432 = vpop.f32.mrb[0].mxu0
        %1433 = vmatprep.mubr.f32.mxu0 0.0
        %1434 = vmatmul.mubr.f32.gmra.mrb[0].mxu0 %v1294
        %v1435 = vpop.f32.mrb[0].mxu0
        %v1436 = vadd.f32 %v1249, %v1435
        %v1437 = vpop.f32.mrb[0].mxu0
        %1438 = vmatprep.mubr.f32.mxu0 0.0
        %1439 = vmatmul.mubr.f32.gmra.mrb[0].mxu0 %v1297
        %v1440 = vpop.f32.mrb[0].mxu0
        %v1441 = vadd.f32 %v1249, %v1440
        %v1442 = vpop.f32.mrb[0].mxu0
        %1443 = vdwg.mxu0
        %v1444 = vadd.f32 %v1005, %v1366
        %v1445 = vadd.f32 %v1006, %v1371
        %v1446 = vadd.f32 %v1007, %v1376
        %v1447 = vadd.f32 %v1008, %v1381
        %v1448 = vadd.f32 %v1009, %v1386
        %v1449 = vadd.f32 %v1010, %v1391
        %v1450 = vadd.f32 %v1011, %v1396
        %v1451 = vadd.f32 %v1012, %v1401
        %v1452 = vadd.f32 %v1013, %v1406
        %v1453 = vadd.f32 %v1014, %v1411
        %v1454 = vadd.f32 %v1015, %v1416
        %v1455 = vadd.f32 %v1016, %v1421
        %v1456 = vadd.f32 %v1017, %v1426
        %v1457 = vadd.f32 %v1018, %v1431
        %v1458 = vadd.f32 %v1019, %v1436
        %v1459 = vadd.f32 %v1020, %v1441
        %v1460 = vsel %vm562, %v1444, 0.0
        %1461 = vadd.xlane.f32.xlu0 %v1460
        %v1462 = vpop.xlane.xlu0 %1461
        %v1463 = vsel %vm562, %v1445, 0.0
        %1464 = vadd.xlane.f32.xlu0 %v1463
        %v1465 = vpop.xlane.xlu0 %1464
        %v1466 = vsel %vm562, %v1446, 0.0
        %1467 = vadd.xlane.f32.xlu0 %v1466
        %v1468 = vpop.xlane.xlu0 %1467
        %v1469 = vsel %vm562, %v1447, 0.0
        %1470 = vadd.xlane.f32.xlu0 %v1469
        %v1471 = vpop.xlane.xlu0 %1470
        %v1472 = vsel %vm562, %v1448, 0.0
        %1473 = vadd.xlane.f32.xlu0 %v1472
        %v1474 = vpop.xlane.xlu0 %1473
        %v1475 = vsel %vm562, %v1449, 0.0
        %1476 = vadd.xlane.f32.xlu0 %v1475
        %v1477 = vpop.xlane.xlu0 %1476
        %v1478 = vsel %vm562, %v1450, 0.0
        %1479 = vadd.xlane.f32.xlu0 %v1478
        %v1480 = vpop.xlane.xlu0 %1479
        %v1481 = vsel %vm562, %v1451, 0.0
        %1482 = vadd.xlane.f32.xlu0 %v1481
        %v1483 = vpop.xlane.xlu0 %1482
        %v1484 = vsel %vm562, %v1452, 0.0
        %1485 = vadd.xlane.f32.xlu0 %v1484
        %v1486 = vpop.xlane.xlu0 %1485
        %v1487 = vsel %vm562, %v1453, 0.0
        %1488 = vadd.xlane.f32.xlu0 %v1487
        %v1489 = vpop.xlane.xlu0 %1488
        %v1490 = vsel %vm562, %v1454, 0.0
        %1491 = vadd.xlane.f32.xlu0 %v1490
        %v1492 = vpop.xlane.xlu0 %1491
        %v1493 = vsel %vm562, %v1455, 0.0
        %1494 = vadd.xlane.f32.xlu0 %v1493
        %v1495 = vpop.xlane.xlu0 %1494
        %v1496 = vsel %vm562, %v1456, 0.0
        %1497 = vadd.xlane.f32.xlu0 %v1496
        %v1498 = vpop.xlane.xlu0 %1497
        %v1499 = vsel %vm562, %v1457, 0.0
        %1500 = vadd.xlane.f32.xlu0 %v1499
        %v1501 = vpop.xlane.xlu0 %1500
        %v1502 = vsel %vm562, %v1458, 0.0
        %1503 = vadd.xlane.f32.xlu0 %v1502
        %v1504 = vpop.xlane.xlu0 %1503
        %v1505 = vsel %vm562, %v1459, 0.0
        %1506 = vadd.xlane.f32.xlu0 %v1505
        %v1507 = vpop.xlane.xlu0 %1506
        %v1508 = vmul.f32 %v1462, %v820
        %v1509 = vmul.f32 %v1465, %v820
        %v1510 = vmul.f32 %v1468, %v820
        %v1511 = vmul.f32 %v1471, %v820
        %v1512 = vmul.f32 %v1474, %v820
        %v1513 = vmul.f32 %v1477, %v820
        %v1514 = vmul.f32 %v1480, %v820
        %v1515 = vmul.f32 %v1483, %v820
        %v1516 = vmul.f32 %v1486, %v820
        %v1517 = vmul.f32 %v1489, %v820
        %v1518 = vmul.f32 %v1492, %v820
        %v1519 = vmul.f32 %v1495, %v820
        %v1520 = vmul.f32 %v1498, %v820
        %v1521 = vmul.f32 %v1501, %v820
        %v1522 = vmul.f32 %v1504, %v820
        %v1523 = vmul.f32 %v1507, %v820
        %v1524 = vsub.f32 %v1444, %v1508
        %v1525 = vsub.f32 %v1445, %v1509
        %v1526 = vsub.f32 %v1446, %v1510
        %v1527 = vsub.f32 %v1447, %v1511
        %v1528 = vsub.f32 %v1448, %v1512
        %v1529 = vsub.f32 %v1449, %v1513
        %v1530 = vsub.f32 %v1450, %v1514
        %v1531 = vsub.f32 %v1451, %v1515
        %v1532 = vsub.f32 %v1452, %v1516
        %v1533 = vsub.f32 %v1453, %v1517
        %v1534 = vsub.f32 %v1454, %v1518
        %v1535 = vsub.f32 %v1455, %v1519
        %v1536 = vsub.f32 %v1456, %v1520
        %v1537 = vsub.f32 %v1457, %v1521
        %v1538 = vsub.f32 %v1458, %v1522
        %v1539 = vsub.f32 %v1459, %v1523
        %v1540 = vmul.f32 %v1524, %v1524
        %v1541 = vmul.f32 %v1525, %v1525
        %v1542 = vmul.f32 %v1526, %v1526
        %v1543 = vmul.f32 %v1527, %v1527
        %v1544 = vmul.f32 %v1528, %v1528
        %v1545 = vmul.f32 %v1529, %v1529
        %v1546 = vmul.f32 %v1530, %v1530
        %v1547 = vmul.f32 %v1531, %v1531
        %v1548 = vmul.f32 %v1532, %v1532
        %v1549 = vmul.f32 %v1533, %v1533
        %v1550 = vmul.f32 %v1534, %v1534
        %v1551 = vmul.f32 %v1535, %v1535
        %v1552 = vmul.f32 %v1536, %v1536
        %v1553 = vmul.f32 %v1537, %v1537
        %v1554 = vmul.f32 %v1538, %v1538
        %v1555 = vmul.f32 %v1539, %v1539
        %v1556 = vsel %vm562, %v1540, 0.0
        %1557 = vadd.xlane.f32.xlu0 %v1556
        %v1558 = vpop.xlane.xlu0 %1557
        %v1559 = vsel %vm562, %v1541, 0.0
        %1560 = vadd.xlane.f32.xlu0 %v1559
        %v1561 = vpop.xlane.xlu0 %1560
        %v1562 = vsel %vm562, %v1542, 0.0
        %1563 = vadd.xlane.f32.xlu0 %v1562
        %v1564 = vpop.xlane.xlu0 %1563
        %v1565 = vsel %vm562, %v1543, 0.0
        %1566 = vadd.xlane.f32.xlu0 %v1565
        %v1567 = vpop.xlane.xlu0 %1566
        %v1568 = vsel %vm562, %v1544, 0.0
        %1569 = vadd.xlane.f32.xlu0 %v1568
        %v1570 = vpop.xlane.xlu0 %1569
        %v1571 = vsel %vm562, %v1545, 0.0
        %1572 = vadd.xlane.f32.xlu0 %v1571
        %v1573 = vpop.xlane.xlu0 %1572
        %v1574 = vsel %vm562, %v1546, 0.0
        %1575 = vadd.xlane.f32.xlu0 %v1574
        %v1576 = vpop.xlane.xlu0 %1575
        %v1577 = vsel %vm562, %v1547, 0.0
        %1578 = vadd.xlane.f32.xlu0 %v1577
        %v1579 = vpop.xlane.xlu0 %1578
        %v1580 = vsel %vm562, %v1548, 0.0
        %1581 = vadd.xlane.f32.xlu0 %v1580
        %v1582 = vpop.xlane.xlu0 %1581
        %v1583 = vsel %vm562, %v1549, 0.0
        %1584 = vadd.xlane.f32.xlu0 %v1583
        %v1585 = vpop.xlane.xlu0 %1584
        %v1586 = vsel %vm562, %v1550, 0.0
        %1587 = vadd.xlane.f32.xlu0 %v1586
        %v1588 = vpop.xlane.xlu0 %1587
        %v1589 = vsel %vm562, %v1551, 0.0
        %1590 = vadd.xlane.f32.xlu0 %v1589
        %v1591 = vpop.xlane.xlu0 %1590
        %v1592 = vsel %vm562, %v1552, 0.0
        %1593 = vadd.xlane.f32.xlu0 %v1592
        %v1594 = vpop.xlane.xlu0 %1593
        %v1595 = vsel %vm562, %v1553, 0.0
        %1596 = vadd.xlane.f32.xlu0 %v1595
        %v1597 = vpop.xlane.xlu0 %1596
        %v1598 = vsel %vm562, %v1554, 0.0
        %1599 = vadd.xlane.f32.xlu0 %v1598
        %v1600 = vpop.xlane.xlu0 %1599
        %v1601 = vsel %vm562, %v1555, 0.0
        %1602 = vadd.xlane.f32.xlu0 %v1601
        %v1603 = vpop.xlane.xlu0 %1602
        %v1604 = vmul.f32 %v1558, %v820
        %v1605 = vmul.f32 %v1561, %v820
        %v1606 = vmul.f32 %v1564, %v820
        %v1607 = vmul.f32 %v1567, %v820
        %v1608 = vmul.f32 %v1570, %v820
        %v1609 = vmul.f32 %v1573, %v820
        %v1610 = vmul.f32 %v1576, %v820
        %v1611 = vmul.f32 %v1579, %v820
        %v1612 = vmul.f32 %v1582, %v820
        %v1613 = vmul.f32 %v1585, %v820
        %v1614 = vmul.f32 %v1588, %v820
        %v1615 = vmul.f32 %v1591, %v820
        %v1616 = vmul.f32 %v1594, %v820
        %v1617 = vmul.f32 %v1597, %v820
        %v1618 = vmul.f32 %v1600, %v820
        %v1619 = vmul.f32 %v1603, %v820
        %v1620 = vadd.f32 %v1604, 1e-05
        %v1621 = vadd.f32 %v1605, 1e-05
        %v1622 = vadd.f32 %v1606, 1e-05
        %v1623 = vadd.f32 %v1607, 1e-05
        %v1624 = vadd.f32 %v1608, 1e-05
        %v1625 = vadd.f32 %v1609, 1e-05
        %v1626 = vadd.f32 %v1610, 1e-05
        %v1627 = vadd.f32 %v1611, 1e-05
        %v1628 = vadd.f32 %v1612, 1e-05
        %v1629 = vadd.f32 %v1613, 1e-05
        %v1630 = vadd.f32 %v1614, 1e-05
        %v1631 = vadd.f32 %v1615, 1e-05
        %v1632 = vadd.f32 %v1616, 1e-05
        %v1633 = vadd.f32 %v1617, 1e-05
        %v1634 = vadd.f32 %v1618, 1e-05
        %v1635 = vadd.f32 %v1619, 1e-05
        %v1636 = vrsqrt.pop %v1620
        %v1637 = vrsqrt.pop %v1621
        %v1638 = vrsqrt.pop %v1622
        %v1639 = vrsqrt.pop %v1623
        %v1640 = vrsqrt.pop %v1624
        %v1641 = vrsqrt.pop %v1625
        %v1642 = vrsqrt.pop %v1626
        %v1643 = vrsqrt.pop %v1627
        %v1644 = vrsqrt.pop %v1628
        %v1645 = vrsqrt.pop %v1629
        %v1646 = vrsqrt.pop %v1630
        %v1647 = vrsqrt.pop %v1631
        %v1648 = vrsqrt.pop %v1632
        %v1649 = vrsqrt.pop %v1633
        %v1650 = vrsqrt.pop %v1634
        %v1651 = vrsqrt.pop %v1635
        %v1652 = vmul.f32 %v1524, %v1636
        %v1653 = vmul.f32 %v1525, %v1637
        %v1654 = vmul.f32 %v1526, %v1638
        %v1655 = vmul.f32 %v1527, %v1639
        %v1656 = vmul.f32 %v1528, %v1640
        %v1657 = vmul.f32 %v1529, %v1641
        %v1658 = vmul.f32 %v1530, %v1642
        %v1659 = vmul.f32 %v1531, %v1643
        %v1660 = vmul.f32 %v1532, %v1644
        %v1661 = vmul.f32 %v1533, %v1645
        %v1662 = vmul.f32 %v1534, %v1646
        %v1663 = vmul.f32 %v1535, %v1647
        %v1664 = vmul.f32 %v1536, %v1648
        %v1665 = vmul.f32 %v1537, %v1649
        %v1666 = vmul.f32 %v1538, %v1650
        %v1667 = vmul.f32 %v1539, %v1651
        %v1668 = vlaneseq
        %v1669 = vshrl.u32 %v1668, 7
        %v1670 = vsub.s32 5, %v1669
        %v1671 = vrot.slane %v553, %v1670
        %v1672 = vmul.f32 %v1652, %v1671
        %v1673 = vmul.f32 %v1653, %v1671
        %v1674 = vmul.f32 %v1654, %v1671
        %v1675 = vmul.f32 %v1655, %v1671
        %v1676 = vmul.f32 %v1656, %v1671
        %v1677 = vmul.f32 %v1657, %v1671
        %v1678 = vmul.f32 %v1658, %v1671
        %v1679 = vmul.f32 %v1659, %v1671
        %v1680 = vmul.f32 %v1660, %v1671
        %v1681 = vmul.f32 %v1661, %v1671
        %v1682 = vmul.f32 %v1662, %v1671
        %v1683 = vmul.f32 %v1663, %v1671
        %v1684 = vmul.f32 %v1664, %v1671
        %v1685 = vmul.f32 %v1665, %v1671
        %v1686 = vmul.f32 %v1666, %v1671
        %v1687 = vmul.f32 %v1667, %v1671
        %v1688 = vlaneseq
        %v1689 = vshrl.u32 %v1688, 7
        %v1690 = vsub.s32 6, %v1689
        %v1691 = vrot.slane %v553, %v1690
        %v1692 = vadd.f32 %v1672, %v1691
        %v1693 = vadd.f32 %v1673, %v1691
        %v1694 = vadd.f32 %v1674, %v1691
        %v1695 = vadd.f32 %v1675, %v1691
        %v1696 = vadd.f32 %v1676, %v1691
        %v1697 = vadd.f32 %v1677, %v1691
        %v1698 = vadd.f32 %v1678, %v1691
        %v1699 = vadd.f32 %v1679, %v1691
        %v1700 = vadd.f32 %v1680, %v1691
        %v1701 = vadd.f32 %v1681, %v1691
        %v1702 = vadd.f32 %v1682, %v1691
        %v1703 = vadd.f32 %v1683, %v1691
        %v1704 = vadd.f32 %v1684, %v1691
        %v1705 = vadd.f32 %v1685, %v1691
        %v1706 = vadd.f32 %v1686, %v1691
        %v1707 = vadd.f32 %v1687, %v1691
        %s1708 = scalar_lea.vmem %s6, 8
        %v1709 = vld [vmem:[%s1708] sm:$0xff]
        %s1710 = scalar_lea.vmem %s3, 32
        %v1711 = vld [vmem:[%s1710] sm:$0xff]
        %v1712 = vld [vmem:[%s1710 + $0x8] sm:$0xff]
        %v1713 = vld [vmem:[%s1710 + $0x10] sm:$0xff]
        %v1714 = vld [vmem:[%s1710 + $0x18] sm:$0xff]
        %v1715 = vlaneseq
        %v1716 = vshrl.u32 %v1715, 7
        %v1717 = vsub.s32 0, %v1716
        %v1718 = vrot.slane %v1709, %v1717
        %v1720 = vsel %vm562, %v1692, 0
        %v1723 = vsel %vm562, %v1693, 0
        %v1726 = vsel %vm562, %v1694, 0
        %v1729 = vsel %vm562, %v1695, 0
        %v1732 = vsel %vm562, %v1696, 0
        %v1735 = vsel %vm562, %v1697, 0
        %v1738 = vsel %vm562, %v1698, 0
        %v1741 = vsel %vm562, %v1699, 0
        %v1744 = vsel %vm562, %v1700, 0
        %v1747 = vsel %vm562, %v1701, 0
        %v1750 = vsel %vm562, %v1702, 0
        %v1753 = vsel %vm562, %v1703, 0
        %v1756 = vsel %vm562, %v1704, 0
        %v1759 = vsel %vm562, %v1705, 0
        %v1762 = vsel %vm562, %v1706, 0
        %v1765 = vsel %vm562, %v1707, 0
        %1767 = vmatprep.subr.mxu0 0.0
        %1768 = vmatpush1.msra.mxu0 %v1711
        %1769 = vmatprep.subr.mxu0 0.0
        %1770 = vmatpush1.msra.mxu0 %v1712
        %1771 = vmatprep.subr.mxu0 0.0
        %1772 = vmatpush1.msra.mxu0 %v1713
        %1773 = vmatprep.subr.mxu0 0.0
        %1774 = vmatpush1.msra.mxu0 %v1714
        %1775 = vmatprep.subr.mxu0 0.0
        %1776 = vmatpush1.msra.mxu0 0.0
        %1777 = vmatprep.subr.mxu0 0.0
        %1778 = vmatpush1.msra.mxu0 0.0
        %1779 = vmatprep.subr.mxu0 0.0
        %1780 = vmatpush1.msra.mxu0 0.0
        %1781 = vmatprep.subr.mxu0 0.0
        %1782 = vmatpush1.msra.mxu0 0.0
        %1783 = vmatprep.subr.mxu0 0.0
        %1784 = vmatpush1.msra.mxu0 0.0
        %1785 = vmatprep.subr.mxu0 0.0
        %1786 = vmatpush1.msra.mxu0 0.0
        %1787 = vmatprep.subr.mxu0 0.0
        %1788 = vmatpush1.msra.mxu0 0.0
        %1789 = vmatprep.subr.mxu0 0.0
        %1790 = vmatpush1.msra.mxu0 0.0
        %1791 = vmatprep.subr.mxu0 0.0
        %1792 = vmatpush1.msra.mxu0 0.0
        %1793 = vmatprep.subr.mxu0 0.0
        %1794 = vmatpush1.msra.mxu0 0.0
        %1795 = vmatprep.subr.mxu0 0.0
        %1796 = vmatpush1.msra.mxu0 0.0
        %1797 = vmatprep.subr.mxu0 0.0
        %1798 = vmatpush1.msra.mxu0 0.0
        %1799 = vmatprep.subr.mxu0 0.0
        %1800 = vmatpush1.msra.mxu0 0.0
        %1801 = vmatprep.subr.mxu0 0.0
        %1802 = vmatpush1.msra.mxu0 0.0
        %1803 = vmatprep.subr.mxu0 0.0
        %1804 = vmatpush1.msra.mxu0 0.0
        %1805 = vmatprep.subr.mxu0 0.0
        %1806 = vmatpush1.msra.mxu0 0.0
        %1807 = vmatprep.subr.mxu0 0.0
        %1808 = vmatpush1.msra.mxu0 0.0
        %1809 = vmatprep.subr.mxu0 0.0
        %1810 = vmatpush1.msra.mxu0 0.0
        %1811 = vmatprep.subr.mxu0 0.0
        %1812 = vmatpush1.msra.mxu0 0.0
        %1813 = vmatprep.subr.mxu0 0.0
        %1814 = vmatpush1.msra.mxu0 0.0
        %1815 = vmatprep.subr.mxu0 0.0
        %1816 = vmatpush1.msra.mxu0 0.0
        %1817 = vmatprep.subr.mxu0 0.0
        %1818 = vmatpush1.msra.mxu0 0.0
        %1819 = vmatprep.subr.mxu0 0.0
        %1820 = vmatpush1.msra.mxu0 0.0
        %1821 = vmatprep.subr.mxu0 0.0
        %1822 = vmatpush1.msra.mxu0 0.0
        %1823 = vmatprep.subr.mxu0 0.0
        %1824 = vmatpush1.msra.mxu0 0.0
        %1825 = vmatprep.subr.mxu0 0.0
        %1826 = vmatpush1.msra.mxu0 0.0
        %1827 = vmatprep.subr.mxu0 0.0
        %1828 = vmatpush1.msra.mxu0 0.0
        %1829 = vmatprep.subr.mxu0 0.0
        %1830 = vmatpush1.msra.mxu0 0.0
        %1831 = vmatprep.mubr.f32.mxu0 0.0
        %1832 = vmatmul.mubr.f32.gmra.mrb[0].mxu0 %v1720
        %v1833 = vpop.f32.mrb[0].mxu0
        %v1834 = vadd.f32 %v1718, %v1833
        %v1835 = vpop.f32.mrb[0].mxu0
        %1836 = vmatprep.mubr.f32.mxu0 0.0
        %1837 = vmatmul.mubr.f32.gmra.mrb[0].mxu0 %v1723
        %v1838 = vpop.f32.mrb[0].mxu0
        %v1839 = vadd.f32 %v1718, %v1838
        %v1840 = vpop.f32.mrb[0].mxu0
        %1841 = vmatprep.mubr.f32.mxu0 0.0
        %1842 = vmatmul.mubr.f32.gmra.mrb[0].mxu0 %v1726
        %v1843 = vpop.f32.mrb[0].mxu0
        %v1844 = vadd.f32 %v1718, %v1843
        %v1845 = vpop.f32.mrb[0].mxu0
        %1846 = vmatprep.mubr.f32.mxu0 0.0
        %1847 = vmatmul.mubr.f32.gmra.mrb[0].mxu0 %v1729
        %v1848 = vpop.f32.mrb[0].mxu0
        %v1849 = vadd.f32 %v1718, %v1848
        %v1850 = vpop.f32.mrb[0].mxu0
        %1851 = vmatprep.mubr.f32.mxu0 0.0
        %1852 = vmatmul.mubr.f32.gmra.mrb[0].mxu0 %v1732
        %v1853 = vpop.f32.mrb[0].mxu0
        %v1854 = vadd.f32 %v1718, %v1853
        %v1855 = vpop.f32.mrb[0].mxu0
        %1856 = vmatprep.mubr.f32.mxu0 0.0
        %1857 = vmatmul.mubr.f32.gmra.mrb[0].mxu0 %v1735
        %v1858 = vpop.f32.mrb[0].mxu0
        %v1859 = vadd.f32 %v1718, %v1858
        %v1860 = vpop.f32.mrb[0].mxu0
        %1861 = vmatprep.mubr.f32.mxu0 0.0
        %1862 = vmatmul.mubr.f32.gmra.mrb[0].mxu0 %v1738
        %v1863 = vpop.f32.mrb[0].mxu0
        %v1864 = vadd.f32 %v1718, %v1863
        %v1865 = vpop.f32.mrb[0].mxu0
        %1866 = vmatprep.mubr.f32.mxu0 0.0
        %1867 = vmatmul.mubr.f32.gmra.mrb[0].mxu0 %v1741
        %v1868 = vpop.f32.mrb[0].mxu0
        %v1869 = vadd.f32 %v1718, %v1868
        %v1870 = vpop.f32.mrb[0].mxu0
        %1871 = vmatprep.mubr.f32.mxu0 0.0
        %1872 = vmatmul.mubr.f32.gmra.mrb[0].mxu0 %v1744
        %v1873 = vpop.f32.mrb[0].mxu0
        %v1874 = vadd.f32 %v1718, %v1873
        %v1875 = vpop.f32.mrb[0].mxu0
        %1876 = vmatprep.mubr.f32.mxu0 0.0
        %1877 = vmatmul.mubr.f32.gmra.mrb[0].mxu0 %v1747
        %v1878 = vpop.f32.mrb[0].mxu0
        %v1879 = vadd.f32 %v1718, %v1878
        %v1880 = vpop.f32.mrb[0].mxu0
        %1881 = vmatprep.mubr.f32.mxu0 0.0
        %1882 = vmatmul.mubr.f32.gmra.mrb[0].mxu0 %v1750
        %v1883 = vpop.f32.mrb[0].mxu0
        %v1884 = vadd.f32 %v1718, %v1883
        %v1885 = vpop.f32.mrb[0].mxu0
        %1886 = vmatprep.mubr.f32.mxu0 0.0
        %1887 = vmatmul.mubr.f32.gmra.mrb[0].mxu0 %v1753
        %v1888 = vpop.f32.mrb[0].mxu0
        %v1889 = vadd.f32 %v1718, %v1888
        %v1890 = vpop.f32.mrb[0].mxu0
        %1891 = vmatprep.mubr.f32.mxu0 0.0
        %1892 = vmatmul.mubr.f32.gmra.mrb[0].mxu0 %v1756
        %v1893 = vpop.f32.mrb[0].mxu0
        %v1894 = vadd.f32 %v1718, %v1893
        %v1895 = vpop.f32.mrb[0].mxu0
        %1896 = vmatprep.mubr.f32.mxu0 0.0
        %1897 = vmatmul.mubr.f32.gmra.mrb[0].mxu0 %v1759
        %v1898 = vpop.f32.mrb[0].mxu0
        %v1899 = vadd.f32 %v1718, %v1898
        %v1900 = vpop.f32.mrb[0].mxu0
        %1901 = vmatprep.mubr.f32.mxu0 0.0
        %1902 = vmatmul.mubr.f32.gmra.mrb[0].mxu0 %v1762
        %v1903 = vpop.f32.mrb[0].mxu0
        %v1904 = vadd.f32 %v1718, %v1903
        %v1905 = vpop.f32.mrb[0].mxu0
        %1906 = vmatprep.mubr.f32.mxu0 0.0
        %1907 = vmatmul.mubr.f32.gmra.mrb[0].mxu0 %v1765
        %v1908 = vpop.f32.mrb[0].mxu0
        %v1909 = vadd.f32 %v1718, %v1908
        %v1910 = vpop.f32.mrb[0].mxu0
        %1911 = vdwg.mxu0
        %v1912 = vadd.f32 %v1692, %v1834
        %v1913 = vadd.f32 %v1693, %v1839
        %v1914 = vadd.f32 %v1694, %v1844
        %v1915 = vadd.f32 %v1695, %v1849
        %v1916 = vadd.f32 %v1696, %v1854
        %v1917 = vadd.f32 %v1697, %v1859
        %v1918 = vadd.f32 %v1698, %v1864
        %v1919 = vadd.f32 %v1699, %v1869
        %v1920 = vadd.f32 %v1700, %v1874
        %v1921 = vadd.f32 %v1701, %v1879
        %v1922 = vadd.f32 %v1702, %v1884
        %v1923 = vadd.f32 %v1703, %v1889
        %v1924 = vadd.f32 %v1704, %v1894
        %v1925 = vadd.f32 %v1705, %v1899
        %v1926 = vadd.f32 %v1706, %v1904
        %v1927 = vadd.f32 %v1707, %v1909
        %v1928 = vsel %vm562, %v1912, 0.0
        %1929 = vadd.xlane.f32.xlu0 %v1928
        %v1930 = vpop.xlane.xlu0 %1929
        %v1931 = vsel %vm562, %v1913, 0.0
        %1932 = vadd.xlane.f32.xlu0 %v1931
        %v1933 = vpop.xlane.xlu0 %1932
        %v1934 = vsel %vm562, %v1914, 0.0
        %1935 = vadd.xlane.f32.xlu0 %v1934
        %v1936 = vpop.xlane.xlu0 %1935
        %v1937 = vsel %vm562, %v1915, 0.0
        %1938 = vadd.xlane.f32.xlu0 %v1937
        %v1939 = vpop.xlane.xlu0 %1938
        %v1940 = vsel %vm562, %v1916, 0.0
        %1941 = vadd.xlane.f32.xlu0 %v1940
        %v1942 = vpop.xlane.xlu0 %1941
        %v1943 = vsel %vm562, %v1917, 0.0
        %1944 = vadd.xlane.f32.xlu0 %v1943
        %v1945 = vpop.xlane.xlu0 %1944
        %v1946 = vsel %vm562, %v1918, 0.0
        %1947 = vadd.xlane.f32.xlu0 %v1946
        %v1948 = vpop.xlane.xlu0 %1947
        %v1949 = vsel %vm562, %v1919, 0.0
        %1950 = vadd.xlane.f32.xlu0 %v1949
        %v1951 = vpop.xlane.xlu0 %1950
        %v1952 = vsel %vm562, %v1920, 0.0
        %1953 = vadd.xlane.f32.xlu0 %v1952
        %v1954 = vpop.xlane.xlu0 %1953
        %v1955 = vsel %vm562, %v1921, 0.0
        %1956 = vadd.xlane.f32.xlu0 %v1955
        %v1957 = vpop.xlane.xlu0 %1956
        %v1958 = vsel %vm562, %v1922, 0.0
        %1959 = vadd.xlane.f32.xlu0 %v1958
        %v1960 = vpop.xlane.xlu0 %1959
        %v1961 = vsel %vm562, %v1923, 0.0
        %1962 = vadd.xlane.f32.xlu0 %v1961
        %v1963 = vpop.xlane.xlu0 %1962
        %v1964 = vsel %vm562, %v1924, 0.0
        %1965 = vadd.xlane.f32.xlu0 %v1964
        %v1966 = vpop.xlane.xlu0 %1965
        %v1967 = vsel %vm562, %v1925, 0.0
        %1968 = vadd.xlane.f32.xlu0 %v1967
        %v1969 = vpop.xlane.xlu0 %1968
        %v1970 = vsel %vm562, %v1926, 0.0
        %1971 = vadd.xlane.f32.xlu0 %v1970
        %v1972 = vpop.xlane.xlu0 %1971
        %v1973 = vsel %vm562, %v1927, 0.0
        %1974 = vadd.xlane.f32.xlu0 %v1973
        %v1975 = vpop.xlane.xlu0 %1974
        %v1976 = vmul.f32 %v1930, %v820
        %v1977 = vmul.f32 %v1933, %v820
        %v1978 = vmul.f32 %v1936, %v820
        %v1979 = vmul.f32 %v1939, %v820
        %v1980 = vmul.f32 %v1942, %v820
        %v1981 = vmul.f32 %v1945, %v820
        %v1982 = vmul.f32 %v1948, %v820
        %v1983 = vmul.f32 %v1951, %v820
        %v1984 = vmul.f32 %v1954, %v820
        %v1985 = vmul.f32 %v1957, %v820
        %v1986 = vmul.f32 %v1960, %v820
        %v1987 = vmul.f32 %v1963, %v820
        %v1988 = vmul.f32 %v1966, %v820
        %v1989 = vmul.f32 %v1969, %v820
        %v1990 = vmul.f32 %v1972, %v820
        %v1991 = vmul.f32 %v1975, %v820
        %v1992 = vsub.f32 %v1912, %v1976
        %v1993 = vsub.f32 %v1913, %v1977
        %v1994 = vsub.f32 %v1914, %v1978
        %v1995 = vsub.f32 %v1915, %v1979
        %v1996 = vsub.f32 %v1916, %v1980
        %v1997 = vsub.f32 %v1917, %v1981
        %v1998 = vsub.f32 %v1918, %v1982
        %v1999 = vsub.f32 %v1919, %v1983
        %v2000 = vsub.f32 %v1920, %v1984
        %v2001 = vsub.f32 %v1921, %v1985
        %v2002 = vsub.f32 %v1922, %v1986
        %v2003 = vsub.f32 %v1923, %v1987
        %v2004 = vsub.f32 %v1924, %v1988
        %v2005 = vsub.f32 %v1925, %v1989
        %v2006 = vsub.f32 %v1926, %v1990
        %v2007 = vsub.f32 %v1927, %v1991
        %v2008 = vmul.f32 %v1992, %v1992
        %v2009 = vmul.f32 %v1993, %v1993
        %v2010 = vmul.f32 %v1994, %v1994
        %v2011 = vmul.f32 %v1995, %v1995
        %v2012 = vmul.f32 %v1996, %v1996
        %v2013 = vmul.f32 %v1997, %v1997
        %v2014 = vmul.f32 %v1998, %v1998
        %v2015 = vmul.f32 %v1999, %v1999
        %v2016 = vmul.f32 %v2000, %v2000
        %v2017 = vmul.f32 %v2001, %v2001
        %v2018 = vmul.f32 %v2002, %v2002
        %v2019 = vmul.f32 %v2003, %v2003
        %v2020 = vmul.f32 %v2004, %v2004
        %v2021 = vmul.f32 %v2005, %v2005
        %v2022 = vmul.f32 %v2006, %v2006
        %v2023 = vmul.f32 %v2007, %v2007
        %v2024 = vsel %vm562, %v2008, 0.0
        %2025 = vadd.xlane.f32.xlu0 %v2024
        %v2026 = vpop.xlane.xlu0 %2025
        %v2027 = vsel %vm562, %v2009, 0.0
        %2028 = vadd.xlane.f32.xlu0 %v2027
        %v2029 = vpop.xlane.xlu0 %2028
        %v2030 = vsel %vm562, %v2010, 0.0
        %2031 = vadd.xlane.f32.xlu0 %v2030
        %v2032 = vpop.xlane.xlu0 %2031
        %v2033 = vsel %vm562, %v2011, 0.0
        %2034 = vadd.xlane.f32.xlu0 %v2033
        %v2035 = vpop.xlane.xlu0 %2034
        %v2036 = vsel %vm562, %v2012, 0.0
        %2037 = vadd.xlane.f32.xlu0 %v2036
        %v2038 = vpop.xlane.xlu0 %2037
        %v2039 = vsel %vm562, %v2013, 0.0
        %2040 = vadd.xlane.f32.xlu0 %v2039
        %v2041 = vpop.xlane.xlu0 %2040
        %v2042 = vsel %vm562, %v2014, 0.0
        %2043 = vadd.xlane.f32.xlu0 %v2042
        %v2044 = vpop.xlane.xlu0 %2043
        %v2045 = vsel %vm562, %v2015, 0.0
        %2046 = vadd.xlane.f32.xlu0 %v2045
        %v2047 = vpop.xlane.xlu0 %2046
        %v2048 = vsel %vm562, %v2016, 0.0
        %2049 = vadd.xlane.f32.xlu0 %v2048
        %v2050 = vpop.xlane.xlu0 %2049
        %v2051 = vsel %vm562, %v2017, 0.0
        %2052 = vadd.xlane.f32.xlu0 %v2051
        %v2053 = vpop.xlane.xlu0 %2052
        %v2054 = vsel %vm562, %v2018, 0.0
        %2055 = vadd.xlane.f32.xlu0 %v2054
        %v2056 = vpop.xlane.xlu0 %2055
        %v2057 = vsel %vm562, %v2019, 0.0
        %2058 = vadd.xlane.f32.xlu0 %v2057
        %v2059 = vpop.xlane.xlu0 %2058
        %v2060 = vsel %vm562, %v2020, 0.0
        %2061 = vadd.xlane.f32.xlu0 %v2060
        %v2062 = vpop.xlane.xlu0 %2061
        %v2063 = vsel %vm562, %v2021, 0.0
        %2064 = vadd.xlane.f32.xlu0 %v2063
        %v2065 = vpop.xlane.xlu0 %2064
        %v2066 = vsel %vm562, %v2022, 0.0
        %2067 = vadd.xlane.f32.xlu0 %v2066
        %v2068 = vpop.xlane.xlu0 %2067
        %v2069 = vsel %vm562, %v2023, 0.0
        %2070 = vadd.xlane.f32.xlu0 %v2069
        %v2071 = vpop.xlane.xlu0 %2070
        %v2072 = vmul.f32 %v2026, %v820
        %v2073 = vmul.f32 %v2029, %v820
        %v2074 = vmul.f32 %v2032, %v820
        %v2075 = vmul.f32 %v2035, %v820
        %v2076 = vmul.f32 %v2038, %v820
        %v2077 = vmul.f32 %v2041, %v820
        %v2078 = vmul.f32 %v2044, %v820
        %v2079 = vmul.f32 %v2047, %v820
        %v2080 = vmul.f32 %v2050, %v820
        %v2081 = vmul.f32 %v2053, %v820
        %v2082 = vmul.f32 %v2056, %v820
        %v2083 = vmul.f32 %v2059, %v820
        %v2084 = vmul.f32 %v2062, %v820
        %v2085 = vmul.f32 %v2065, %v820
        %v2086 = vmul.f32 %v2068, %v820
        %v2087 = vmul.f32 %v2071, %v820
        %v2088 = vadd.f32 %v2072, 1e-05
        %v2089 = vadd.f32 %v2073, 1e-05
        %v2090 = vadd.f32 %v2074, 1e-05
        %v2091 = vadd.f32 %v2075, 1e-05
        %v2092 = vadd.f32 %v2076, 1e-05
        %v2093 = vadd.f32 %v2077, 1e-05
        %v2094 = vadd.f32 %v2078, 1e-05
        %v2095 = vadd.f32 %v2079, 1e-05
        %v2096 = vadd.f32 %v2080, 1e-05
        %v2097 = vadd.f32 %v2081, 1e-05
        %v2098 = vadd.f32 %v2082, 1e-05
        %v2099 = vadd.f32 %v2083, 1e-05
        %v2100 = vadd.f32 %v2084, 1e-05
        %v2101 = vadd.f32 %v2085, 1e-05
        %v2102 = vadd.f32 %v2086, 1e-05
        %v2103 = vadd.f32 %v2087, 1e-05
        %v2104 = vrsqrt.pop %v2088
        %v2105 = vrsqrt.pop %v2089
        %v2106 = vrsqrt.pop %v2090
        %v2107 = vrsqrt.pop %v2091
        %v2108 = vrsqrt.pop %v2092
        %v2109 = vrsqrt.pop %v2093
        %v2110 = vrsqrt.pop %v2094
        %v2111 = vrsqrt.pop %v2095
        %v2112 = vrsqrt.pop %v2096
        %v2113 = vrsqrt.pop %v2097
        %v2114 = vrsqrt.pop %v2098
        %v2115 = vrsqrt.pop %v2099
        %v2116 = vrsqrt.pop %v2100
        %v2117 = vrsqrt.pop %v2101
        %v2118 = vrsqrt.pop %v2102
        %v2119 = vrsqrt.pop %v2103
        %v2120 = vmul.f32 %v1992, %v2104
        %v2121 = vmul.f32 %v1993, %v2105
        %v2122 = vmul.f32 %v1994, %v2106
        %v2123 = vmul.f32 %v1995, %v2107
        %v2124 = vmul.f32 %v1996, %v2108
        %v2125 = vmul.f32 %v1997, %v2109
        %v2126 = vmul.f32 %v1998, %v2110
        %v2127 = vmul.f32 %v1999, %v2111
        %v2128 = vmul.f32 %v2000, %v2112
        %v2129 = vmul.f32 %v2001, %v2113
        %v2130 = vmul.f32 %v2002, %v2114
        %v2131 = vmul.f32 %v2003, %v2115
        %v2132 = vmul.f32 %v2004, %v2116
        %v2133 = vmul.f32 %v2005, %v2117
        %v2134 = vmul.f32 %v2006, %v2118
        %v2135 = vmul.f32 %v2007, %v2119
        %v2136 = vlaneseq
        %v2137 = vshrl.u32 %v2136, 7
        %v2138 = vsub.s32 1, %v2137
        %v2139 = vrot.slane %v1709, %v2138
        %v2140 = vmul.f32 %v2120, %v2139
        %v2141 = vmul.f32 %v2121, %v2139
        %v2142 = vmul.f32 %v2122, %v2139
        %v2143 = vmul.f32 %v2123, %v2139
        %v2144 = vmul.f32 %v2124, %v2139
        %v2145 = vmul.f32 %v2125, %v2139
        %v2146 = vmul.f32 %v2126, %v2139
        %v2147 = vmul.f32 %v2127, %v2139
        %v2148 = vmul.f32 %v2128, %v2139
        %v2149 = vmul.f32 %v2129, %v2139
        %v2150 = vmul.f32 %v2130, %v2139
        %v2151 = vmul.f32 %v2131, %v2139
        %v2152 = vmul.f32 %v2132, %v2139
        %v2153 = vmul.f32 %v2133, %v2139
        %v2154 = vmul.f32 %v2134, %v2139
        %v2155 = vmul.f32 %v2135, %v2139
        %v2156 = vlaneseq
        %v2157 = vshrl.u32 %v2156, 7
        %v2158 = vsub.s32 2, %v2157
        %v2159 = vrot.slane %v1709, %v2158
        %v2160 = vadd.f32 %v2140, %v2159
        %v2161 = vadd.f32 %v2141, %v2159
        %v2162 = vadd.f32 %v2142, %v2159
        %v2163 = vadd.f32 %v2143, %v2159
        %v2164 = vadd.f32 %v2144, %v2159
        %v2165 = vadd.f32 %v2145, %v2159
        %v2166 = vadd.f32 %v2146, %v2159
        %v2167 = vadd.f32 %v2147, %v2159
        %v2168 = vadd.f32 %v2148, %v2159
        %v2169 = vadd.f32 %v2149, %v2159
        %v2170 = vadd.f32 %v2150, %v2159
        %v2171 = vadd.f32 %v2151, %v2159
        %v2172 = vadd.f32 %v2152, %v2159
        %v2173 = vadd.f32 %v2153, %v2159
        %v2174 = vadd.f32 %v2154, %v2159
        %v2175 = vadd.f32 %v2155, %v2159
        %s2176 = scalar_lea.vmem %s4, 32
        %v2177 = vld [vmem:[%s2176] sm:$0xff]
        %v2178 = vld [vmem:[%s2176 + $0x8] sm:$0xff]
        %v2179 = vld [vmem:[%s2176 + $0x10] sm:$0xff]
        %v2180 = vld [vmem:[%s2176 + $0x18] sm:$0xff]
        %v2181 = vlaneseq
        %v2182 = vshrl.u32 %v2181, 7
        %v2183 = vsub.s32 3, %v2182
        %v2184 = vrot.slane %v1709, %v2183
        %v2186 = vsel %vm562, %v2160, 0
        %v2189 = vsel %vm562, %v2161, 0
        %v2192 = vsel %vm562, %v2162, 0
        %v2195 = vsel %vm562, %v2163, 0
        %v2198 = vsel %vm562, %v2164, 0
        %v2201 = vsel %vm562, %v2165, 0
        %v2204 = vsel %vm562, %v2166, 0
        %v2207 = vsel %vm562, %v2167, 0
        %v2210 = vsel %vm562, %v2168, 0
        %v2213 = vsel %vm562, %v2169, 0
        %v2216 = vsel %vm562, %v2170, 0
        %v2219 = vsel %vm562, %v2171, 0
        %v2222 = vsel %vm562, %v2172, 0
        %v2225 = vsel %vm562, %v2173, 0
        %v2228 = vsel %vm562, %v2174, 0
        %v2231 = vsel %vm562, %v2175, 0
        %2233 = vmatprep.subr.mxu0 0.0
        %2234 = vmatpush1.msra.mxu0 %v2177
        %2235 = vmatprep.subr.mxu0 0.0
        %2236 = vmatpush1.msra.mxu0 %v2178
        %2237 = vmatprep.subr.mxu0 0.0
        %2238 = vmatpush1.msra.mxu0 %v2179
        %2239 = vmatprep.subr.mxu0 0.0
        %2240 = vmatpush1.msra.mxu0 %v2180
        %2241 = vmatprep.subr.mxu0 0.0
        %2242 = vmatpush1.msra.mxu0 0.0
        %2243 = vmatprep.subr.mxu0 0.0
        %2244 = vmatpush1.msra.mxu0 0.0
        %2245 = vmatprep.subr.mxu0 0.0
        %2246 = vmatpush1.msra.mxu0 0.0
        %2247 = vmatprep.subr.mxu0 0.0
        %2248 = vmatpush1.msra.mxu0 0.0
        %2249 = vmatprep.subr.mxu0 0.0
        %2250 = vmatpush1.msra.mxu0 0.0
        %2251 = vmatprep.subr.mxu0 0.0
        %2252 = vmatpush1.msra.mxu0 0.0
        %2253 = vmatprep.subr.mxu0 0.0
        %2254 = vmatpush1.msra.mxu0 0.0
        %2255 = vmatprep.subr.mxu0 0.0
        %2256 = vmatpush1.msra.mxu0 0.0
        %2257 = vmatprep.subr.mxu0 0.0
        %2258 = vmatpush1.msra.mxu0 0.0
        %2259 = vmatprep.subr.mxu0 0.0
        %2260 = vmatpush1.msra.mxu0 0.0
        %2261 = vmatprep.subr.mxu0 0.0
        %2262 = vmatpush1.msra.mxu0 0.0
        %2263 = vmatprep.subr.mxu0 0.0
        %2264 = vmatpush1.msra.mxu0 0.0
        %2265 = vmatprep.subr.mxu0 0.0
        %2266 = vmatpush1.msra.mxu0 0.0
        %2267 = vmatprep.subr.mxu0 0.0
        %2268 = vmatpush1.msra.mxu0 0.0
        %2269 = vmatprep.subr.mxu0 0.0
        %2270 = vmatpush1.msra.mxu0 0.0
        %2271 = vmatprep.subr.mxu0 0.0
        %2272 = vmatpush1.msra.mxu0 0.0
        %2273 = vmatprep.subr.mxu0 0.0
        %2274 = vmatpush1.msra.mxu0 0.0
        %2275 = vmatprep.subr.mxu0 0.0
        %2276 = vmatpush1.msra.mxu0 0.0
        %2277 = vmatprep.subr.mxu0 0.0
        %2278 = vmatpush1.msra.mxu0 0.0
        %2279 = vmatprep.subr.mxu0 0.0
        %2280 = vmatpush1.msra.mxu0 0.0
        %2281 = vmatprep.subr.mxu0 0.0
        %2282 = vmatpush1.msra.mxu0 0.0
        %2283 = vmatprep.subr.mxu0 0.0
        %2284 = vmatpush1.msra.mxu0 0.0
        %2285 = vmatprep.subr.mxu0 0.0
        %2286 = vmatpush1.msra.mxu0 0.0
        %2287 = vmatprep.subr.mxu0 0.0
        %2288 = vmatpush1.msra.mxu0 0.0
        %2289 = vmatprep.subr.mxu0 0.0
        %2290 = vmatpush1.msra.mxu0 0.0
        %2291 = vmatprep.subr.mxu0 0.0
        %2292 = vmatpush1.msra.mxu0 0.0
        %2293 = vmatprep.subr.mxu0 0.0
        %2294 = vmatpush1.msra.mxu0 0.0
        %2295 = vmatprep.subr.mxu0 0.0
        %2296 = vmatpush1.msra.mxu0 0.0
        %2297 = vmatprep.mubr.f32.mxu0 0.0
        %2298 = vmatmul.mubr.f32.gmra.mrb[0].mxu0 %v2186
        %v2299 = vpop.f32.mrb[0].mxu0
        %v2300 = vadd.f32 %v2184, %v2299
        %v2301 = vpop.f32.mrb[0].mxu0
        %2302 = vmatprep.mubr.f32.mxu0 0.0
        %2303 = vmatmul.mubr.f32.gmra.mrb[0].mxu0 %v2189
        %v2304 = vpop.f32.mrb[0].mxu0
        %v2305 = vadd.f32 %v2184, %v2304
        %v2306 = vpop.f32.mrb[0].mxu0
        %2307 = vmatprep.mubr.f32.mxu0 0.0
        %2308 = vmatmul.mubr.f32.gmra.mrb[0].mxu0 %v2192
        %v2309 = vpop.f32.mrb[0].mxu0
        %v2310 = vadd.f32 %v2184, %v2309
        %v2311 = vpop.f32.mrb[0].mxu0
        %2312 = vmatprep.mubr.f32.mxu0 0.0
        %2313 = vmatmul.mubr.f32.gmra.mrb[0].mxu0 %v2195
        %v2314 = vpop.f32.mrb[0].mxu0
        %v2315 = vadd.f32 %v2184, %v2314
        %v2316 = vpop.f32.mrb[0].mxu0
        %2317 = vmatprep.mubr.f32.mxu0 0.0
        %2318 = vmatmul.mubr.f32.gmra.mrb[0].mxu0 %v2198
        %v2319 = vpop.f32.mrb[0].mxu0
        %v2320 = vadd.f32 %v2184, %v2319
        %v2321 = vpop.f32.mrb[0].mxu0
        %2322 = vmatprep.mubr.f32.mxu0 0.0
        %2323 = vmatmul.mubr.f32.gmra.mrb[0].mxu0 %v2201
        %v2324 = vpop.f32.mrb[0].mxu0
        %v2325 = vadd.f32 %v2184, %v2324
        %v2326 = vpop.f32.mrb[0].mxu0
        %2327 = vmatprep.mubr.f32.mxu0 0.0
        %2328 = vmatmul.mubr.f32.gmra.mrb[0].mxu0 %v2204
        %v2329 = vpop.f32.mrb[0].mxu0
        %v2330 = vadd.f32 %v2184, %v2329
        %v2331 = vpop.f32.mrb[0].mxu0
        %2332 = vmatprep.mubr.f32.mxu0 0.0
        %2333 = vmatmul.mubr.f32.gmra.mrb[0].mxu0 %v2207
        %v2334 = vpop.f32.mrb[0].mxu0
        %v2335 = vadd.f32 %v2184, %v2334
        %v2336 = vpop.f32.mrb[0].mxu0
        %2337 = vmatprep.mubr.f32.mxu0 0.0
        %2338 = vmatmul.mubr.f32.gmra.mrb[0].mxu0 %v2210
        %v2339 = vpop.f32.mrb[0].mxu0
        %v2340 = vadd.f32 %v2184, %v2339
        %v2341 = vpop.f32.mrb[0].mxu0
        %2342 = vmatprep.mubr.f32.mxu0 0.0
        %2343 = vmatmul.mubr.f32.gmra.mrb[0].mxu0 %v2213
        %v2344 = vpop.f32.mrb[0].mxu0
        %v2345 = vadd.f32 %v2184, %v2344
        %v2346 = vpop.f32.mrb[0].mxu0
        %2347 = vmatprep.mubr.f32.mxu0 0.0
        %2348 = vmatmul.mubr.f32.gmra.mrb[0].mxu0 %v2216
        %v2349 = vpop.f32.mrb[0].mxu0
        %v2350 = vadd.f32 %v2184, %v2349
        %v2351 = vpop.f32.mrb[0].mxu0
        %2352 = vmatprep.mubr.f32.mxu0 0.0
        %2353 = vmatmul.mubr.f32.gmra.mrb[0].mxu0 %v2219
        %v2354 = vpop.f32.mrb[0].mxu0
        %v2355 = vadd.f32 %v2184, %v2354
        %v2356 = vpop.f32.mrb[0].mxu0
        %2357 = vmatprep.mubr.f32.mxu0 0.0
        %2358 = vmatmul.mubr.f32.gmra.mrb[0].mxu0 %v2222
        %v2359 = vpop.f32.mrb[0].mxu0
        %v2360 = vadd.f32 %v2184, %v2359
        %v2361 = vpop.f32.mrb[0].mxu0
        %2362 = vmatprep.mubr.f32.mxu0 0.0
        %2363 = vmatmul.mubr.f32.gmra.mrb[0].mxu0 %v2225
        %v2364 = vpop.f32.mrb[0].mxu0
        %v2365 = vadd.f32 %v2184, %v2364
        %v2366 = vpop.f32.mrb[0].mxu0
        %2367 = vmatprep.mubr.f32.mxu0 0.0
        %2368 = vmatmul.mubr.f32.gmra.mrb[0].mxu0 %v2228
        %v2369 = vpop.f32.mrb[0].mxu0
        %v2370 = vadd.f32 %v2184, %v2369
        %v2371 = vpop.f32.mrb[0].mxu0
        %2372 = vmatprep.mubr.f32.mxu0 0.0
        %2373 = vmatmul.mubr.f32.gmra.mrb[0].mxu0 %v2231
        %v2374 = vpop.f32.mrb[0].mxu0
        %v2375 = vadd.f32 %v2184, %v2374
        %v2376 = vpop.f32.mrb[0].mxu0
        %2377 = vdwg.mxu0
        %v2378 = vmax.f32 %v2300, 0.0
        %v2379 = vmax.f32 %v2305, 0.0
        %v2380 = vmax.f32 %v2310, 0.0
        %v2381 = vmax.f32 %v2315, 0.0
        %v2382 = vmax.f32 %v2320, 0.0
        %v2383 = vmax.f32 %v2325, 0.0
        %v2384 = vmax.f32 %v2330, 0.0
        %v2385 = vmax.f32 %v2335, 0.0
        %v2386 = vmax.f32 %v2340, 0.0
        %v2387 = vmax.f32 %v2345, 0.0
        %v2388 = vmax.f32 %v2350, 0.0
        %v2389 = vmax.f32 %v2355, 0.0
        %v2390 = vmax.f32 %v2360, 0.0
        %v2391 = vmax.f32 %v2365, 0.0
        %v2392 = vmax.f32 %v2370, 0.0
        %v2393 = vmax.f32 %v2375, 0.0
        %s2394 = scalar_lea.vmem %s5, 64
        %v2395 = vld [vmem:[%s2394] sm:$0xff]
        %v2396 = vld [vmem:[%s2394 + $0x8] sm:$0xff]
        %v2397 = vld [vmem:[%s2394 + $0x10] sm:$0xff]
        %v2398 = vld [vmem:[%s2394 + $0x18] sm:$0xff]
        %v2399 = vld [vmem:[%s2394 + $0x20] sm:$0xff]
        %v2400 = vld [vmem:[%s2394 + $0x28] sm:$0xff]
        %v2401 = vld [vmem:[%s2394 + $0x30] sm:$0xff]
        %v2402 = vld [vmem:[%s2394 + $0x38] sm:$0xff]
        %v2403 = vlaneseq
        %v2404 = vshrl.u32 %v2403, 7
        %v2405 = vsub.s32 4, %v2404
        %v2406 = vrot.slane %v1709, %v2405
        %v2408 = vsel %vm1250, %v2378, 0
        %v2411 = vsel %vm1250, %v2379, 0
        %v2414 = vsel %vm1250, %v2380, 0
        %v2417 = vsel %vm1250, %v2381, 0
        %v2420 = vsel %vm1250, %v2382, 0
        %v2423 = vsel %vm1250, %v2383, 0
        %v2426 = vsel %vm1250, %v2384, 0
        %v2429 = vsel %vm1250, %v2385, 0
        %v2432 = vsel %vm1250, %v2386, 0
        %v2435 = vsel %vm1250, %v2387, 0
        %v2438 = vsel %vm1250, %v2388, 0
        %v2441 = vsel %vm1250, %v2389, 0
        %v2444 = vsel %vm1250, %v2390, 0
        %v2447 = vsel %vm1250, %v2391, 0
        %v2450 = vsel %vm1250, %v2392, 0
        %v2453 = vsel %vm1250, %v2393, 0
        %2455 = vmatprep.subr.mxu0 0.0
        %2456 = vmatpush1.msra.mxu0 %v2395
        %2457 = vmatprep.subr.mxu0 0.0
        %2458 = vmatpush1.msra.mxu0 %v2396
        %2459 = vmatprep.subr.mxu0 0.0
        %2460 = vmatpush1.msra.mxu0 %v2397
        %2461 = vmatprep.subr.mxu0 0.0
        %2462 = vmatpush1.msra.mxu0 %v2398
        %2463 = vmatprep.subr.mxu0 0.0
        %2464 = vmatpush1.msra.mxu0 %v2399
        %2465 = vmatprep.subr.mxu0 0.0
        %2466 = vmatpush1.msra.mxu0 %v2400
        %2467 = vmatprep.subr.mxu0 0.0
        %2468 = vmatpush1.msra.mxu0 %v2401
        %2469 = vmatprep.subr.mxu0 0.0
        %2470 = vmatpush1.msra.mxu0 %v2402
        %2471 = vmatprep.subr.mxu0 0.0
        %2472 = vmatpush1.msra.mxu0 0.0
        %2473 = vmatprep.subr.mxu0 0.0
        %2474 = vmatpush1.msra.mxu0 0.0
        %2475 = vmatprep.subr.mxu0 0.0
        %2476 = vmatpush1.msra.mxu0 0.0
        %2477 = vmatprep.subr.mxu0 0.0
        %2478 = vmatpush1.msra.mxu0 0.0
        %2479 = vmatprep.subr.mxu0 0.0
        %2480 = vmatpush1.msra.mxu0 0.0
        %2481 = vmatprep.subr.mxu0 0.0
        %2482 = vmatpush1.msra.mxu0 0.0
        %2483 = vmatprep.subr.mxu0 0.0
        %2484 = vmatpush1.msra.mxu0 0.0
        %2485 = vmatprep.subr.mxu0 0.0
        %2486 = vmatpush1.msra.mxu0 0.0
        %2487 = vmatprep.subr.mxu0 0.0
        %2488 = vmatpush1.msra.mxu0 0.0
        %2489 = vmatprep.subr.mxu0 0.0
        %2490 = vmatpush1.msra.mxu0 0.0
        %2491 = vmatprep.subr.mxu0 0.0
        %2492 = vmatpush1.msra.mxu0 0.0
        %2493 = vmatprep.subr.mxu0 0.0
        %2494 = vmatpush1.msra.mxu0 0.0
        %2495 = vmatprep.subr.mxu0 0.0
        %2496 = vmatpush1.msra.mxu0 0.0
        %2497 = vmatprep.subr.mxu0 0.0
        %2498 = vmatpush1.msra.mxu0 0.0
        %2499 = vmatprep.subr.mxu0 0.0
        %2500 = vmatpush1.msra.mxu0 0.0
        %2501 = vmatprep.subr.mxu0 0.0
        %2502 = vmatpush1.msra.mxu0 0.0
        %2503 = vmatprep.subr.mxu0 0.0
        %2504 = vmatpush1.msra.mxu0 0.0
        %2505 = vmatprep.subr.mxu0 0.0
        %2506 = vmatpush1.msra.mxu0 0.0
        %2507 = vmatprep.subr.mxu0 0.0
        %2508 = vmatpush1.msra.mxu0 0.0
        %2509 = vmatprep.subr.mxu0 0.0
        %2510 = vmatpush1.msra.mxu0 0.0
        %2511 = vmatprep.subr.mxu0 0.0
        %2512 = vmatpush1.msra.mxu0 0.0
        %2513 = vmatprep.subr.mxu0 0.0
        %2514 = vmatpush1.msra.mxu0 0.0
        %2515 = vmatprep.subr.mxu0 0.0
        %2516 = vmatpush1.msra.mxu0 0.0
        %2517 = vmatprep.subr.mxu0 0.0
        %2518 = vmatpush1.msra.mxu0 0.0
        %2519 = vmatprep.mubr.f32.mxu0 0.0
        %2520 = vmatmul.mubr.f32.gmra.mrb[0].mxu0 %v2408
        %v2521 = vpop.f32.mrb[0].mxu0
        %v2522 = vadd.f32 %v2406, %v2521
        %v2523 = vpop.f32.mrb[0].mxu0
        %2524 = vmatprep.mubr.f32.mxu0 0.0
        %2525 = vmatmul.mubr.f32.gmra.mrb[0].mxu0 %v2411
        %v2526 = vpop.f32.mrb[0].mxu0
        %v2527 = vadd.f32 %v2406, %v2526
        %v2528 = vpop.f32.mrb[0].mxu0
        %2529 = vmatprep.mubr.f32.mxu0 0.0
        %2530 = vmatmul.mubr.f32.gmra.mrb[0].mxu0 %v2414
        %v2531 = vpop.f32.mrb[0].mxu0
        %v2532 = vadd.f32 %v2406, %v2531
        %v2533 = vpop.f32.mrb[0].mxu0
        %2534 = vmatprep.mubr.f32.mxu0 0.0
        %2535 = vmatmul.mubr.f32.gmra.mrb[0].mxu0 %v2417
        %v2536 = vpop.f32.mrb[0].mxu0
        %v2537 = vadd.f32 %v2406, %v2536
        %v2538 = vpop.f32.mrb[0].mxu0
        %2539 = vmatprep.mubr.f32.mxu0 0.0
        %2540 = vmatmul.mubr.f32.gmra.mrb[0].mxu0 %v2420
        %v2541 = vpop.f32.mrb[0].mxu0
        %v2542 = vadd.f32 %v2406, %v2541
        %v2543 = vpop.f32.mrb[0].mxu0
        %2544 = vmatprep.mubr.f32.mxu0 0.0
        %2545 = vmatmul.mubr.f32.gmra.mrb[0].mxu0 %v2423
        %v2546 = vpop.f32.mrb[0].mxu0
        %v2547 = vadd.f32 %v2406, %v2546
        %v2548 = vpop.f32.mrb[0].mxu0
        %2549 = vmatprep.mubr.f32.mxu0 0.0
        %2550 = vmatmul.mubr.f32.gmra.mrb[0].mxu0 %v2426
        %v2551 = vpop.f32.mrb[0].mxu0
        %v2552 = vadd.f32 %v2406, %v2551
        %v2553 = vpop.f32.mrb[0].mxu0
        %2554 = vmatprep.mubr.f32.mxu0 0.0
        %2555 = vmatmul.mubr.f32.gmra.mrb[0].mxu0 %v2429
        %v2556 = vpop.f32.mrb[0].mxu0
        %v2557 = vadd.f32 %v2406, %v2556
        %v2558 = vpop.f32.mrb[0].mxu0
        %2559 = vmatprep.mubr.f32.mxu0 0.0
        %2560 = vmatmul.mubr.f32.gmra.mrb[0].mxu0 %v2432
        %v2561 = vpop.f32.mrb[0].mxu0
        %v2562 = vadd.f32 %v2406, %v2561
        %v2563 = vpop.f32.mrb[0].mxu0
        %2564 = vmatprep.mubr.f32.mxu0 0.0
        %2565 = vmatmul.mubr.f32.gmra.mrb[0].mxu0 %v2435
        %v2566 = vpop.f32.mrb[0].mxu0
        %v2567 = vadd.f32 %v2406, %v2566
        %v2568 = vpop.f32.mrb[0].mxu0
        %2569 = vmatprep.mubr.f32.mxu0 0.0
        %2570 = vmatmul.mubr.f32.gmra.mrb[0].mxu0 %v2438
        %v2571 = vpop.f32.mrb[0].mxu0
        %v2572 = vadd.f32 %v2406, %v2571
        %v2573 = vpop.f32.mrb[0].mxu0
        %2574 = vmatprep.mubr.f32.mxu0 0.0
        %2575 = vmatmul.mubr.f32.gmra.mrb[0].mxu0 %v2441
        %v2576 = vpop.f32.mrb[0].mxu0
        %v2577 = vadd.f32 %v2406, %v2576
        %v2578 = vpop.f32.mrb[0].mxu0
        %2579 = vmatprep.mubr.f32.mxu0 0.0
        %2580 = vmatmul.mubr.f32.gmra.mrb[0].mxu0 %v2444
        %v2581 = vpop.f32.mrb[0].mxu0
        %v2582 = vadd.f32 %v2406, %v2581
        %v2583 = vpop.f32.mrb[0].mxu0
        %2584 = vmatprep.mubr.f32.mxu0 0.0
        %2585 = vmatmul.mubr.f32.gmra.mrb[0].mxu0 %v2447
        %v2586 = vpop.f32.mrb[0].mxu0
        %v2587 = vadd.f32 %v2406, %v2586
        %v2588 = vpop.f32.mrb[0].mxu0
        %2589 = vmatprep.mubr.f32.mxu0 0.0
        %2590 = vmatmul.mubr.f32.gmra.mrb[0].mxu0 %v2450
        %v2591 = vpop.f32.mrb[0].mxu0
        %v2592 = vadd.f32 %v2406, %v2591
        %v2593 = vpop.f32.mrb[0].mxu0
        %2594 = vmatprep.mubr.f32.mxu0 0.0
        %2595 = vmatmul.mubr.f32.gmra.mrb[0].mxu0 %v2453
        %v2596 = vpop.f32.mrb[0].mxu0
        %v2597 = vadd.f32 %v2406, %v2596
        %v2598 = vpop.f32.mrb[0].mxu0
        %2599 = vdwg.mxu0
        %v2600 = vadd.f32 %v2160, %v2522
        %v2601 = vadd.f32 %v2161, %v2527
        %v2602 = vadd.f32 %v2162, %v2532
        %v2603 = vadd.f32 %v2163, %v2537
        %v2604 = vadd.f32 %v2164, %v2542
        %v2605 = vadd.f32 %v2165, %v2547
        %v2606 = vadd.f32 %v2166, %v2552
        %v2607 = vadd.f32 %v2167, %v2557
        %v2608 = vadd.f32 %v2168, %v2562
        %v2609 = vadd.f32 %v2169, %v2567
        %v2610 = vadd.f32 %v2170, %v2572
        %v2611 = vadd.f32 %v2171, %v2577
        %v2612 = vadd.f32 %v2172, %v2582
        %v2613 = vadd.f32 %v2173, %v2587
        %v2614 = vadd.f32 %v2174, %v2592
        %v2615 = vadd.f32 %v2175, %v2597
        %v2616 = vsel %vm562, %v2600, 0.0
        %2617 = vadd.xlane.f32.xlu0 %v2616
        %v2618 = vpop.xlane.xlu0 %2617
        %v2619 = vsel %vm562, %v2601, 0.0
        %2620 = vadd.xlane.f32.xlu0 %v2619
        %v2621 = vpop.xlane.xlu0 %2620
        %v2622 = vsel %vm562, %v2602, 0.0
        %2623 = vadd.xlane.f32.xlu0 %v2622
        %v2624 = vpop.xlane.xlu0 %2623
        %v2625 = vsel %vm562, %v2603, 0.0
        %2626 = vadd.xlane.f32.xlu0 %v2625
        %v2627 = vpop.xlane.xlu0 %2626
        %v2628 = vsel %vm562, %v2604, 0.0
        %2629 = vadd.xlane.f32.xlu0 %v2628
        %v2630 = vpop.xlane.xlu0 %2629
        %v2631 = vsel %vm562, %v2605, 0.0
        %2632 = vadd.xlane.f32.xlu0 %v2631
        %v2633 = vpop.xlane.xlu0 %2632
        %v2634 = vsel %vm562, %v2606, 0.0
        %2635 = vadd.xlane.f32.xlu0 %v2634
        %v2636 = vpop.xlane.xlu0 %2635
        %v2637 = vsel %vm562, %v2607, 0.0
        %2638 = vadd.xlane.f32.xlu0 %v2637
        %v2639 = vpop.xlane.xlu0 %2638
        %v2640 = vsel %vm562, %v2608, 0.0
        %2641 = vadd.xlane.f32.xlu0 %v2640
        %v2642 = vpop.xlane.xlu0 %2641
        %v2643 = vsel %vm562, %v2609, 0.0
        %2644 = vadd.xlane.f32.xlu0 %v2643
        %v2645 = vpop.xlane.xlu0 %2644
        %v2646 = vsel %vm562, %v2610, 0.0
        %2647 = vadd.xlane.f32.xlu0 %v2646
        %v2648 = vpop.xlane.xlu0 %2647
        %v2649 = vsel %vm562, %v2611, 0.0
        %2650 = vadd.xlane.f32.xlu0 %v2649
        %v2651 = vpop.xlane.xlu0 %2650
        %v2652 = vsel %vm562, %v2612, 0.0
        %2653 = vadd.xlane.f32.xlu0 %v2652
        %v2654 = vpop.xlane.xlu0 %2653
        %v2655 = vsel %vm562, %v2613, 0.0
        %2656 = vadd.xlane.f32.xlu0 %v2655
        %v2657 = vpop.xlane.xlu0 %2656
        %v2658 = vsel %vm562, %v2614, 0.0
        %2659 = vadd.xlane.f32.xlu0 %v2658
        %v2660 = vpop.xlane.xlu0 %2659
        %v2661 = vsel %vm562, %v2615, 0.0
        %2662 = vadd.xlane.f32.xlu0 %v2661
        %v2663 = vpop.xlane.xlu0 %2662
        %v2664 = vmul.f32 %v2618, %v820
        %v2665 = vmul.f32 %v2621, %v820
        %v2666 = vmul.f32 %v2624, %v820
        %v2667 = vmul.f32 %v2627, %v820
        %v2668 = vmul.f32 %v2630, %v820
        %v2669 = vmul.f32 %v2633, %v820
        %v2670 = vmul.f32 %v2636, %v820
        %v2671 = vmul.f32 %v2639, %v820
        %v2672 = vmul.f32 %v2642, %v820
        %v2673 = vmul.f32 %v2645, %v820
        %v2674 = vmul.f32 %v2648, %v820
        %v2675 = vmul.f32 %v2651, %v820
        %v2676 = vmul.f32 %v2654, %v820
        %v2677 = vmul.f32 %v2657, %v820
        %v2678 = vmul.f32 %v2660, %v820
        %v2679 = vmul.f32 %v2663, %v820
        %v2680 = vsub.f32 %v2600, %v2664
        %v2681 = vsub.f32 %v2601, %v2665
        %v2682 = vsub.f32 %v2602, %v2666
        %v2683 = vsub.f32 %v2603, %v2667
        %v2684 = vsub.f32 %v2604, %v2668
        %v2685 = vsub.f32 %v2605, %v2669
        %v2686 = vsub.f32 %v2606, %v2670
        %v2687 = vsub.f32 %v2607, %v2671
        %v2688 = vsub.f32 %v2608, %v2672
        %v2689 = vsub.f32 %v2609, %v2673
        %v2690 = vsub.f32 %v2610, %v2674
        %v2691 = vsub.f32 %v2611, %v2675
        %v2692 = vsub.f32 %v2612, %v2676
        %v2693 = vsub.f32 %v2613, %v2677
        %v2694 = vsub.f32 %v2614, %v2678
        %v2695 = vsub.f32 %v2615, %v2679
        %v2696 = vmul.f32 %v2680, %v2680
        %v2697 = vmul.f32 %v2681, %v2681
        %v2698 = vmul.f32 %v2682, %v2682
        %v2699 = vmul.f32 %v2683, %v2683
        %v2700 = vmul.f32 %v2684, %v2684
        %v2701 = vmul.f32 %v2685, %v2685
        %v2702 = vmul.f32 %v2686, %v2686
        %v2703 = vmul.f32 %v2687, %v2687
        %v2704 = vmul.f32 %v2688, %v2688
        %v2705 = vmul.f32 %v2689, %v2689
        %v2706 = vmul.f32 %v2690, %v2690
        %v2707 = vmul.f32 %v2691, %v2691
        %v2708 = vmul.f32 %v2692, %v2692
        %v2709 = vmul.f32 %v2693, %v2693
        %v2710 = vmul.f32 %v2694, %v2694
        %v2711 = vmul.f32 %v2695, %v2695
        %v2712 = vsel %vm562, %v2696, 0.0
        %2713 = vadd.xlane.f32.xlu0 %v2712
        %v2714 = vpop.xlane.xlu0 %2713
        %v2715 = vsel %vm562, %v2697, 0.0
        %2716 = vadd.xlane.f32.xlu0 %v2715
        %v2717 = vpop.xlane.xlu0 %2716
        %v2718 = vsel %vm562, %v2698, 0.0
        %2719 = vadd.xlane.f32.xlu0 %v2718
        %v2720 = vpop.xlane.xlu0 %2719
        %v2721 = vsel %vm562, %v2699, 0.0
        %2722 = vadd.xlane.f32.xlu0 %v2721
        %v2723 = vpop.xlane.xlu0 %2722
        %v2724 = vsel %vm562, %v2700, 0.0
        %2725 = vadd.xlane.f32.xlu0 %v2724
        %v2726 = vpop.xlane.xlu0 %2725
        %v2727 = vsel %vm562, %v2701, 0.0
        %2728 = vadd.xlane.f32.xlu0 %v2727
        %v2729 = vpop.xlane.xlu0 %2728
        %v2730 = vsel %vm562, %v2702, 0.0
        %2731 = vadd.xlane.f32.xlu0 %v2730
        %v2732 = vpop.xlane.xlu0 %2731
        %v2733 = vsel %vm562, %v2703, 0.0
        %2734 = vadd.xlane.f32.xlu0 %v2733
        %v2735 = vpop.xlane.xlu0 %2734
        %v2736 = vsel %vm562, %v2704, 0.0
        %2737 = vadd.xlane.f32.xlu0 %v2736
        %v2738 = vpop.xlane.xlu0 %2737
        %v2739 = vsel %vm562, %v2705, 0.0
        %2740 = vadd.xlane.f32.xlu0 %v2739
        %v2741 = vpop.xlane.xlu0 %2740
        %v2742 = vsel %vm562, %v2706, 0.0
        %2743 = vadd.xlane.f32.xlu0 %v2742
        %v2744 = vpop.xlane.xlu0 %2743
        %v2745 = vsel %vm562, %v2707, 0.0
        %2746 = vadd.xlane.f32.xlu0 %v2745
        %v2747 = vpop.xlane.xlu0 %2746
        %v2748 = vsel %vm562, %v2708, 0.0
        %2749 = vadd.xlane.f32.xlu0 %v2748
        %v2750 = vpop.xlane.xlu0 %2749
        %v2751 = vsel %vm562, %v2709, 0.0
        %2752 = vadd.xlane.f32.xlu0 %v2751
        %v2753 = vpop.xlane.xlu0 %2752
        %v2754 = vsel %vm562, %v2710, 0.0
        %2755 = vadd.xlane.f32.xlu0 %v2754
        %v2756 = vpop.xlane.xlu0 %2755
        %v2757 = vsel %vm562, %v2711, 0.0
        %2758 = vadd.xlane.f32.xlu0 %v2757
        %v2759 = vpop.xlane.xlu0 %2758
        %v2760 = vmul.f32 %v2714, %v820
        %v2761 = vmul.f32 %v2717, %v820
        %v2762 = vmul.f32 %v2720, %v820
        %v2763 = vmul.f32 %v2723, %v820
        %v2764 = vmul.f32 %v2726, %v820
        %v2765 = vmul.f32 %v2729, %v820
        %v2766 = vmul.f32 %v2732, %v820
        %v2767 = vmul.f32 %v2735, %v820
        %v2768 = vmul.f32 %v2738, %v820
        %v2769 = vmul.f32 %v2741, %v820
        %v2770 = vmul.f32 %v2744, %v820
        %v2771 = vmul.f32 %v2747, %v820
        %v2772 = vmul.f32 %v2750, %v820
        %v2773 = vmul.f32 %v2753, %v820
        %v2774 = vmul.f32 %v2756, %v820
        %v2775 = vmul.f32 %v2759, %v820
        %v2776 = vadd.f32 %v2760, 1e-05
        %v2777 = vadd.f32 %v2761, 1e-05
        %v2778 = vadd.f32 %v2762, 1e-05
        %v2779 = vadd.f32 %v2763, 1e-05
        %v2780 = vadd.f32 %v2764, 1e-05
        %v2781 = vadd.f32 %v2765, 1e-05
        %v2782 = vadd.f32 %v2766, 1e-05
        %v2783 = vadd.f32 %v2767, 1e-05
        %v2784 = vadd.f32 %v2768, 1e-05
        %v2785 = vadd.f32 %v2769, 1e-05
        %v2786 = vadd.f32 %v2770, 1e-05
        %v2787 = vadd.f32 %v2771, 1e-05
        %v2788 = vadd.f32 %v2772, 1e-05
        %v2789 = vadd.f32 %v2773, 1e-05
        %v2790 = vadd.f32 %v2774, 1e-05
        %v2791 = vadd.f32 %v2775, 1e-05
        %v2792 = vrsqrt.pop %v2776
        %v2793 = vrsqrt.pop %v2777
        %v2794 = vrsqrt.pop %v2778
        %v2795 = vrsqrt.pop %v2779
        %v2796 = vrsqrt.pop %v2780
        %v2797 = vrsqrt.pop %v2781
        %v2798 = vrsqrt.pop %v2782
        %v2799 = vrsqrt.pop %v2783
        %v2800 = vrsqrt.pop %v2784
        %v2801 = vrsqrt.pop %v2785
        %v2802 = vrsqrt.pop %v2786
        %v2803 = vrsqrt.pop %v2787
        %v2804 = vrsqrt.pop %v2788
        %v2805 = vrsqrt.pop %v2789
        %v2806 = vrsqrt.pop %v2790
        %v2807 = vrsqrt.pop %v2791
        %v2808 = vmul.f32 %v2680, %v2792
        %v2809 = vmul.f32 %v2681, %v2793
        %v2810 = vmul.f32 %v2682, %v2794
        %v2811 = vmul.f32 %v2683, %v2795
        %v2812 = vmul.f32 %v2684, %v2796
        %v2813 = vmul.f32 %v2685, %v2797
        %v2814 = vmul.f32 %v2686, %v2798
        %v2815 = vmul.f32 %v2687, %v2799
        %v2816 = vmul.f32 %v2688, %v2800
        %v2817 = vmul.f32 %v2689, %v2801
        %v2818 = vmul.f32 %v2690, %v2802
        %v2819 = vmul.f32 %v2691, %v2803
        %v2820 = vmul.f32 %v2692, %v2804
        %v2821 = vmul.f32 %v2693, %v2805
        %v2822 = vmul.f32 %v2694, %v2806
        %v2823 = vmul.f32 %v2695, %v2807
        %v2824 = vlaneseq
        %v2825 = vshrl.u32 %v2824, 7
        %v2826 = vsub.s32 5, %v2825
        %v2827 = vrot.slane %v1709, %v2826
        %v2828 = vmul.f32 %v2808, %v2827
        %v2829 = vmul.f32 %v2809, %v2827
        %v2830 = vmul.f32 %v2810, %v2827
        %v2831 = vmul.f32 %v2811, %v2827
        %v2832 = vmul.f32 %v2812, %v2827
        %v2833 = vmul.f32 %v2813, %v2827
        %v2834 = vmul.f32 %v2814, %v2827
        %v2835 = vmul.f32 %v2815, %v2827
        %v2836 = vmul.f32 %v2816, %v2827
        %v2837 = vmul.f32 %v2817, %v2827
        %v2838 = vmul.f32 %v2818, %v2827
        %v2839 = vmul.f32 %v2819, %v2827
        %v2840 = vmul.f32 %v2820, %v2827
        %v2841 = vmul.f32 %v2821, %v2827
        %v2842 = vmul.f32 %v2822, %v2827
        %v2843 = vmul.f32 %v2823, %v2827
        %v2844 = vlaneseq
        %v2845 = vshrl.u32 %v2844, 7
        %v2846 = vsub.s32 6, %v2845
        %v2847 = vrot.slane %v1709, %v2846
        %v2848 = vadd.f32 %v2828, %v2847
        %v2849 = vadd.f32 %v2829, %v2847
        %v2850 = vadd.f32 %v2830, %v2847
        %v2851 = vadd.f32 %v2831, %v2847
        %v2852 = vadd.f32 %v2832, %v2847
        %v2853 = vadd.f32 %v2833, %v2847
        %v2854 = vadd.f32 %v2834, %v2847
        %v2855 = vadd.f32 %v2835, %v2847
        %v2856 = vadd.f32 %v2836, %v2847
        %v2857 = vadd.f32 %v2837, %v2847
        %v2858 = vadd.f32 %v2838, %v2847
        %v2859 = vadd.f32 %v2839, %v2847
        %v2860 = vadd.f32 %v2840, %v2847
        %v2861 = vadd.f32 %v2841, %v2847
        %v2862 = vadd.f32 %v2842, %v2847
        %v2863 = vadd.f32 %v2843, %v2847
        %v2864 = vld [vmem:[%s7] sm:$0xff]
        %v2865 = vld [vmem:[%s7 + $0x8] sm:$0xff]
        %v2866 = vld [vmem:[%s7 + $0x10] sm:$0xff]
        %v2867 = vld [vmem:[%s7 + $0x18] sm:$0xff]
        %v2868 = vld [vmem:[%s8] sm:$0x1]
        %v2870 = vlaneseq
        %v2871 = vshrl.u32 %v2870, 7
        %v2872 = vsub.s32 0, %v2871
        %v2873 = vrot.slane %v2868, %v2872
        %v2876 = vsel %vm562, %v2848, 0
        %v2879 = vsel %vm562, %v2849, 0
        %v2882 = vsel %vm562, %v2850, 0
        %v2885 = vsel %vm562, %v2851, 0
        %v2888 = vsel %vm562, %v2852, 0
        %v2891 = vsel %vm562, %v2853, 0
        %v2894 = vsel %vm562, %v2854, 0
        %v2897 = vsel %vm562, %v2855, 0
        %v2900 = vsel %vm562, %v2856, 0
        %v2903 = vsel %vm562, %v2857, 0
        %v2906 = vsel %vm562, %v2858, 0
        %v2909 = vsel %vm562, %v2859, 0
        %v2912 = vsel %vm562, %v2860, 0
        %v2915 = vsel %vm562, %v2861, 0
        %v2918 = vsel %vm562, %v2862, 0
        %v2921 = vsel %vm562, %v2863, 0
        %2923 = vmatprep.subr.mxu0 0.0
        %2924 = vmatpush1.msra.mxu0 %v2864
        %2925 = vmatprep.subr.mxu0 0.0
        %2926 = vmatpush1.msra.mxu0 %v2865
        %2927 = vmatprep.subr.mxu0 0.0
        %2928 = vmatpush1.msra.mxu0 %v2866
        %2929 = vmatprep.subr.mxu0 0.0
        %2930 = vmatpush1.msra.mxu0 %v2867
        %2931 = vmatprep.subr.mxu0 0.0
        %2932 = vmatpush1.msra.mxu0 0.0
        %2933 = vmatprep.subr.mxu0 0.0
        %2934 = vmatpush1.msra.mxu0 0.0
        %2935 = vmatprep.subr.mxu0 0.0
        %2936 = vmatpush1.msra.mxu0 0.0
        %2937 = vmatprep.subr.mxu0 0.0
        %2938 = vmatpush1.msra.mxu0 0.0
        %2939 = vmatprep.subr.mxu0 0.0
        %2940 = vmatpush1.msra.mxu0 0.0
        %2941 = vmatprep.subr.mxu0 0.0
        %2942 = vmatpush1.msra.mxu0 0.0
        %2943 = vmatprep.subr.mxu0 0.0
        %2944 = vmatpush1.msra.mxu0 0.0
        %2945 = vmatprep.subr.mxu0 0.0
        %2946 = vmatpush1.msra.mxu0 0.0
        %2947 = vmatprep.subr.mxu0 0.0
        %2948 = vmatpush1.msra.mxu0 0.0
        %2949 = vmatprep.subr.mxu0 0.0
        %2950 = vmatpush1.msra.mxu0 0.0
        %2951 = vmatprep.subr.mxu0 0.0
        %2952 = vmatpush1.msra.mxu0 0.0
        %2953 = vmatprep.subr.mxu0 0.0
        %2954 = vmatpush1.msra.mxu0 0.0
        %2955 = vmatprep.subr.mxu0 0.0
        %2956 = vmatpush1.msra.mxu0 0.0
        %2957 = vmatprep.subr.mxu0 0.0
        %2958 = vmatpush1.msra.mxu0 0.0
        %2959 = vmatprep.subr.mxu0 0.0
        %2960 = vmatpush1.msra.mxu0 0.0
        %2961 = vmatprep.subr.mxu0 0.0
        %2962 = vmatpush1.msra.mxu0 0.0
        %2963 = vmatprep.subr.mxu0 0.0
        %2964 = vmatpush1.msra.mxu0 0.0
        %2965 = vmatprep.subr.mxu0 0.0
        %2966 = vmatpush1.msra.mxu0 0.0
        %2967 = vmatprep.subr.mxu0 0.0
        %2968 = vmatpush1.msra.mxu0 0.0
        %2969 = vmatprep.subr.mxu0 0.0
        %2970 = vmatpush1.msra.mxu0 0.0
        %2971 = vmatprep.subr.mxu0 0.0
        %2972 = vmatpush1.msra.mxu0 0.0
        %2973 = vmatprep.subr.mxu0 0.0
        %2974 = vmatpush1.msra.mxu0 0.0
        %2975 = vmatprep.subr.mxu0 0.0
        %2976 = vmatpush1.msra.mxu0 0.0
        %2977 = vmatprep.subr.mxu0 0.0
        %2978 = vmatpush1.msra.mxu0 0.0
        %2979 = vmatprep.subr.mxu0 0.0
        %2980 = vmatpush1.msra.mxu0 0.0
        %2981 = vmatprep.subr.mxu0 0.0
        %2982 = vmatpush1.msra.mxu0 0.0
        %2983 = vmatprep.subr.mxu0 0.0
        %2984 = vmatpush1.msra.mxu0 0.0
        %2985 = vmatprep.subr.mxu0 0.0
        %2986 = vmatpush1.msra.mxu0 0.0
        %2987 = vmatprep.mubr.f32.mxu0 0.0
        %2988 = vmatmul.mubr.f32.gmra.mrb[0].mxu0 %v2876
        %v2989 = vpop.f32.mrb[0].mxu0
        %v2990 = vadd.f32 %v2873, %v2989
        %v2991 = vpop.f32.mrb[0].mxu0
        %2992 = vmatprep.mubr.f32.mxu0 0.0
        %2993 = vmatmul.mubr.f32.gmra.mrb[0].mxu0 %v2879
        %v2994 = vpop.f32.mrb[0].mxu0
        %v2995 = vadd.f32 %v2873, %v2994
        %v2996 = vpop.f32.mrb[0].mxu0
        %2997 = vmatprep.mubr.f32.mxu0 0.0
        %2998 = vmatmul.mubr.f32.gmra.mrb[0].mxu0 %v2882
        %v2999 = vpop.f32.mrb[0].mxu0
        %v3000 = vadd.f32 %v2873, %v2999
        %v3001 = vpop.f32.mrb[0].mxu0
        %3002 = vmatprep.mubr.f32.mxu0 0.0
        %3003 = vmatmul.mubr.f32.gmra.mrb[0].mxu0 %v2885
        %v3004 = vpop.f32.mrb[0].mxu0
        %v3005 = vadd.f32 %v2873, %v3004
        %v3006 = vpop.f32.mrb[0].mxu0
        %3007 = vmatprep.mubr.f32.mxu0 0.0
        %3008 = vmatmul.mubr.f32.gmra.mrb[0].mxu0 %v2888
        %v3009 = vpop.f32.mrb[0].mxu0
        %v3010 = vadd.f32 %v2873, %v3009
        %v3011 = vpop.f32.mrb[0].mxu0
        %3012 = vmatprep.mubr.f32.mxu0 0.0
        %3013 = vmatmul.mubr.f32.gmra.mrb[0].mxu0 %v2891
        %v3014 = vpop.f32.mrb[0].mxu0
        %v3015 = vadd.f32 %v2873, %v3014
        %v3016 = vpop.f32.mrb[0].mxu0
        %3017 = vmatprep.mubr.f32.mxu0 0.0
        %3018 = vmatmul.mubr.f32.gmra.mrb[0].mxu0 %v2894
        %v3019 = vpop.f32.mrb[0].mxu0
        %v3020 = vadd.f32 %v2873, %v3019
        %v3021 = vpop.f32.mrb[0].mxu0
        %3022 = vmatprep.mubr.f32.mxu0 0.0
        %3023 = vmatmul.mubr.f32.gmra.mrb[0].mxu0 %v2897
        %v3024 = vpop.f32.mrb[0].mxu0
        %v3025 = vadd.f32 %v2873, %v3024
        %v3026 = vpop.f32.mrb[0].mxu0
        %3027 = vmatprep.mubr.f32.mxu0 0.0
        %3028 = vmatmul.mubr.f32.gmra.mrb[0].mxu0 %v2900
        %v3029 = vpop.f32.mrb[0].mxu0
        %v3030 = vadd.f32 %v2873, %v3029
        %v3031 = vpop.f32.mrb[0].mxu0
        %3032 = vmatprep.mubr.f32.mxu0 0.0
        %3033 = vmatmul.mubr.f32.gmra.mrb[0].mxu0 %v2903
        %v3034 = vpop.f32.mrb[0].mxu0
        %v3035 = vadd.f32 %v2873, %v3034
        %v3036 = vpop.f32.mrb[0].mxu0
        %3037 = vmatprep.mubr.f32.mxu0 0.0
        %3038 = vmatmul.mubr.f32.gmra.mrb[0].mxu0 %v2906
        %v3039 = vpop.f32.mrb[0].mxu0
        %v3040 = vadd.f32 %v2873, %v3039
        %v3041 = vpop.f32.mrb[0].mxu0
        %3042 = vmatprep.mubr.f32.mxu0 0.0
        %3043 = vmatmul.mubr.f32.gmra.mrb[0].mxu0 %v2909
        %v3044 = vpop.f32.mrb[0].mxu0
        %v3045 = vadd.f32 %v2873, %v3044
        %v3046 = vpop.f32.mrb[0].mxu0
        %3047 = vmatprep.mubr.f32.mxu0 0.0
        %3048 = vmatmul.mubr.f32.gmra.mrb[0].mxu0 %v2912
        %v3049 = vpop.f32.mrb[0].mxu0
        %v3050 = vadd.f32 %v2873, %v3049
        %v3051 = vpop.f32.mrb[0].mxu0
        %3052 = vmatprep.mubr.f32.mxu0 0.0
        %3053 = vmatmul.mubr.f32.gmra.mrb[0].mxu0 %v2915
        %v3054 = vpop.f32.mrb[0].mxu0
        %v3055 = vadd.f32 %v2873, %v3054
        %v3056 = vpop.f32.mrb[0].mxu0
        %3057 = vmatprep.mubr.f32.mxu0 0.0
        %3058 = vmatmul.mubr.f32.gmra.mrb[0].mxu0 %v2918
        %v3059 = vpop.f32.mrb[0].mxu0
        %v3060 = vadd.f32 %v2873, %v3059
        %v3061 = vpop.f32.mrb[0].mxu0
        %3062 = vmatprep.mubr.f32.mxu0 0.0
        %3063 = vmatmul.mubr.f32.gmra.mrb[0].mxu0 %v2921
        %v3064 = vpop.f32.mrb[0].mxu0
        %v3065 = vadd.f32 %v2873, %v3064
        %v3066 = vpop.f32.mrb[0].mxu0
        %3067 = vdwg.mxu0
        %3068 = vst [vmem:[%s326] sm:$0xff] %v2990
        %3069 = vst [vmem:[%s326 + $0x8] sm:$0xff] %v2995
        %3070 = vst [vmem:[%s326 + $0x10] sm:$0xff] %v3000
        %3071 = vst [vmem:[%s326 + $0x18] sm:$0xff] %v3005
        %3072 = vst [vmem:[%s326 + $0x20] sm:$0xff] %v3010
        %3073 = vst [vmem:[%s326 + $0x28] sm:$0xff] %v3015
        %3074 = vst [vmem:[%s326 + $0x30] sm:$0xff] %v3020
        %3075 = vst [vmem:[%s326 + $0x38] sm:$0xff] %v3025
        %3076 = vst [vmem:[%s326 + $0x40] sm:$0xff] %v3030
        %3077 = vst [vmem:[%s326 + $0x48] sm:$0xff] %v3035
        %3078 = vst [vmem:[%s326 + $0x50] sm:$0xff] %v3040
        %3079 = vst [vmem:[%s326 + $0x58] sm:$0xff] %v3045
        %3080 = vst [vmem:[%s326 + $0x60] sm:$0xff] %v3050
        %3081 = vst [vmem:[%s326 + $0x68] sm:$0xff] %v3055
        %3082 = vst [vmem:[%s326 + $0x70] sm:$0xff] %v3060
        %3083 = vst [vmem:[%s326 + $0x78] sm:$0xff] %v3065
        %s3084 = sand.u32 %s225, 1
        %s3085 = scalar_lea.sflag [#allocation3], %s3084
        %s3086 = sand.u32 %s225, 1
        %s3087 = smul.addr %s3086, 128
        %s3088 = scalar_lea.vmem [#allocation2], %s3087
        // Predicated region
        $region57: #{tpu_custom_call.1} parent=55 // pred_check
          %p3089 = pneg %p235
        $region58: #{tpu_custom_call.1} parent=55 // pred_check_branch
          %3091 = sbr.rel (%p3089) target = $region60
        $region59: #{tpu_custom_call.1} parent=55 // pred_region
          %s3092 = smul.u32 16, %s23
          %s3094 = ssub.s32 2048, 2048
          %3095 = vsyncadd %s3085, %s3094
          %s3096 = smul.addr %s3092, 128
          %s3097 = scalar_lea.hbm %s9, %s3096
          %s3098 = sshll.u32 %s3088, 4
          %s3099 = int_to_ptr.vmem [resolvable:$true] %s3098
          %3104 = dma.vmem_to_hbm [thread:$0]  %s3099, 2048, %s3097, %s3085, 128, 128, 8
        $region60: #{tpu_custom_call.1} parent=55 // pred_fallthru
          _
      $region56: #{tpu_custom_call.1} parent=5 // pred_fallthru
        _
      %p3105 = scmp.le.s32.totalorder 2, %s18
      // Predicated region
      $region61: #{tpu_custom_call.1} parent=5 // pred_check
        %p3106 = pneg %p3105
      $region62: #{tpu_custom_call.1} parent=5 // pred_check_branch
        %3108 = sbr.rel (%p3106) target = $region64
      $region63: #{tpu_custom_call.1} parent=5 // pred_region
        %s3109 = ssub.s32 %s18, 2
        // Predicated region
        $region65: #{tpu_custom_call.1} parent=63 // pred_check
          %p3110 = pneg %p241
        $region66: #{tpu_custom_call.1} parent=63 // pred_check_branch
          %3112 = sbr.rel (%p3110) target = $region68
        $region67: #{tpu_custom_call.1} parent=63 // pred_region
          %s3113 = sand.u32 %s226, 1
          %s3114 = scalar_lea.sflag [#allocation3], %s3113
          %s3115 = sand.u32 %s226, 1
          %s3116 = smul.addr %s3115, 128
          %s3117 = scalar_lea.vmem [#allocation2], %s3116
          %3118 = dma.done %s3114, 2048
        $region68: #{tpu_custom_call.1} parent=63 // pred_fallthru
          _
      $region64: #{tpu_custom_call.1} parent=5 // pred_fallthru
        _
    $region6: #{tpu_custom_call.1} parent=1 // loop_footer
      %s22 = sadd.s32 1, %s18
    $region7: #{tpu_custom_call.1} parent=1 // loop_footer_branch
      %17 = sbr.rel target = $region3
    $region8: #{tpu_custom_call.1} parent=1 // loop_exit
      _
    %3119 = vsyncpa [#allocation3], 1
    %s3120 = scalar_lea.sflag [#allocation3], 1
    %3121 = vsyncpa %s3120, 1

</llo_original>
